<compile_context>
chip_gen: v6e
topology: v6e:2x2x1
jax: 0.10.0
libtpu: 0.0.40
codegen_flags: <defaults>
</compile_context>

<pallas_src>
import functools
import math

import jax
import jax.numpy as jnp
import numpy as np
from jax.experimental import pallas as pl
from jax.experimental.pallas import tpu as pltpu

EMBED_DIM = 512
N_HEADS = 8
HEAD_DIM = EMBED_DIM // N_HEADS  # 64


# ---------------------------------------------------------------------------
# Fused kernel (single invocation, grid=()):
#   q_ref:  (B*Sq*H, D) f32      k_ref, v_ref: (B*S*H, D) f32
#   pq_ref: (B*Sq*H, B*Sq*H) bf16   pkv_ref: (B*S*H, B*S*H) bf16  (0/1 regroup)
#   wq/wk/wv_ref: (D, D) bf16    (nn.Linear weights pre-transposed; scale in wq)
#   wo_ref: (E, E) bf16          bo_ref: (1, E) f32
#   o_ref:  (B, Sq, E) f32       concat_ref: (B*Sq, E) f32 VMEM scratch
# ---------------------------------------------------------------------------
def _mha_fused_kernel(q_ref, k_ref, v_ref, pq_ref, pkv_ref,
                      wq_ref, wk_ref, wv_ref, wo_ref, bo_ref,
                      o_ref, concat_ref, *, B, Sq, S, H, D):
    E = H * D
    bf16 = jnp.bfloat16

    # --- Q/K/V projections: shared per-head weight, (batch, seq, head) folded
    #     into M -> one (B*S*H, 64) @ (64, 64) bf16 MXU matmul per tensor.
    #     The 1/sqrt(D) scale is already folded into wq.
    q = jnp.dot(q_ref[...].astype(bf16), wq_ref[...],
                preferred_element_type=jnp.float32)            # (B*Sq*H, D)
    k = jnp.dot(k_ref[...].astype(bf16), wk_ref[...],
                preferred_element_type=jnp.float32)            # (B*S*H, D)
    v = jnp.dot(v_ref[...].astype(bf16), wv_ref[...],
                preferred_element_type=jnp.float32)            # (B*S*H, D)

    # --- Regroup rows (b, s, h) -> (h, b, s) with a 0/1 permutation matmul
    #     (exact: single 1.0 per row, f32 accumulate).  This replaces a
    #     sublane-crossing N-D transpose with plain MXU work.
    qh = jnp.dot(pq_ref[...], q.astype(bf16),
                 preferred_element_type=jnp.float32)           # (H*B*Sq, D)
    kh = jnp.dot(pkv_ref[...], k.astype(bf16),
                 preferred_element_type=jnp.float32)           # (H*B*S, D)
    vh = jnp.dot(pkv_ref[...], v.astype(bf16),
                 preferred_element_type=jnp.float32)

    qh = qh.reshape(H * B, Sq, D).astype(bf16)                 # groups g = h*B + b
    kh = kh.reshape(H * B, S, D).astype(bf16)
    vh = vh.reshape(H * B, S, D).astype(bf16)

    # --- Attention, batched over all (head, batch) groups; softmax in f32.
    s = jnp.einsum('gqd,gkd->gqk', qh, kh,
                   preferred_element_type=jnp.float32)         # (H*B, Sq, S)
    m = jnp.max(s, axis=-1, keepdims=True)
    p = jnp.exp(s - m)
    denom = jnp.sum(p, axis=-1, keepdims=True)
    p = p * pl.reciprocal(denom, approx=True)                  # EUP slot

    ctx = jnp.einsum('gqk,gkd->gqd', p.astype(bf16), vh,
                     preferred_element_type=jnp.float32)       # (H*B, Sq, D)

    # --- Head concat into lanes (8 static 64-wide slab stores), then ONE
    #     lane-dense (B*Sq, 512) @ (512, 512) output projection + bias.
    for h in range(H):                                          # static unroll
        concat_ref[:, h * D:(h + 1) * D] = (
            ctx[h * B:(h + 1) * B].reshape(B * Sq, D))
    y = jnp.dot(concat_ref[...].astype(bf16), wo_ref[...],
                preferred_element_type=jnp.float32) + bo_ref[...]
    o_ref[...] = y.reshape(B, Sq, E)


def _head_major_perm(B, S, H, dtype=jnp.bfloat16):
    """0/1 matrix P with (P @ X)[h*B*S + b*S + s] = X[b*S*H + s*H + h].

    Built with numpy at trace time (constant-folds under jit; no XLA launch).
    """
    n = B * S * H
    src = np.arange(n).reshape(B, S, H).transpose(2, 0, 1).reshape(n)
    p = np.zeros((n, n), np.float32)
    p[np.arange(n), src] = 1.0
    return jnp.asarray(p, dtype)


def prepare_params(params):
    """One-time weight preprocessing, hoisted out of the per-call path:
    pre-transpose nn.Linear weights (y = x @ W^T), fold 1/sqrt(D) into Wq,
    and cast all MXU weight operands to bf16.  Bias stays f32."""
    scale = 1.0 / math.sqrt(HEAD_DIM)
    return {
        "wq_t": jnp.asarray((params["wq"] * scale).T, jnp.bfloat16),
        "wk_t": jnp.asarray(params["wk"].T, jnp.bfloat16),
        "wv_t": jnp.asarray(params["wv"].T, jnp.bfloat16),
        "wo_t": jnp.asarray(params["wo"].T, jnp.bfloat16),
        "bo": jnp.asarray(params["bo"].reshape(1, EMBED_DIM), jnp.float32),
    }


def _mha_forward(key, query, value, prepped):
    """key/query/value: [B, S, E] f32.  Returns [B, Sq, E] f32."""
    B, S, E = key.shape
    Sq = query.shape[1]
    H, D = N_HEADS, HEAD_DIM
    assert E == EMBED_DIM and E == H * D

    # Free row-major reshapes only -- NO XLA transposes in the call path.
    q2 = query.reshape(B * Sq * H, D)
    k2 = key.reshape(B * S * H, D)
    v2 = value.reshape(B * S * H, D)

    pq = _head_major_perm(B, Sq, H)
    pkv = _head_major_perm(B, S, H)

    kernel = functools.partial(_mha_fused_kernel, B=B, Sq=Sq, S=S, H=H, D=D)

    # grid=() -> single kernel invocation; every operand gets a default
    # whole-array VMEM block (largest is Wo: 512x512 bf16 = 0.5 MiB).
    return pl.pallas_call(
        kernel,
        out_shape=jax.ShapeDtypeStruct((B, Sq, E), jnp.float32),
        scratch_shapes=[pltpu.VMEM((B * Sq, E), jnp.float32)],
    )(q2, k2, v2, pq, pkv,
      prepped["wq_t"], prepped["wk_t"], prepped["wv_t"],
      prepped["wo_t"], prepped["bo"])


multi_head_attention = jax.jit(_mha_forward)


def _reference(key, query, value, params):
    """Plain-JAX f32 reference mirroring the PyTorch forward (mask=None)."""
    B, S, E = key.shape
    Sq = query.shape[1]
    H, D = N_HEADS, HEAD_DIM

    k = key.reshape(B, S, H, D) @ params["wk"].T
    q = query.reshape(B, Sq, H, D) @ params["wq"].T
    v = value.reshape(B, S, H, D) @ params["wv"].T

    q = q.transpose(0, 2, 1, 3)
    k = k.transpose(0, 2, 1, 3)
    v = v.transpose(0, 2, 1, 3)

    prod = jnp.einsum("bhqd,bhkd->bhqk", q, k) / math.sqrt(D)
    scores = jax.nn.softmax(prod, axis=-1)
    ctx = jnp.einsum("bhqk,bhkd->bhqd", scores, v)
    concat = ctx.transpose(0, 2, 1, 3).reshape(B, Sq, E)
    return concat @ params["wo"].T + params["bo"]


def init_params(rng):
    k1, k2, k3, k4, k5 = jax.random.split(rng, 5)
    bound_h = 1.0 / math.sqrt(HEAD_DIM)
    bound_e = 1.0 / math.sqrt(EMBED_DIM)
    return {
        "wq": jax.random.uniform(k1, (HEAD_DIM, HEAD_DIM), jnp.float32, -bound_h, bound_h),
        "wk": jax.random.uniform(k2, (HEAD_DIM, HEAD_DIM), jnp.float32, -bound_h, bound_h),
        "wv": jax.random.uniform(k3, (HEAD_DIM, HEAD_DIM), jnp.float32, -bound_h, bound_h),
        "wo": jax.random.uniform(k4, (EMBED_DIM, EMBED_DIM), jnp.float32, -bound_e, bound_e),
        "bo": jax.random.uniform(k5, (EMBED_DIM,), jnp.float32, -bound_e, bound_e),
    }


if __name__ == "__main__":
    rng = jax.random.PRNGKey(0)
    p_rng, kk, kq, kv = jax.random.split(rng, 4)

    B, SEQ = 2, 8
    params = init_params(p_rng)
    prepped = prepare_params(params)      # one-time init, not in the call path

    key_in = jax.random.normal(kk, (B, SEQ, EMBED_DIM), jnp.float32)
    query_in = jax.random.normal(kq, (B, SEQ, EMBED_DIM), jnp.float32)
    value_in = jax.random.normal(kv, (B, SEQ, EMBED_DIM), jnp.float32)

    out = multi_head_attention(key_in, query_in, value_in, prepped)
    out = jax.block_until_ready(out)

    ref = _reference(key_in, query_in, value_in, params)
    assert out.shape == (B, SEQ, EMBED_DIM)
    # bf16 MXU operands (weights + activations) with f32 accumulation, plus the
    # approximate softmax reciprocal -> compare to the exact-f32 reference at a
    # bf16-class tolerance.
    assert jnp.allclose(out, ref, atol=2e-2, rtol=2e-2), "mismatch vs reference"

    print("KERNEL_OK")
</pallas_src>

<mosaic_0001>
module attributes {stable_mosaic.version = 11 : i64} {
  func.func @_mha_fused_kernel(%arg0: memref<128x64xf32, #tpu.memory_space<vmem>>, %arg1: memref<128x64xf32, #tpu.memory_space<vmem>>, %arg2: memref<128x64xf32, #tpu.memory_space<vmem>>, %arg3: memref<128x128xbf16, #tpu.memory_space<vmem>>, %arg4: memref<128x128xbf16, #tpu.memory_space<vmem>>, %arg5: memref<64x64xbf16, #tpu.memory_space<vmem>>, %arg6: memref<64x64xbf16, #tpu.memory_space<vmem>>, %arg7: memref<64x64xbf16, #tpu.memory_space<vmem>>, %arg8: memref<512x512xbf16, #tpu.memory_space<vmem>>, %arg9: memref<1x512xf32, #tpu.memory_space<vmem>>, %arg10: memref<2x8x512xf32, #tpu.memory_space<vmem>>, %arg11: memref<16x512xf32, #tpu.memory_space<vmem>>) attributes {dimension_semantics = [], scalar_prefetch = 0 : i64, scratch_operands = 1 : i64, tpu.core_type = #tpu.core_type<tc>} {
    %c0 = arith.constant 0 : index
    %c0_0 = arith.constant 0 : index
    %0 = vector.load %arg0[%c0, %c0_0] : memref<128x64xf32, #tpu.memory_space<vmem>>, vector<128x64xf32>
    %1 = arith.truncf %0 : vector<128x64xf32> to vector<128x64xbf16>
    %c0_1 = arith.constant 0 : index
    %c0_2 = arith.constant 0 : index
    %2 = vector.load %arg5[%c0_1, %c0_2] : memref<64x64xbf16, #tpu.memory_space<vmem>>, vector<64x64xbf16>
    %cst = arith.constant dense<0.000000e+00> : vector<128x64xf32>
    %3 = tpu.matmul %1, %2, %cst {dimension_numbers = #tpu.dot_dimension_numbers<[1], [0], [0], [1], [0, 0, 1, 1], [], []>} : vector<128x64xbf16>, vector<64x64xbf16>, vector<128x64xf32> -> vector<128x64xf32>
    %c0_3 = arith.constant 0 : index
    %c0_4 = arith.constant 0 : index
    %4 = vector.load %arg1[%c0_3, %c0_4] : memref<128x64xf32, #tpu.memory_space<vmem>>, vector<128x64xf32>
    %5 = arith.truncf %4 : vector<128x64xf32> to vector<128x64xbf16>
    %c0_5 = arith.constant 0 : index
    %c0_6 = arith.constant 0 : index
    %6 = vector.load %arg6[%c0_5, %c0_6] : memref<64x64xbf16, #tpu.memory_space<vmem>>, vector<64x64xbf16>
    %cst_7 = arith.constant dense<0.000000e+00> : vector<128x64xf32>
    %7 = tpu.matmul %5, %6, %cst_7 {dimension_numbers = #tpu.dot_dimension_numbers<[1], [0], [0], [1], [0, 0, 1, 1], [], []>} : vector<128x64xbf16>, vector<64x64xbf16>, vector<128x64xf32> -> vector<128x64xf32>
    %c0_8 = arith.constant 0 : index
    %c0_9 = arith.constant 0 : index
    %8 = vector.load %arg2[%c0_8, %c0_9] : memref<128x64xf32, #tpu.memory_space<vmem>>, vector<128x64xf32>
    %9 = arith.truncf %8 : vector<128x64xf32> to vector<128x64xbf16>
    %c0_10 = arith.constant 0 : index
    %c0_11 = arith.constant 0 : index
    %10 = vector.load %arg7[%c0_10, %c0_11] : memref<64x64xbf16, #tpu.memory_space<vmem>>, vector<64x64xbf16>
    %cst_12 = arith.constant dense<0.000000e+00> : vector<128x64xf32>
    %11 = tpu.matmul %9, %10, %cst_12 {dimension_numbers = #tpu.dot_dimension_numbers<[1], [0], [0], [1], [0, 0, 1, 1], [], []>} : vector<128x64xbf16>, vector<64x64xbf16>, vector<128x64xf32> -> vector<128x64xf32>
    %c0_13 = arith.constant 0 : index
    %c0_14 = arith.constant 0 : index
    %12 = vector.load %arg3[%c0_13, %c0_14] : memref<128x128xbf16, #tpu.memory_space<vmem>>, vector<128x128xbf16>
    %13 = arith.truncf %3 : vector<128x64xf32> to vector<128x64xbf16>
    %cst_15 = arith.constant dense<0.000000e+00> : vector<128x64xf32>
    %14 = tpu.matmul %12, %13, %cst_15 {dimension_numbers = #tpu.dot_dimension_numbers<[1], [0], [0], [1], [0, 0, 1, 1], [], []>} : vector<128x128xbf16>, vector<128x64xbf16>, vector<128x64xf32> -> vector<128x64xf32>
    %c0_16 = arith.constant 0 : index
    %c0_17 = arith.constant 0 : index
    %15 = vector.load %arg4[%c0_16, %c0_17] : memref<128x128xbf16, #tpu.memory_space<vmem>>, vector<128x128xbf16>
    %16 = arith.truncf %7 : vector<128x64xf32> to vector<128x64xbf16>
    %cst_18 = arith.constant dense<0.000000e+00> : vector<128x64xf32>
    %17 = tpu.matmul %15, %16, %cst_18 {dimension_numbers = #tpu.dot_dimension_numbers<[1], [0], [0], [1], [0, 0, 1, 1], [], []>} : vector<128x128xbf16>, vector<128x64xbf16>, vector<128x64xf32> -> vector<128x64xf32>
    %c0_19 = arith.constant 0 : index
    %c0_20 = arith.constant 0 : index
    %18 = vector.load %arg4[%c0_19, %c0_20] : memref<128x128xbf16, #tpu.memory_space<vmem>>, vector<128x128xbf16>
    %19 = arith.truncf %11 : vector<128x64xf32> to vector<128x64xbf16>
    %cst_21 = arith.constant dense<0.000000e+00> : vector<128x64xf32>
    %20 = tpu.matmul %18, %19, %cst_21 {dimension_numbers = #tpu.dot_dimension_numbers<[1], [0], [0], [1], [0, 0, 1, 1], [], []>} : vector<128x128xbf16>, vector<128x64xbf16>, vector<128x64xf32> -> vector<128x64xf32>
    %21 = vector.shape_cast %14 : vector<128x64xf32> to vector<16x8x64xf32>
    %22 = arith.truncf %21 : vector<16x8x64xf32> to vector<16x8x64xbf16>
    %23 = vector.shape_cast %17 : vector<128x64xf32> to vector<16x8x64xf32>
    %24 = arith.truncf %23 : vector<16x8x64xf32> to vector<16x8x64xbf16>
    %25 = vector.shape_cast %20 : vector<128x64xf32> to vector<16x8x64xf32>
    %26 = arith.truncf %25 : vector<16x8x64xf32> to vector<16x8x64xbf16>
    "tpu.trace_start"() <{level = 10 : i32, message = "gqd,gkd->gqk"}> : () -> ()
    %cst_22 = arith.constant dense<0.000000e+00> : vector<16x8x8xf32>
    %27 = tpu.matmul %22, %24, %cst_22 {dimension_numbers = #tpu.dot_dimension_numbers<[2], [2], [1], [1], [0, 0, 0, 1, 1, 1], [0], [0]>} : vector<16x8x64xbf16>, vector<16x8x64xbf16>, vector<16x8x8xf32> -> vector<16x8x8xf32>
    "tpu.trace_stop"() : () -> ()
    %cst_23 = arith.constant dense<0xFF800000> : vector<16x8xf32>
    %28 = vector.multi_reduction <maximumf>, %27, %cst_23 [2] : vector<16x8x8xf32> to vector<16x8xf32>
    %29 = vector.shape_cast %28 : vector<16x8xf32> to vector<16x8x1xf32>
    %30 = vector.broadcast %29 : vector<16x8x1xf32> to vector<16x8x8xf32>
    %31 = arith.subf %27, %30 : vector<16x8x8xf32>
    %32 = math.exp %31 : vector<16x8x8xf32>
    %cst_24 = arith.constant dense<0.000000e+00> : vector<16x8xf32>
    %33 = vector.multi_reduction <add>, %32, %cst_24 [2] : vector<16x8x8xf32> to vector<16x8xf32>
    %34 = vector.shape_cast %33 : vector<16x8xf32> to vector<16x8x1xf32>
    %35 = tpu.reciprocal %34 {approx = true} : vector<16x8x1xf32> -> vector<16x8x1xf32>
    %36 = vector.broadcast %35 : vector<16x8x1xf32> to vector<16x8x8xf32>
    %37 = arith.mulf %32, %36 : vector<16x8x8xf32>
    %38 = arith.truncf %37 : vector<16x8x8xf32> to vector<16x8x8xbf16>
    "tpu.trace_start"() <{level = 10 : i32, message = "gqk,gkd->gqd"}> : () -> ()
    %cst_25 = arith.constant dense<0.000000e+00> : vector<16x8x64xf32>
    %39 = tpu.matmul %38, %26, %cst_25 {dimension_numbers = #tpu.dot_dimension_numbers<[2], [1], [1], [2], [0, 0, 0, 1, 1, 2], [0], [0]>} : vector<16x8x8xbf16>, vector<16x8x64xbf16>, vector<16x8x64xf32> -> vector<16x8x64xf32>
    "tpu.trace_stop"() : () -> ()
    %40 = vector.extract_strided_slice %39 {offsets = [0, 0, 0], sizes = [2, 8, 64], strides = [1, 1, 1]} : vector<16x8x64xf32> to vector<2x8x64xf32>
    %41 = vector.shape_cast %40 : vector<2x8x64xf32> to vector<16x64xf32>
    %c0_26 = arith.constant 0 : index
    %c0_27 = arith.constant 0 : index
    %42 = vector.load %arg11[%c0_26, %c0_27] : memref<16x512xf32, #tpu.memory_space<vmem>>, vector<16x64xf32>
    tpu.vector_store %arg11[%c0_26, %c0_27], %41 {strides = array<i32>} : memref<16x512xf32, #tpu.memory_space<vmem>>, vector<16x64xf32>,
    %43 = vector.extract_strided_slice %39 {offsets = [2, 0, 0], sizes = [2, 8, 64], strides = [1, 1, 1]} : vector<16x8x64xf32> to vector<2x8x64xf32>
    %44 = vector.shape_cast %43 : vector<2x8x64xf32> to vector<16x64xf32>
    %c0_28 = arith.constant 0 : index
    %c64 = arith.constant 64 : index
    %45 = vector.load %arg11[%c0_28, %c64] : memref<16x512xf32, #tpu.memory_space<vmem>>, vector<16x64xf32>
    tpu.vector_store %arg11[%c0_28, %c64], %44 {strides = array<i32>} : memref<16x512xf32, #tpu.memory_space<vmem>>, vector<16x64xf32>,
    %46 = vector.extract_strided_slice %39 {offsets = [4, 0, 0], sizes = [2, 8, 64], strides = [1, 1, 1]} : vector<16x8x64xf32> to vector<2x8x64xf32>
    %47 = vector.shape_cast %46 : vector<2x8x64xf32> to vector<16x64xf32>
    %c0_29 = arith.constant 0 : index
    %c128 = arith.constant 128 : index
    %48 = vector.load %arg11[%c0_29, %c128] : memref<16x512xf32, #tpu.memory_space<vmem>>, vector<16x64xf32>
    tpu.vector_store %arg11[%c0_29, %c128], %47 {strides = array<i32>} : memref<16x512xf32, #tpu.memory_space<vmem>>, vector<16x64xf32>,
    %49 = vector.extract_strided_slice %39 {offsets = [6, 0, 0], sizes = [2, 8, 64], strides = [1, 1, 1]} : vector<16x8x64xf32> to vector<2x8x64xf32>
    %50 = vector.shape_cast %49 : vector<2x8x64xf32> to vector<16x64xf32>
    %c0_30 = arith.constant 0 : index
    %c192 = arith.constant 192 : index
    %51 = vector.load %arg11[%c0_30, %c192] : memref<16x512xf32, #tpu.memory_space<vmem>>, vector<16x64xf32>
    tpu.vector_store %arg11[%c0_30, %c192], %50 {strides = array<i32>} : memref<16x512xf32, #tpu.memory_space<vmem>>, vector<16x64xf32>,
    %52 = vector.extract_strided_slice %39 {offsets = [8, 0, 0], sizes = [2, 8, 64], strides = [1, 1, 1]} : vector<16x8x64xf32> to vector<2x8x64xf32>
    %53 = vector.shape_cast %52 : vector<2x8x64xf32> to vector<16x64xf32>
    %c0_31 = arith.constant 0 : index
    %c256 = arith.constant 256 : index
    %54 = vector.load %arg11[%c0_31, %c256] : memref<16x512xf32, #tpu.memory_space<vmem>>, vector<16x64xf32>
    tpu.vector_store %arg11[%c0_31, %c256], %53 {strides = array<i32>} : memref<16x512xf32, #tpu.memory_space<vmem>>, vector<16x64xf32>,
    %55 = vector.extract_strided_slice %39 {offsets = [10, 0, 0], sizes = [2, 8, 64], strides = [1, 1, 1]} : vector<16x8x64xf32> to vector<2x8x64xf32>
    %56 = vector.shape_cast %55 : vector<2x8x64xf32> to vector<16x64xf32>
    %c0_32 = arith.constant 0 : index
    %c320 = arith.constant 320 : index
    %57 = vector.load %arg11[%c0_32, %c320] : memref<16x512xf32, #tpu.memory_space<vmem>>, vector<16x64xf32>
    tpu.vector_store %arg11[%c0_32, %c320], %56 {strides = array<i32>} : memref<16x512xf32, #tpu.memory_space<vmem>>, vector<16x64xf32>,
    %58 = vector.extract_strided_slice %39 {offsets = [12, 0, 0], sizes = [2, 8, 64], strides = [1, 1, 1]} : vector<16x8x64xf32> to vector<2x8x64xf32>
    %59 = vector.shape_cast %58 : vector<2x8x64xf32> to vector<16x64xf32>
    %c0_33 = arith.constant 0 : index
    %c384 = arith.constant 384 : index
    %60 = vector.load %arg11[%c0_33, %c384] : memref<16x512xf32, #tpu.memory_space<vmem>>, vector<16x64xf32>
    tpu.vector_store %arg11[%c0_33, %c384], %59 {strides = array<i32>} : memref<16x512xf32, #tpu.memory_space<vmem>>, vector<16x64xf32>,
    %61 = vector.extract_strided_slice %39 {offsets = [14, 0, 0], sizes = [2, 8, 64], strides = [1, 1, 1]} : vector<16x8x64xf32> to vector<2x8x64xf32>
    %62 = vector.shape_cast %61 : vector<2x8x64xf32> to vector<16x64xf32>
    %c0_34 = arith.constant 0 : index
    %c448 = arith.constant 448 : index
    %63 = vector.load %arg11[%c0_34, %c448] : memref<16x512xf32, #tpu.memory_space<vmem>>, vector<16x64xf32>
    tpu.vector_store %arg11[%c0_34, %c448], %62 {strides = array<i32>} : memref<16x512xf32, #tpu.memory_space<vmem>>, vector<16x64xf32>,
    %c0_35 = arith.constant 0 : index
    %c0_36 = arith.constant 0 : index
    %64 = vector.load %arg11[%c0_35, %c0_36] : memref<16x512xf32, #tpu.memory_space<vmem>>, vector<16x512xf32>
    %65 = arith.truncf %64 : vector<16x512xf32> to vector<16x512xbf16>
    %c0_37 = arith.constant 0 : index
    %c0_38 = arith.constant 0 : index
    %66 = vector.load %arg8[%c0_37, %c0_38] : memref<512x512xbf16, #tpu.memory_space<vmem>>, vector<512x512xbf16>
    %cst_39 = arith.constant dense<0.000000e+00> : vector<16x512xf32>
    %67 = tpu.matmul %65, %66, %cst_39 {dimension_numbers = #tpu.dot_dimension_numbers<[1], [0], [0], [1], [0, 0, 1, 1], [], []>} : vector<16x512xbf16>, vector<512x512xbf16>, vector<16x512xf32> -> vector<16x512xf32>
    %c0_40 = arith.constant 0 : index
    %c0_41 = arith.constant 0 : index
    %68 = vector.load %arg9[%c0_40, %c0_41] : memref<1x512xf32, #tpu.memory_space<vmem>>, vector<1x512xf32>
    %69 = vector.broadcast %68 : vector<1x512xf32> to vector<16x512xf32>
    %70 = arith.addf %67, %69 : vector<16x512xf32>
    %71 = vector.shape_cast %70 : vector<16x512xf32> to vector<2x8x512xf32>
    %c0_42 = arith.constant 0 : index
    %c0_43 = arith.constant 0 : index
    %c0_44 = arith.constant 0 : index
    %72 = vector.load %arg10[%c0_42, %c0_43, %c0_44] : memref<2x8x512xf32, #tpu.memory_space<vmem>>, vector<2x8x512xf32>
    tpu.vector_store %arg10[%c0_42, %c0_43, %c0_44], %71 {strides = array<i32>} : memref<2x8x512xf32, #tpu.memory_space<vmem>>, vector<2x8x512xf32>,
    return
  }
}

</mosaic_0001>

<llo_original>
// kernel: _mha_forward.1
$region0: #{_mha_forward.1}
  #allocation0 [shape = 'u32[]', space=smem, size = 0x4, offset = 0x4, fixed_abs, tag = 'smem constant byte address 0x4 - core index']
  #allocation1 [shape = 'u32[144,128]{1,0:T(1,128)}', space=vmem, size = 0x12000, scoped, tag = 'internal scratch']
  #allocation2 [shape = 'f32[16,512]{1,0:T(8,128)}', space=vmem, size = 0x8000, scoped, tag = 'scratch operand']
  %s0 = inlined_call_operand.vmem [shape: f32[128,64], index: 0, kind: input, shape index: {}]
  %s1 = inlined_call_operand.vmem [shape: f32[128,64], index: 1, kind: input, shape index: {}]
  %s2 = inlined_call_operand.vmem [shape: f32[128,64], index: 2, kind: input, shape index: {}]
  %s3 = inlined_call_operand.vmem [shape: bf16[128,128], index: 3, kind: input, shape index: {}, may-alias: {3,4}]
  %s4 = inlined_call_operand.vmem [shape: bf16[128,128], index: 4, kind: input, shape index: {}, may-alias: {3,4}]
  %s5 = inlined_call_operand.vmem [shape: bf16[64,64], index: 5, kind: input, shape index: {}]
  %s6 = inlined_call_operand.vmem [shape: bf16[64,64], index: 6, kind: input, shape index: {}]
  %s7 = inlined_call_operand.vmem [shape: bf16[64,64], index: 7, kind: input, shape index: {}]
  %s8 = inlined_call_operand.hbm [shape: bf16[512,512], index: 8, kind: input, shape index: {}]
  %s9 = inlined_call_operand.vmem [shape: f32[1,512], index: 9, kind: input, shape index: {}]
  %s10 = inlined_call_operand.hbm [shape: f32[2,8,512], index: 10, kind: output, shape index: {}]
  %s11 = sld [smem:[#allocation0]]
  $region54: #{_mha_forward.1} parent=0
    _
  %s13 = ssub.s32 1, %s11
  %s14 = scalar_select 0, %s13, %s11
  $region1: #{_mha_forward.1} parent=0
    #allocation3 [shape = 'u8[524288]{0}', space=vmem, size = 0x80000, scoped, tag = 'input window, operand 8, single buffered']
    #allocation4 [shape = 's32[1]{0}', space=sflag, size = 0x4, scoped, tag = 'scoped memory for _mha_forward.1']
    #allocation5 [shape = 's32[1]{0}', space=sflag, size = 0x4, scoped, tag = 'scoped memory for _mha_forward.1']
    #allocation6 [shape = 'u8[32768]{0}', space=vmem, size = 0x8000, scoped, tag = 'output window, operand 0, single buffered']
    %15 = vsyncpa [#allocation4], 0
    %16 = vsyncpa [#allocation5], 0
    // Predicated region
    $region2: #{_mha_forward.1} parent=1 // pred_check
      _
    $region3: #{_mha_forward.1} parent=1 // pred_check_branch
      %18 = sbr.rel (0) target = $region5
    $region4: #{_mha_forward.1} parent=1 // pred_region
      _
    $region5: #{_mha_forward.1} parent=1 // pred_fallthru
      _
    // Predicated region
    $region6: #{_mha_forward.1} parent=1 // pred_check
      _
    $region7: #{_mha_forward.1} parent=1 // pred_check_branch
      %20 = sbr.rel (0) target = $region9
    $region8: #{_mha_forward.1} parent=1 // pred_region
      _
    $region9: #{_mha_forward.1} parent=1 // pred_fallthru
      _
    // Predicated region
    $region10: #{_mha_forward.1} parent=1 // pred_check
      _
    $region11: #{_mha_forward.1} parent=1 // pred_check_branch
      %22 = sbr.rel (0) target = $region13
    $region12: #{_mha_forward.1} parent=1 // pred_region
      _
    $region13: #{_mha_forward.1} parent=1 // pred_fallthru
      _
    // Predicated region
    $region14: #{_mha_forward.1} parent=1 // pred_check
      _
    $region15: #{_mha_forward.1} parent=1 // pred_check_branch
      %24 = sbr.rel (0) target = $region17
    $region16: #{_mha_forward.1} parent=1 // pred_region
      _
    $region17: #{_mha_forward.1} parent=1 // pred_fallthru
      _
    // Predicated region
    $region18: #{_mha_forward.1} parent=1 // pred_check
      _
    $region19: #{_mha_forward.1} parent=1 // pred_check_branch
      %26 = sbr.rel (0) target = $region21
    $region20: #{_mha_forward.1} parent=1 // pred_region
      _
    $region21: #{_mha_forward.1} parent=1 // pred_fallthru
      _
    // Predicated region
    $region22: #{_mha_forward.1} parent=1 // pred_check
      _
    $region23: #{_mha_forward.1} parent=1 // pred_check_branch
      %28 = sbr.rel (0) target = $region25
    $region24: #{_mha_forward.1} parent=1 // pred_region
      _
    $region25: #{_mha_forward.1} parent=1 // pred_fallthru
      _
    // Predicated region
    $region26: #{_mha_forward.1} parent=1 // pred_check
      _
    $region27: #{_mha_forward.1} parent=1 // pred_check_branch
      %30 = sbr.rel (0) target = $region29
    $region28: #{_mha_forward.1} parent=1 // pred_region
      _
    $region29: #{_mha_forward.1} parent=1 // pred_fallthru
      _
    // Predicated region
    $region30: #{_mha_forward.1} parent=1 // pred_check
      _
    $region31: #{_mha_forward.1} parent=1 // pred_check_branch
      %32 = sbr.rel (0) target = $region33
    $region32: #{_mha_forward.1} parent=1 // pred_region
      _
    $region33: #{_mha_forward.1} parent=1 // pred_fallthru
      _
    // Predicated region
    $region34: #{_mha_forward.1} parent=1 // pred_check
      _
    $region35: #{_mha_forward.1} parent=1 // pred_check_branch
      %34 = sbr.rel (0) target = $region37
    $region36: #{_mha_forward.1} parent=1 // pred_region
      %s36 = ssub.s32 16384, 16384
      %37 = vsyncadd [#allocation4], %s36
      %s38 = sshll.u32 [#allocation3], 4
      %s39 = int_to_ptr.vmem [resolvable:$true] %s38
      %44 = dma.hbm_to_vmem [thread:$0]  %s8, 16384, %s39, [#allocation4], 256, 256, 16
    $region37: #{_mha_forward.1} parent=1 // pred_fallthru
      _
    // Predicated region
    $region38: #{_mha_forward.1} parent=1 // pred_check
      _
    $region39: #{_mha_forward.1} parent=1 // pred_check_branch
      %46 = sbr.rel (0) target = $region41
    $region40: #{_mha_forward.1} parent=1 // pred_region
      _
    $region41: #{_mha_forward.1} parent=1 // pred_fallthru
      _
    // Predicated region
    $region42: #{_mha_forward.1} parent=1 // pred_check
      _
    $region43: #{_mha_forward.1} parent=1 // pred_check_branch
      %48 = sbr.rel (0) target = $region45
    $region44: #{_mha_forward.1} parent=1 // pred_region
      %49 = dma.done [#allocation4], 16384
    $region45: #{_mha_forward.1} parent=1 // pred_fallthru
      _
    %v51 = vld [vmem:[%s0] sm:$0xff]
    %v52 = vld [vmem:[%s0 + $0x8] sm:$0xff]
    %v53 = vld [vmem:[%s0 + $0x10] sm:$0xff]
    %v54 = vld [vmem:[%s0 + $0x18] sm:$0xff]
    %v55 = vld [vmem:[%s0 + $0x20] sm:$0xff]
    %v56 = vld [vmem:[%s0 + $0x28] sm:$0xff]
    %v57 = vld [vmem:[%s0 + $0x30] sm:$0xff]
    %v58 = vld [vmem:[%s0 + $0x38] sm:$0xff]
    %v59 = vld [vmem:[%s0 + $0x40] sm:$0xff]
    %v60 = vld [vmem:[%s0 + $0x48] sm:$0xff]
    %v61 = vld [vmem:[%s0 + $0x50] sm:$0xff]
    %v62 = vld [vmem:[%s0 + $0x58] sm:$0xff]
    %v63 = vld [vmem:[%s0 + $0x60] sm:$0xff]
    %v64 = vld [vmem:[%s0 + $0x68] sm:$0xff]
    %v65 = vld [vmem:[%s0 + $0x70] sm:$0xff]
    %v66 = vld [vmem:[%s0 + $0x78] sm:$0xff]
    %v67 = vpack.c.bf16 %v52, %v51
    %v68 = vpack.c.bf16 %v54, %v53
    %v69 = vpack.c.bf16 %v56, %v55
    %v70 = vpack.c.bf16 %v58, %v57
    %v71 = vpack.c.bf16 %v60, %v59
    %v72 = vpack.c.bf16 %v62, %v61
    %v73 = vpack.c.bf16 %v64, %v63
    %v74 = vpack.c.bf16 %v66, %v65
    %v75 = vld [vmem:[%s5] sm:$0xf]
    %v76 = vld [vmem:[%s5 + $0x4] sm:$0xf]
    %v77 = vld [vmem:[%s5 + $0x8] sm:$0xf]
    %v78 = vld [vmem:[%s5 + $0xc] sm:$0xf]
    %v79 = vld [vmem:[%s5 + $0x10] sm:$0xf]
    %v80 = vld [vmem:[%s5 + $0x14] sm:$0xf]
    %v81 = vld [vmem:[%s5 + $0x18] sm:$0xf]
    %v82 = vld [vmem:[%s5 + $0x1c] sm:$0xf]
    %v91 = vunpack.c.l.b16 %v75
    %v92 = vunpack.c.l.b16 %v76
    %v93 = vunpack.c.l.b16 %v77
    %v94 = vunpack.c.l.b16 %v78
    %v95 = vunpack.c.l.b16 %v79
    %v96 = vunpack.c.l.b16 %v80
    %v97 = vunpack.c.l.b16 %v81
    %v98 = vunpack.c.l.b16 %v82
    %v99 = vpack.c.b16 %v92, %v91
    %v100 = vpack.c.b16 %v94, %v93
    %v101 = vpack.c.b16 %v96, %v95
    %v102 = vpack.c.b16 %v98, %v97
    %vm107 = vcmask 523264
    %v109 = vsel %vm107, %v67, 0
    %v112 = vsel %vm107, %v68, 0
    %v115 = vsel %vm107, %v69, 0
    %v118 = vsel %vm107, %v70, 0
    %v121 = vsel %vm107, %v71, 0
    %v124 = vsel %vm107, %v72, 0
    %v127 = vsel %vm107, %v73, 0
    %v130 = vsel %vm107, %v74, 0
    %132 = vmatprep.subr.bf16.mxu0 0
    %133 = vmatpush1.bf16.msra.mxu0 0
    %134 = vmatprep.subr.bf16.mxu0 0
    %135 = vmatpush1.bf16.msra.mxu0 0
    %136 = vmatprep.subr.bf16.mxu0 0
    %137 = vmatpush1.bf16.msra.mxu0 0
    %138 = vmatprep.subr.bf16.mxu0 0
    %139 = vmatpush1.bf16.msra.mxu0 0
    %140 = vmatprep.subr.bf16.mxu0 0
    %141 = vmatpush1.bf16.msra.mxu0 %v102
    %142 = vmatprep.subr.bf16.mxu0 0
    %143 = vmatpush1.bf16.msra.mxu0 %v101
    %144 = vmatprep.subr.bf16.mxu0 0
    %145 = vmatpush1.bf16.msra.mxu0 %v100
    %146 = vmatprep.subr.bf16.mxu0 0
    %147 = vmatpush1.bf16.msra.mxu0 %v99
    %148 = vmatprep.subr.bf16.mxu0 0
    %149 = vmatpush2.bf16.msra.mxu0 0
    %150 = vmatprep.subr.bf16.mxu0 0
    %151 = vmatpush2.bf16.msra.mxu0 0
    %152 = vmatprep.subr.bf16.mxu0 0
    %153 = vmatpush2.bf16.msra.mxu0 0
    %154 = vmatprep.subr.bf16.mxu0 0
    %155 = vmatpush2.bf16.msra.mxu0 0
    %156 = vmatprep.subr.bf16.mxu0 0
    %157 = vmatpush2.bf16.msra.mxu0 0
    %158 = vmatprep.subr.bf16.mxu0 0
    %159 = vmatpush2.bf16.msra.mxu0 0
    %160 = vmatprep.subr.bf16.mxu0 0
    %161 = vmatpush2.bf16.msra.mxu0 0
    %162 = vmatprep.subr.bf16.mxu0 0
    %163 = vmatpush2.bf16.msra.mxu0 0
    %164 = vmatprep.mubr.bf16.mxu0 0
    %165 = vmatmul.mubr.bf16.gmra.mxu0 %v109
    %v166 = vpop.f32.mrf.mxu0
    %v167 = vadd.f32 0.0, %v166
    %v168 = vpop.f32.mrf.mxu0
    %v169 = vpop.f32.mrf.mxu0
    %v170 = vadd.f32 0.0, %v169
    %v171 = vpop.f32.mrf.mxu0
    %172 = vmatprep.mubr.bf16.mxu0 0
    %173 = vmatmul.mubr.bf16.gmra.mxu0 %v112
    %v174 = vpop.f32.mrf.mxu0
    %v175 = vadd.f32 0.0, %v174
    %v176 = vpop.f32.mrf.mxu0
    %v177 = vpop.f32.mrf.mxu0
    %v178 = vadd.f32 0.0, %v177
    %v179 = vpop.f32.mrf.mxu0
    %180 = vmatprep.mubr.bf16.mxu0 0
    %181 = vmatmul.mubr.bf16.gmra.mxu0 %v115
    %v182 = vpop.f32.mrf.mxu0
    %v183 = vadd.f32 0.0, %v182
    %v184 = vpop.f32.mrf.mxu0
    %v185 = vpop.f32.mrf.mxu0
    %v186 = vadd.f32 0.0, %v185
    %v187 = vpop.f32.mrf.mxu0
    %188 = vmatprep.mubr.bf16.mxu0 0
    %189 = vmatmul.mubr.bf16.gmra.mxu0 %v118
    %v190 = vpop.f32.mrf.mxu0
    %v191 = vadd.f32 0.0, %v190
    %v192 = vpop.f32.mrf.mxu0
    %v193 = vpop.f32.mrf.mxu0
    %v194 = vadd.f32 0.0, %v193
    %v195 = vpop.f32.mrf.mxu0
    %196 = vmatprep.mubr.bf16.mxu0 0
    %197 = vmatmul.mubr.bf16.gmra.mxu0 %v121
    %v198 = vpop.f32.mrf.mxu0
    %v199 = vadd.f32 0.0, %v198
    %v200 = vpop.f32.mrf.mxu0
    %v201 = vpop.f32.mrf.mxu0
    %v202 = vadd.f32 0.0, %v201
    %v203 = vpop.f32.mrf.mxu0
    %204 = vmatprep.mubr.bf16.mxu0 0
    %205 = vmatmul.mubr.bf16.gmra.mxu0 %v124
    %v206 = vpop.f32.mrf.mxu0
    %v207 = vadd.f32 0.0, %v206
    %v208 = vpop.f32.mrf.mxu0
    %v209 = vpop.f32.mrf.mxu0
    %v210 = vadd.f32 0.0, %v209
    %v211 = vpop.f32.mrf.mxu0
    %212 = vmatprep.mubr.bf16.mxu0 0
    %213 = vmatmul.mubr.bf16.gmra.mxu0 %v127
    %v214 = vpop.f32.mrf.mxu0
    %v215 = vadd.f32 0.0, %v214
    %v216 = vpop.f32.mrf.mxu0
    %v217 = vpop.f32.mrf.mxu0
    %v218 = vadd.f32 0.0, %v217
    %v219 = vpop.f32.mrf.mxu0
    %220 = vmatprep.mubr.bf16.mxu0 0
    %221 = vmatmul.mubr.bf16.gmra.mxu0 %v130
    %v222 = vpop.f32.mrf.mxu0
    %v223 = vadd.f32 0.0, %v222
    %v224 = vpop.f32.mrf.mxu0
    %v225 = vpop.f32.mrf.mxu0
    %v226 = vadd.f32 0.0, %v225
    %v227 = vpop.f32.mrf.mxu0
    %228 = vdwg.mxu0
    %v229 = vld [vmem:[%s1] sm:$0xff]
    %v230 = vld [vmem:[%s1 + $0x8] sm:$0xff]
    %v231 = vld [vmem:[%s1 + $0x10] sm:$0xff]
    %v232 = vld [vmem:[%s1 + $0x18] sm:$0xff]
    %v233 = vld [vmem:[%s1 + $0x20] sm:$0xff]
    %v234 = vld [vmem:[%s1 + $0x28] sm:$0xff]
    %v235 = vld [vmem:[%s1 + $0x30] sm:$0xff]
    %v236 = vld [vmem:[%s1 + $0x38] sm:$0xff]
    %v237 = vld [vmem:[%s1 + $0x40] sm:$0xff]
    %v238 = vld [vmem:[%s1 + $0x48] sm:$0xff]
    %v239 = vld [vmem:[%s1 + $0x50] sm:$0xff]
    %v240 = vld [vmem:[%s1 + $0x58] sm:$0xff]
    %v241 = vld [vmem:[%s1 + $0x60] sm:$0xff]
    %v242 = vld [vmem:[%s1 + $0x68] sm:$0xff]
    %v243 = vld [vmem:[%s1 + $0x70] sm:$0xff]
    %v244 = vld [vmem:[%s1 + $0x78] sm:$0xff]
    %v245 = vpack.c.bf16 %v230, %v229
    %v246 = vpack.c.bf16 %v232, %v231
    %v247 = vpack.c.bf16 %v234, %v233
    %v248 = vpack.c.bf16 %v236, %v235
    %v249 = vpack.c.bf16 %v238, %v237
    %v250 = vpack.c.bf16 %v240, %v239
    %v251 = vpack.c.bf16 %v242, %v241
    %v252 = vpack.c.bf16 %v244, %v243
    %v253 = vld [vmem:[%s6] sm:$0xf]
    %v254 = vld [vmem:[%s6 + $0x4] sm:$0xf]
    %v255 = vld [vmem:[%s6 + $0x8] sm:$0xf]
    %v256 = vld [vmem:[%s6 + $0xc] sm:$0xf]
    %v257 = vld [vmem:[%s6 + $0x10] sm:$0xf]
    %v258 = vld [vmem:[%s6 + $0x14] sm:$0xf]
    %v259 = vld [vmem:[%s6 + $0x18] sm:$0xf]
    %v260 = vld [vmem:[%s6 + $0x1c] sm:$0xf]
    %v269 = vunpack.c.l.b16 %v253
    %v270 = vunpack.c.l.b16 %v254
    %v271 = vunpack.c.l.b16 %v255
    %v272 = vunpack.c.l.b16 %v256
    %v273 = vunpack.c.l.b16 %v257
    %v274 = vunpack.c.l.b16 %v258
    %v275 = vunpack.c.l.b16 %v259
    %v276 = vunpack.c.l.b16 %v260
    %v277 = vpack.c.b16 %v270, %v269
    %v278 = vpack.c.b16 %v272, %v271
    %v279 = vpack.c.b16 %v274, %v273
    %v280 = vpack.c.b16 %v276, %v275
    %v286 = vsel %vm107, %v245, 0
    %v289 = vsel %vm107, %v246, 0
    %v292 = vsel %vm107, %v247, 0
    %v295 = vsel %vm107, %v248, 0
    %v298 = vsel %vm107, %v249, 0
    %v301 = vsel %vm107, %v250, 0
    %v304 = vsel %vm107, %v251, 0
    %v307 = vsel %vm107, %v252, 0
    %309 = vmatprep.subr.bf16.mxu0 0
    %310 = vmatpush1.bf16.msra.mxu0 0
    %311 = vmatprep.subr.bf16.mxu0 0
    %312 = vmatpush1.bf16.msra.mxu0 0
    %313 = vmatprep.subr.bf16.mxu0 0
    %314 = vmatpush1.bf16.msra.mxu0 0
    %315 = vmatprep.subr.bf16.mxu0 0
    %316 = vmatpush1.bf16.msra.mxu0 0
    %317 = vmatprep.subr.bf16.mxu0 0
    %318 = vmatpush1.bf16.msra.mxu0 %v280
    %319 = vmatprep.subr.bf16.mxu0 0
    %320 = vmatpush1.bf16.msra.mxu0 %v279
    %321 = vmatprep.subr.bf16.mxu0 0
    %322 = vmatpush1.bf16.msra.mxu0 %v278
    %323 = vmatprep.subr.bf16.mxu0 0
    %324 = vmatpush1.bf16.msra.mxu0 %v277
    %325 = vmatprep.subr.bf16.mxu0 0
    %326 = vmatpush2.bf16.msra.mxu0 0
    %327 = vmatprep.subr.bf16.mxu0 0
    %328 = vmatpush2.bf16.msra.mxu0 0
    %329 = vmatprep.subr.bf16.mxu0 0
    %330 = vmatpush2.bf16.msra.mxu0 0
    %331 = vmatprep.subr.bf16.mxu0 0
    %332 = vmatpush2.bf16.msra.mxu0 0
    %333 = vmatprep.subr.bf16.mxu0 0
    %334 = vmatpush2.bf16.msra.mxu0 0
    %335 = vmatprep.subr.bf16.mxu0 0
    %336 = vmatpush2.bf16.msra.mxu0 0
    %337 = vmatprep.subr.bf16.mxu0 0
    %338 = vmatpush2.bf16.msra.mxu0 0
    %339 = vmatprep.subr.bf16.mxu0 0
    %340 = vmatpush2.bf16.msra.mxu0 0
    %341 = vmatprep.mubr.bf16.mxu0 0
    %342 = vmatmul.mubr.bf16.gmra.mxu0 %v286
    %v343 = vpop.f32.mrf.mxu0
    %v344 = vadd.f32 0.0, %v343
    %v345 = vpop.f32.mrf.mxu0
    %v346 = vpop.f32.mrf.mxu0
    %v347 = vadd.f32 0.0, %v346
    %v348 = vpop.f32.mrf.mxu0
    %349 = vmatprep.mubr.bf16.mxu0 0
    %350 = vmatmul.mubr.bf16.gmra.mxu0 %v289
    %v351 = vpop.f32.mrf.mxu0
    %v352 = vadd.f32 0.0, %v351
    %v353 = vpop.f32.mrf.mxu0
    %v354 = vpop.f32.mrf.mxu0
    %v355 = vadd.f32 0.0, %v354
    %v356 = vpop.f32.mrf.mxu0
    %357 = vmatprep.mubr.bf16.mxu0 0
    %358 = vmatmul.mubr.bf16.gmra.mxu0 %v292
    %v359 = vpop.f32.mrf.mxu0
    %v360 = vadd.f32 0.0, %v359
    %v361 = vpop.f32.mrf.mxu0
    %v362 = vpop.f32.mrf.mxu0
    %v363 = vadd.f32 0.0, %v362
    %v364 = vpop.f32.mrf.mxu0
    %365 = vmatprep.mubr.bf16.mxu0 0
    %366 = vmatmul.mubr.bf16.gmra.mxu0 %v295
    %v367 = vpop.f32.mrf.mxu0
    %v368 = vadd.f32 0.0, %v367
    %v369 = vpop.f32.mrf.mxu0
    %v370 = vpop.f32.mrf.mxu0
    %v371 = vadd.f32 0.0, %v370
    %v372 = vpop.f32.mrf.mxu0
    %373 = vmatprep.mubr.bf16.mxu0 0
    %374 = vmatmul.mubr.bf16.gmra.mxu0 %v298
    %v375 = vpop.f32.mrf.mxu0
    %v376 = vadd.f32 0.0, %v375
    %v377 = vpop.f32.mrf.mxu0
    %v378 = vpop.f32.mrf.mxu0
    %v379 = vadd.f32 0.0, %v378
    %v380 = vpop.f32.mrf.mxu0
    %381 = vmatprep.mubr.bf16.mxu0 0
    %382 = vmatmul.mubr.bf16.gmra.mxu0 %v301
    %v383 = vpop.f32.mrf.mxu0
    %v384 = vadd.f32 0.0, %v383
    %v385 = vpop.f32.mrf.mxu0
    %v386 = vpop.f32.mrf.mxu0
    %v387 = vadd.f32 0.0, %v386
    %v388 = vpop.f32.mrf.mxu0
    %389 = vmatprep.mubr.bf16.mxu0 0
    %390 = vmatmul.mubr.bf16.gmra.mxu0 %v304
    %v391 = vpop.f32.mrf.mxu0
    %v392 = vadd.f32 0.0, %v391
    %v393 = vpop.f32.mrf.mxu0
    %v394 = vpop.f32.mrf.mxu0
    %v395 = vadd.f32 0.0, %v394
    %v396 = vpop.f32.mrf.mxu0
    %397 = vmatprep.mubr.bf16.mxu0 0
    %398 = vmatmul.mubr.bf16.gmra.mxu0 %v307
    %v399 = vpop.f32.mrf.mxu0
    %v400 = vadd.f32 0.0, %v399
    %v401 = vpop.f32.mrf.mxu0
    %v402 = vpop.f32.mrf.mxu0
    %v403 = vadd.f32 0.0, %v402
    %v404 = vpop.f32.mrf.mxu0
    %405 = vdwg.mxu0
    %v406 = vld [vmem:[%s2] sm:$0xff]
    %v407 = vld [vmem:[%s2 + $0x8] sm:$0xff]
    %v408 = vld [vmem:[%s2 + $0x10] sm:$0xff]
    %v409 = vld [vmem:[%s2 + $0x18] sm:$0xff]
    %v410 = vld [vmem:[%s2 + $0x20] sm:$0xff]
    %v411 = vld [vmem:[%s2 + $0x28] sm:$0xff]
    %v412 = vld [vmem:[%s2 + $0x30] sm:$0xff]
    %v413 = vld [vmem:[%s2 + $0x38] sm:$0xff]
    %v414 = vld [vmem:[%s2 + $0x40] sm:$0xff]
    %v415 = vld [vmem:[%s2 + $0x48] sm:$0xff]
    %v416 = vld [vmem:[%s2 + $0x50] sm:$0xff]
    %v417 = vld [vmem:[%s2 + $0x58] sm:$0xff]
    %v418 = vld [vmem:[%s2 + $0x60] sm:$0xff]
    %v419 = vld [vmem:[%s2 + $0x68] sm:$0xff]
    %v420 = vld [vmem:[%s2 + $0x70] sm:$0xff]
    %v421 = vld [vmem:[%s2 + $0x78] sm:$0xff]
    %v422 = vpack.c.bf16 %v407, %v406
    %v423 = vpack.c.bf16 %v409, %v408
    %v424 = vpack.c.bf16 %v411, %v410
    %v425 = vpack.c.bf16 %v413, %v412
    %v426 = vpack.c.bf16 %v415, %v414
    %v427 = vpack.c.bf16 %v417, %v416
    %v428 = vpack.c.bf16 %v419, %v418
    %v429 = vpack.c.bf16 %v421, %v420
    %v430 = vld [vmem:[%s7] sm:$0xf]
    %v431 = vld [vmem:[%s7 + $0x4] sm:$0xf]
    %v432 = vld [vmem:[%s7 + $0x8] sm:$0xf]
    %v433 = vld [vmem:[%s7 + $0xc] sm:$0xf]
    %v434 = vld [vmem:[%s7 + $0x10] sm:$0xf]
    %v435 = vld [vmem:[%s7 + $0x14] sm:$0xf]
    %v436 = vld [vmem:[%s7 + $0x18] sm:$0xf]
    %v437 = vld [vmem:[%s7 + $0x1c] sm:$0xf]
    %v446 = vunpack.c.l.b16 %v430
    %v447 = vunpack.c.l.b16 %v431
    %v448 = vunpack.c.l.b16 %v432
    %v449 = vunpack.c.l.b16 %v433
    %v450 = vunpack.c.l.b16 %v434
    %v451 = vunpack.c.l.b16 %v435
    %v452 = vunpack.c.l.b16 %v436
    %v453 = vunpack.c.l.b16 %v437
    %v454 = vpack.c.b16 %v447, %v446
    %v455 = vpack.c.b16 %v449, %v448
    %v456 = vpack.c.b16 %v451, %v450
    %v457 = vpack.c.b16 %v453, %v452
    %v463 = vsel %vm107, %v422, 0
    %v466 = vsel %vm107, %v423, 0
    %v469 = vsel %vm107, %v424, 0
    %v472 = vsel %vm107, %v425, 0
    %v475 = vsel %vm107, %v426, 0
    %v478 = vsel %vm107, %v427, 0
    %v481 = vsel %vm107, %v428, 0
    %v484 = vsel %vm107, %v429, 0
    %486 = vmatprep.subr.bf16.mxu0 0
    %487 = vmatpush1.bf16.msra.mxu0 0
    %488 = vmatprep.subr.bf16.mxu0 0
    %489 = vmatpush1.bf16.msra.mxu0 0
    %490 = vmatprep.subr.bf16.mxu0 0
    %491 = vmatpush1.bf16.msra.mxu0 0
    %492 = vmatprep.subr.bf16.mxu0 0
    %493 = vmatpush1.bf16.msra.mxu0 0
    %494 = vmatprep.subr.bf16.mxu0 0
    %495 = vmatpush1.bf16.msra.mxu0 %v457
    %496 = vmatprep.subr.bf16.mxu0 0
    %497 = vmatpush1.bf16.msra.mxu0 %v456
    %498 = vmatprep.subr.bf16.mxu0 0
    %499 = vmatpush1.bf16.msra.mxu0 %v455
    %500 = vmatprep.subr.bf16.mxu0 0
    %501 = vmatpush1.bf16.msra.mxu0 %v454
    %502 = vmatprep.subr.bf16.mxu0 0
    %503 = vmatpush2.bf16.msra.mxu0 0
    %504 = vmatprep.subr.bf16.mxu0 0
    %505 = vmatpush2.bf16.msra.mxu0 0
    %506 = vmatprep.subr.bf16.mxu0 0
    %507 = vmatpush2.bf16.msra.mxu0 0
    %508 = vmatprep.subr.bf16.mxu0 0
    %509 = vmatpush2.bf16.msra.mxu0 0
    %510 = vmatprep.subr.bf16.mxu0 0
    %511 = vmatpush2.bf16.msra.mxu0 0
    %512 = vmatprep.subr.bf16.mxu0 0
    %513 = vmatpush2.bf16.msra.mxu0 0
    %514 = vmatprep.subr.bf16.mxu0 0
    %515 = vmatpush2.bf16.msra.mxu0 0
    %516 = vmatprep.subr.bf16.mxu0 0
    %517 = vmatpush2.bf16.msra.mxu0 0
    %518 = vmatprep.mubr.bf16.mxu0 0
    %519 = vmatmul.mubr.bf16.gmra.mxu0 %v463
    %v520 = vpop.f32.mrf.mxu0
    %v521 = vadd.f32 0.0, %v520
    %v522 = vpop.f32.mrf.mxu0
    %v523 = vpop.f32.mrf.mxu0
    %v524 = vadd.f32 0.0, %v523
    %v525 = vpop.f32.mrf.mxu0
    %526 = vmatprep.mubr.bf16.mxu0 0
    %527 = vmatmul.mubr.bf16.gmra.mxu0 %v466
    %v528 = vpop.f32.mrf.mxu0
    %v529 = vadd.f32 0.0, %v528
    %v530 = vpop.f32.mrf.mxu0
    %v531 = vpop.f32.mrf.mxu0
    %v532 = vadd.f32 0.0, %v531
    %v533 = vpop.f32.mrf.mxu0
    %534 = vmatprep.mubr.bf16.mxu0 0
    %535 = vmatmul.mubr.bf16.gmra.mxu0 %v469
    %v536 = vpop.f32.mrf.mxu0
    %v537 = vadd.f32 0.0, %v536
    %v538 = vpop.f32.mrf.mxu0
    %v539 = vpop.f32.mrf.mxu0
    %v540 = vadd.f32 0.0, %v539
    %v541 = vpop.f32.mrf.mxu0
    %542 = vmatprep.mubr.bf16.mxu0 0
    %543 = vmatmul.mubr.bf16.gmra.mxu0 %v472
    %v544 = vpop.f32.mrf.mxu0
    %v545 = vadd.f32 0.0, %v544
    %v546 = vpop.f32.mrf.mxu0
    %v547 = vpop.f32.mrf.mxu0
    %v548 = vadd.f32 0.0, %v547
    %v549 = vpop.f32.mrf.mxu0
    %550 = vmatprep.mubr.bf16.mxu0 0
    %551 = vmatmul.mubr.bf16.gmra.mxu0 %v475
    %v552 = vpop.f32.mrf.mxu0
    %v553 = vadd.f32 0.0, %v552
    %v554 = vpop.f32.mrf.mxu0
    %v555 = vpop.f32.mrf.mxu0
    %v556 = vadd.f32 0.0, %v555
    %v557 = vpop.f32.mrf.mxu0
    %558 = vmatprep.mubr.bf16.mxu0 0
    %559 = vmatmul.mubr.bf16.gmra.mxu0 %v478
    %v560 = vpop.f32.mrf.mxu0
    %v561 = vadd.f32 0.0, %v560
    %v562 = vpop.f32.mrf.mxu0
    %v563 = vpop.f32.mrf.mxu0
    %v564 = vadd.f32 0.0, %v563
    %v565 = vpop.f32.mrf.mxu0
    %566 = vmatprep.mubr.bf16.mxu0 0
    %567 = vmatmul.mubr.bf16.gmra.mxu0 %v481
    %v568 = vpop.f32.mrf.mxu0
    %v569 = vadd.f32 0.0, %v568
    %v570 = vpop.f32.mrf.mxu0
    %v571 = vpop.f32.mrf.mxu0
    %v572 = vadd.f32 0.0, %v571
    %v573 = vpop.f32.mrf.mxu0
    %574 = vmatprep.mubr.bf16.mxu0 0
    %575 = vmatmul.mubr.bf16.gmra.mxu0 %v484
    %v576 = vpop.f32.mrf.mxu0
    %v577 = vadd.f32 0.0, %v576
    %v578 = vpop.f32.mrf.mxu0
    %v579 = vpop.f32.mrf.mxu0
    %v580 = vadd.f32 0.0, %v579
    %v581 = vpop.f32.mrf.mxu0
    %582 = vdwg.mxu0
    %v583 = vld [vmem:[%s3] sm:$0xf]
    %v584 = vld [vmem:[%s3 + $0x4] sm:$0xf]
    %v585 = vld [vmem:[%s3 + $0x8] sm:$0xf]
    %v586 = vld [vmem:[%s3 + $0xc] sm:$0xf]
    %v587 = vld [vmem:[%s3 + $0x10] sm:$0xf]
    %v588 = vld [vmem:[%s3 + $0x14] sm:$0xf]
    %v589 = vld [vmem:[%s3 + $0x18] sm:$0xf]
    %v590 = vld [vmem:[%s3 + $0x1c] sm:$0xf]
    %v591 = vld [vmem:[%s3 + $0x20] sm:$0xf]
    %v592 = vld [vmem:[%s3 + $0x24] sm:$0xf]
    %v593 = vld [vmem:[%s3 + $0x28] sm:$0xf]
    %v594 = vld [vmem:[%s3 + $0x2c] sm:$0xf]
    %v595 = vld [vmem:[%s3 + $0x30] sm:$0xf]
    %v596 = vld [vmem:[%s3 + $0x34] sm:$0xf]
    %v597 = vld [vmem:[%s3 + $0x38] sm:$0xf]
    %v598 = vld [vmem:[%s3 + $0x3c] sm:$0xf]
    %v599 = vpack.c.bf16 %v170, %v167
    %v600 = vpack.c.bf16 %v178, %v175
    %v601 = vpack.c.bf16 %v186, %v183
    %v602 = vpack.c.bf16 %v194, %v191
    %v603 = vpack.c.bf16 %v202, %v199
    %v604 = vpack.c.bf16 %v210, %v207
    %v605 = vpack.c.bf16 %v218, %v215
    %v606 = vpack.c.bf16 %v226, %v223
    %v623 = vunpack.c.l.b16 %v583
    %v624 = vunpack.c.l.b16 %v584
    %v625 = vunpack.c.l.b16 %v585
    %v626 = vunpack.c.l.b16 %v586
    %v627 = vunpack.c.l.b16 %v587
    %v628 = vunpack.c.l.b16 %v588
    %v629 = vunpack.c.l.b16 %v589
    %v630 = vunpack.c.l.b16 %v590
    %v631 = vunpack.c.l.b16 %v591
    %v632 = vunpack.c.l.b16 %v592
    %v633 = vunpack.c.l.b16 %v593
    %v634 = vunpack.c.l.b16 %v594
    %v635 = vunpack.c.l.b16 %v595
    %v636 = vunpack.c.l.b16 %v596
    %v637 = vunpack.c.l.b16 %v597
    %v638 = vunpack.c.l.b16 %v598
    %v639 = vpack.c.b16 %v624, %v623
    %v640 = vpack.c.b16 %v626, %v625
    %v641 = vpack.c.b16 %v628, %v627
    %v642 = vpack.c.b16 %v630, %v629
    %v643 = vpack.c.b16 %v632, %v631
    %v644 = vpack.c.b16 %v634, %v633
    %v645 = vpack.c.b16 %v636, %v635
    %v646 = vpack.c.b16 %v638, %v637
    %655 = vmatprep.subr.bf16.mxu0 0
    %656 = vmatpush1.bf16.msra.mxu0 %v606
    %657 = vmatprep.subr.bf16.mxu0 0
    %658 = vmatpush1.bf16.msra.mxu0 %v605
    %659 = vmatprep.subr.bf16.mxu0 0
    %660 = vmatpush1.bf16.msra.mxu0 %v604
    %661 = vmatprep.subr.bf16.mxu0 0
    %662 = vmatpush1.bf16.msra.mxu0 %v603
    %663 = vmatprep.subr.bf16.mxu0 0
    %664 = vmatpush1.bf16.msra.mxu0 %v602
    %665 = vmatprep.subr.bf16.mxu0 0
    %666 = vmatpush1.bf16.msra.mxu0 %v601
    %667 = vmatprep.subr.bf16.mxu0 0
    %668 = vmatpush1.bf16.msra.mxu0 %v600
    %669 = vmatprep.subr.bf16.mxu0 0
    %670 = vmatpush1.bf16.msra.mxu0 %v599
    %671 = vmatprep.subr.bf16.mxu0 0
    %672 = vmatpush2.bf16.msra.mxu0 0
    %673 = vmatprep.subr.bf16.mxu0 0
    %674 = vmatpush2.bf16.msra.mxu0 0
    %675 = vmatprep.subr.bf16.mxu0 0
    %676 = vmatpush2.bf16.msra.mxu0 0
    %677 = vmatprep.subr.bf16.mxu0 0
    %678 = vmatpush2.bf16.msra.mxu0 0
    %679 = vmatprep.subr.bf16.mxu0 0
    %680 = vmatpush2.bf16.msra.mxu0 0
    %681 = vmatprep.subr.bf16.mxu0 0
    %682 = vmatpush2.bf16.msra.mxu0 0
    %683 = vmatprep.subr.bf16.mxu0 0
    %684 = vmatpush2.bf16.msra.mxu0 0
    %685 = vmatprep.subr.bf16.mxu0 0
    %686 = vmatpush2.bf16.msra.mxu0 0
    %687 = vmatprep.mubr.bf16.mxu0 0
    %688 = vmatmul.mubr.bf16.gmra.mxu0 %v639
    %v689 = vpop.f32.mrf.mxu0
    %v690 = vadd.f32 0.0, %v689
    %v691 = vpop.f32.mrf.mxu0
    %v692 = vpop.f32.mrf.mxu0
    %v693 = vadd.f32 0.0, %v692
    %v694 = vpop.f32.mrf.mxu0
    %695 = vmatprep.mubr.bf16.mxu0 0
    %696 = vmatmul.mubr.bf16.gmra.mxu0 %v640
    %v697 = vpop.f32.mrf.mxu0
    %v698 = vadd.f32 0.0, %v697
    %v699 = vpop.f32.mrf.mxu0
    %v700 = vpop.f32.mrf.mxu0
    %v701 = vadd.f32 0.0, %v700
    %v702 = vpop.f32.mrf.mxu0
    %703 = vmatprep.mubr.bf16.mxu0 0
    %704 = vmatmul.mubr.bf16.gmra.mxu0 %v641
    %v705 = vpop.f32.mrf.mxu0
    %v706 = vadd.f32 0.0, %v705
    %v707 = vpop.f32.mrf.mxu0
    %v708 = vpop.f32.mrf.mxu0
    %v709 = vadd.f32 0.0, %v708
    %v710 = vpop.f32.mrf.mxu0
    %711 = vmatprep.mubr.bf16.mxu0 0
    %712 = vmatmul.mubr.bf16.gmra.mxu0 %v642
    %v713 = vpop.f32.mrf.mxu0
    %v714 = vadd.f32 0.0, %v713
    %v715 = vpop.f32.mrf.mxu0
    %v716 = vpop.f32.mrf.mxu0
    %v717 = vadd.f32 0.0, %v716
    %v718 = vpop.f32.mrf.mxu0
    %719 = vmatprep.mubr.bf16.mxu0 0
    %720 = vmatmul.mubr.bf16.gmra.mxu0 %v643
    %v721 = vpop.f32.mrf.mxu0
    %v722 = vadd.f32 0.0, %v721
    %v723 = vpop.f32.mrf.mxu0
    %v724 = vpop.f32.mrf.mxu0
    %v725 = vadd.f32 0.0, %v724
    %v726 = vpop.f32.mrf.mxu0
    %727 = vmatprep.mubr.bf16.mxu0 0
    %728 = vmatmul.mubr.bf16.gmra.mxu0 %v644
    %v729 = vpop.f32.mrf.mxu0
    %v730 = vadd.f32 0.0, %v729
    %v731 = vpop.f32.mrf.mxu0
    %v732 = vpop.f32.mrf.mxu0
    %v733 = vadd.f32 0.0, %v732
    %v734 = vpop.f32.mrf.mxu0
    %735 = vmatprep.mubr.bf16.mxu0 0
    %736 = vmatmul.mubr.bf16.gmra.mxu0 %v645
    %v737 = vpop.f32.mrf.mxu0
    %v738 = vadd.f32 0.0, %v737
    %v739 = vpop.f32.mrf.mxu0
    %v740 = vpop.f32.mrf.mxu0
    %v741 = vadd.f32 0.0, %v740
    %v742 = vpop.f32.mrf.mxu0
    %743 = vmatprep.mubr.bf16.mxu0 0
    %744 = vmatmul.mubr.bf16.gmra.mxu0 %v646
    %v745 = vpop.f32.mrf.mxu0
    %v746 = vadd.f32 0.0, %v745
    %v747 = vpop.f32.mrf.mxu0
    %v748 = vpop.f32.mrf.mxu0
    %v749 = vadd.f32 0.0, %v748
    %v750 = vpop.f32.mrf.mxu0
    %751 = vdwg.mxu0
    %v752 = vld [vmem:[%s4] sm:$0xf]
    %v753 = vld [vmem:[%s4 + $0x4] sm:$0xf]
    %v754 = vld [vmem:[%s4 + $0x8] sm:$0xf]
    %v755 = vld [vmem:[%s4 + $0xc] sm:$0xf]
    %v756 = vld [vmem:[%s4 + $0x10] sm:$0xf]
    %v757 = vld [vmem:[%s4 + $0x14] sm:$0xf]
    %v758 = vld [vmem:[%s4 + $0x18] sm:$0xf]
    %v759 = vld [vmem:[%s4 + $0x1c] sm:$0xf]
    %v760 = vld [vmem:[%s4 + $0x20] sm:$0xf]
    %v761 = vld [vmem:[%s4 + $0x24] sm:$0xf]
    %v762 = vld [vmem:[%s4 + $0x28] sm:$0xf]
    %v763 = vld [vmem:[%s4 + $0x2c] sm:$0xf]
    %v764 = vld [vmem:[%s4 + $0x30] sm:$0xf]
    %v765 = vld [vmem:[%s4 + $0x34] sm:$0xf]
    %v766 = vld [vmem:[%s4 + $0x38] sm:$0xf]
    %v767 = vld [vmem:[%s4 + $0x3c] sm:$0xf]
    %v768 = vpack.c.bf16 %v347, %v344
    %v769 = vpack.c.bf16 %v355, %v352
    %v770 = vpack.c.bf16 %v363, %v360
    %v771 = vpack.c.bf16 %v371, %v368
    %v772 = vpack.c.bf16 %v379, %v376
    %v773 = vpack.c.bf16 %v387, %v384
    %v774 = vpack.c.bf16 %v395, %v392
    %v775 = vpack.c.bf16 %v403, %v400
    %v792 = vunpack.c.l.b16 %v752
    %v793 = vunpack.c.l.b16 %v753
    %v794 = vunpack.c.l.b16 %v754
    %v795 = vunpack.c.l.b16 %v755
    %v796 = vunpack.c.l.b16 %v756
    %v797 = vunpack.c.l.b16 %v757
    %v798 = vunpack.c.l.b16 %v758
    %v799 = vunpack.c.l.b16 %v759
    %v800 = vunpack.c.l.b16 %v760
    %v801 = vunpack.c.l.b16 %v761
    %v802 = vunpack.c.l.b16 %v762
    %v803 = vunpack.c.l.b16 %v763
    %v804 = vunpack.c.l.b16 %v764
    %v805 = vunpack.c.l.b16 %v765
    %v806 = vunpack.c.l.b16 %v766
    %v807 = vunpack.c.l.b16 %v767
    %v808 = vpack.c.b16 %v793, %v792
    %v809 = vpack.c.b16 %v795, %v794
    %v810 = vpack.c.b16 %v797, %v796
    %v811 = vpack.c.b16 %v799, %v798
    %v812 = vpack.c.b16 %v801, %v800
    %v813 = vpack.c.b16 %v803, %v802
    %v814 = vpack.c.b16 %v805, %v804
    %v815 = vpack.c.b16 %v807, %v806
    %824 = vmatprep.subr.bf16.mxu0 0
    %825 = vmatpush1.bf16.msra.mxu0 %v775
    %826 = vmatprep.subr.bf16.mxu0 0
    %827 = vmatpush1.bf16.msra.mxu0 %v774
    %828 = vmatprep.subr.bf16.mxu0 0
    %829 = vmatpush1.bf16.msra.mxu0 %v773
    %830 = vmatprep.subr.bf16.mxu0 0
    %831 = vmatpush1.bf16.msra.mxu0 %v772
    %832 = vmatprep.subr.bf16.mxu0 0
    %833 = vmatpush1.bf16.msra.mxu0 %v771
    %834 = vmatprep.subr.bf16.mxu0 0
    %835 = vmatpush1.bf16.msra.mxu0 %v770
    %836 = vmatprep.subr.bf16.mxu0 0
    %837 = vmatpush1.bf16.msra.mxu0 %v769
    %838 = vmatprep.subr.bf16.mxu0 0
    %839 = vmatpush1.bf16.msra.mxu0 %v768
    %840 = vmatprep.subr.bf16.mxu0 0
    %841 = vmatpush2.bf16.msra.mxu0 0
    %842 = vmatprep.subr.bf16.mxu0 0
    %843 = vmatpush2.bf16.msra.mxu0 0
    %844 = vmatprep.subr.bf16.mxu0 0
    %845 = vmatpush2.bf16.msra.mxu0 0
    %846 = vmatprep.subr.bf16.mxu0 0
    %847 = vmatpush2.bf16.msra.mxu0 0
    %848 = vmatprep.subr.bf16.mxu0 0
    %849 = vmatpush2.bf16.msra.mxu0 0
    %850 = vmatprep.subr.bf16.mxu0 0
    %851 = vmatpush2.bf16.msra.mxu0 0
    %852 = vmatprep.subr.bf16.mxu0 0
    %853 = vmatpush2.bf16.msra.mxu0 0
    %854 = vmatprep.subr.bf16.mxu0 0
    %855 = vmatpush2.bf16.msra.mxu0 0
    %856 = vmatprep.mubr.bf16.mxu0 0
    %857 = vmatmul.mubr.bf16.gmra.mxu0 %v808
    %v858 = vpop.f32.mrf.mxu0
    %v859 = vadd.f32 0.0, %v858
    %v860 = vpop.f32.mrf.mxu0
    %v861 = vpop.f32.mrf.mxu0
    %v862 = vadd.f32 0.0, %v861
    %v863 = vpop.f32.mrf.mxu0
    %864 = vmatprep.mubr.bf16.mxu0 0
    %865 = vmatmul.mubr.bf16.gmra.mxu0 %v809
    %v866 = vpop.f32.mrf.mxu0
    %v867 = vadd.f32 0.0, %v866
    %v868 = vpop.f32.mrf.mxu0
    %v869 = vpop.f32.mrf.mxu0
    %v870 = vadd.f32 0.0, %v869
    %v871 = vpop.f32.mrf.mxu0
    %872 = vmatprep.mubr.bf16.mxu0 0
    %873 = vmatmul.mubr.bf16.gmra.mxu0 %v810
    %v874 = vpop.f32.mrf.mxu0
    %v875 = vadd.f32 0.0, %v874
    %v876 = vpop.f32.mrf.mxu0
    %v877 = vpop.f32.mrf.mxu0
    %v878 = vadd.f32 0.0, %v877
    %v879 = vpop.f32.mrf.mxu0
    %880 = vmatprep.mubr.bf16.mxu0 0
    %881 = vmatmul.mubr.bf16.gmra.mxu0 %v811
    %v882 = vpop.f32.mrf.mxu0
    %v883 = vadd.f32 0.0, %v882
    %v884 = vpop.f32.mrf.mxu0
    %v885 = vpop.f32.mrf.mxu0
    %v886 = vadd.f32 0.0, %v885
    %v887 = vpop.f32.mrf.mxu0
    %888 = vmatprep.mubr.bf16.mxu0 0
    %889 = vmatmul.mubr.bf16.gmra.mxu0 %v812
    %v890 = vpop.f32.mrf.mxu0
    %v891 = vadd.f32 0.0, %v890
    %v892 = vpop.f32.mrf.mxu0
    %v893 = vpop.f32.mrf.mxu0
    %v894 = vadd.f32 0.0, %v893
    %v895 = vpop.f32.mrf.mxu0
    %896 = vmatprep.mubr.bf16.mxu0 0
    %897 = vmatmul.mubr.bf16.gmra.mxu0 %v813
    %v898 = vpop.f32.mrf.mxu0
    %v899 = vadd.f32 0.0, %v898
    %v900 = vpop.f32.mrf.mxu0
    %v901 = vpop.f32.mrf.mxu0
    %v902 = vadd.f32 0.0, %v901
    %v903 = vpop.f32.mrf.mxu0
    %904 = vmatprep.mubr.bf16.mxu0 0
    %905 = vmatmul.mubr.bf16.gmra.mxu0 %v814
    %v906 = vpop.f32.mrf.mxu0
    %v907 = vadd.f32 0.0, %v906
    %v908 = vpop.f32.mrf.mxu0
    %v909 = vpop.f32.mrf.mxu0
    %v910 = vadd.f32 0.0, %v909
    %v911 = vpop.f32.mrf.mxu0
    %912 = vmatprep.mubr.bf16.mxu0 0
    %913 = vmatmul.mubr.bf16.gmra.mxu0 %v815
    %v914 = vpop.f32.mrf.mxu0
    %v915 = vadd.f32 0.0, %v914
    %v916 = vpop.f32.mrf.mxu0
    %v917 = vpop.f32.mrf.mxu0
    %v918 = vadd.f32 0.0, %v917
    %v919 = vpop.f32.mrf.mxu0
    %920 = vdwg.mxu0
    %v921 = vpack.c.bf16 %v524, %v521
    %v922 = vpack.c.bf16 %v532, %v529
    %v923 = vpack.c.bf16 %v540, %v537
    %v924 = vpack.c.bf16 %v548, %v545
    %v925 = vpack.c.bf16 %v556, %v553
    %v926 = vpack.c.bf16 %v564, %v561
    %v927 = vpack.c.bf16 %v572, %v569
    %v928 = vpack.c.bf16 %v580, %v577
    %929 = vmatprep.subr.bf16.mxu0 0
    %930 = vmatpush1.bf16.msra.mxu0 %v928
    %931 = vmatprep.subr.bf16.mxu0 0
    %932 = vmatpush1.bf16.msra.mxu0 %v927
    %933 = vmatprep.subr.bf16.mxu0 0
    %934 = vmatpush1.bf16.msra.mxu0 %v926
    %935 = vmatprep.subr.bf16.mxu0 0
    %936 = vmatpush1.bf16.msra.mxu0 %v925
    %937 = vmatprep.subr.bf16.mxu0 0
    %938 = vmatpush1.bf16.msra.mxu0 %v924
    %939 = vmatprep.subr.bf16.mxu0 0
    %940 = vmatpush1.bf16.msra.mxu0 %v923
    %941 = vmatprep.subr.bf16.mxu0 0
    %942 = vmatpush1.bf16.msra.mxu0 %v922
    %943 = vmatprep.subr.bf16.mxu0 0
    %944 = vmatpush1.bf16.msra.mxu0 %v921
    %945 = vmatprep.subr.bf16.mxu0 0
    %946 = vmatpush2.bf16.msra.mxu0 0
    %947 = vmatprep.subr.bf16.mxu0 0
    %948 = vmatpush2.bf16.msra.mxu0 0
    %949 = vmatprep.subr.bf16.mxu0 0
    %950 = vmatpush2.bf16.msra.mxu0 0
    %951 = vmatprep.subr.bf16.mxu0 0
    %952 = vmatpush2.bf16.msra.mxu0 0
    %953 = vmatprep.subr.bf16.mxu0 0
    %954 = vmatpush2.bf16.msra.mxu0 0
    %955 = vmatprep.subr.bf16.mxu0 0
    %956 = vmatpush2.bf16.msra.mxu0 0
    %957 = vmatprep.subr.bf16.mxu0 0
    %958 = vmatpush2.bf16.msra.mxu0 0
    %959 = vmatprep.subr.bf16.mxu0 0
    %960 = vmatpush2.bf16.msra.mxu0 0
    %961 = vmatprep.mubr.bf16.mxu0 0
    %962 = vmatmul.mubr.bf16.gmra.mxu0 %v808
    %v963 = vpop.f32.mrf.mxu0
    %v964 = vadd.f32 0.0, %v963
    %v965 = vpop.f32.mrf.mxu0
    %v966 = vpop.f32.mrf.mxu0
    %v967 = vadd.f32 0.0, %v966
    %v968 = vpop.f32.mrf.mxu0
    %969 = vmatprep.mubr.bf16.mxu0 0
    %970 = vmatmul.mubr.bf16.gmra.mxu0 %v809
    %v971 = vpop.f32.mrf.mxu0
    %v972 = vadd.f32 0.0, %v971
    %v973 = vpop.f32.mrf.mxu0
    %v974 = vpop.f32.mrf.mxu0
    %v975 = vadd.f32 0.0, %v974
    %v976 = vpop.f32.mrf.mxu0
    %977 = vmatprep.mubr.bf16.mxu0 0
    %978 = vmatmul.mubr.bf16.gmra.mxu0 %v810
    %v979 = vpop.f32.mrf.mxu0
    %v980 = vadd.f32 0.0, %v979
    %v981 = vpop.f32.mrf.mxu0
    %v982 = vpop.f32.mrf.mxu0
    %v983 = vadd.f32 0.0, %v982
    %v984 = vpop.f32.mrf.mxu0
    %985 = vmatprep.mubr.bf16.mxu0 0
    %986 = vmatmul.mubr.bf16.gmra.mxu0 %v811
    %v987 = vpop.f32.mrf.mxu0
    %v988 = vadd.f32 0.0, %v987
    %v989 = vpop.f32.mrf.mxu0
    %v990 = vpop.f32.mrf.mxu0
    %v991 = vadd.f32 0.0, %v990
    %v992 = vpop.f32.mrf.mxu0
    %993 = vmatprep.mubr.bf16.mxu0 0
    %994 = vmatmul.mubr.bf16.gmra.mxu0 %v812
    %v995 = vpop.f32.mrf.mxu0
    %v996 = vadd.f32 0.0, %v995
    %v997 = vpop.f32.mrf.mxu0
    %v998 = vpop.f32.mrf.mxu0
    %v999 = vadd.f32 0.0, %v998
    %v1000 = vpop.f32.mrf.mxu0
    %1001 = vmatprep.mubr.bf16.mxu0 0
    %1002 = vmatmul.mubr.bf16.gmra.mxu0 %v813
    %v1003 = vpop.f32.mrf.mxu0
    %v1004 = vadd.f32 0.0, %v1003
    %v1005 = vpop.f32.mrf.mxu0
    %v1006 = vpop.f32.mrf.mxu0
    %v1007 = vadd.f32 0.0, %v1006
    %v1008 = vpop.f32.mrf.mxu0
    %1009 = vmatprep.mubr.bf16.mxu0 0
    %1010 = vmatmul.mubr.bf16.gmra.mxu0 %v814
    %v1011 = vpop.f32.mrf.mxu0
    %v1012 = vadd.f32 0.0, %v1011
    %v1013 = vpop.f32.mrf.mxu0
    %v1014 = vpop.f32.mrf.mxu0
    %v1015 = vadd.f32 0.0, %v1014
    %v1016 = vpop.f32.mrf.mxu0
    %1017 = vmatprep.mubr.bf16.mxu0 0
    %1018 = vmatmul.mubr.bf16.gmra.mxu0 %v815
    %v1019 = vpop.f32.mrf.mxu0
    %v1020 = vadd.f32 0.0, %v1019
    %v1021 = vpop.f32.mrf.mxu0
    %v1022 = vpop.f32.mrf.mxu0
    %v1023 = vadd.f32 0.0, %v1022
    %v1024 = vpop.f32.mrf.mxu0
    %1025 = vdwg.mxu0
    %v1026 = vpack.c.bf16 %v690, %v690
    %v1027 = vpack.c.bf16 %v693, %v693
    %v1028 = vpack.c.bf16 %v698, %v698
    %v1029 = vpack.c.bf16 %v701, %v701
    %v1030 = vpack.c.bf16 %v706, %v706
    %v1031 = vpack.c.bf16 %v709, %v709
    %v1032 = vpack.c.bf16 %v714, %v714
    %v1033 = vpack.c.bf16 %v717, %v717
    %v1034 = vpack.c.bf16 %v722, %v722
    %v1035 = vpack.c.bf16 %v725, %v725
    %v1036 = vpack.c.bf16 %v730, %v730
    %v1037 = vpack.c.bf16 %v733, %v733
    %v1038 = vpack.c.bf16 %v738, %v738
    %v1039 = vpack.c.bf16 %v741, %v741
    %v1040 = vpack.c.bf16 %v746, %v746
    %v1041 = vpack.c.bf16 %v749, %v749
    %v1042 = vpack.c.bf16 %v859, %v859
    %v1043 = vpack.c.bf16 %v862, %v862
    %v1044 = vpack.c.bf16 %v867, %v867
    %v1045 = vpack.c.bf16 %v870, %v870
    %v1046 = vpack.c.bf16 %v875, %v875
    %v1047 = vpack.c.bf16 %v878, %v878
    %v1048 = vpack.c.bf16 %v883, %v883
    %v1049 = vpack.c.bf16 %v886, %v886
    %v1050 = vpack.c.bf16 %v891, %v891
    %v1051 = vpack.c.bf16 %v894, %v894
    %v1052 = vpack.c.bf16 %v899, %v899
    %v1053 = vpack.c.bf16 %v902, %v902
    %v1054 = vpack.c.bf16 %v907, %v907
    %v1055 = vpack.c.bf16 %v910, %v910
    %v1056 = vpack.c.bf16 %v915, %v915
    %v1057 = vpack.c.bf16 %v918, %v918
    %v1058 = vpack.c.bf16 %v964, %v964
    %v1059 = vpack.c.bf16 %v967, %v967
    %v1060 = vpack.c.bf16 %v972, %v972
    %v1061 = vpack.c.bf16 %v975, %v975
    %v1062 = vpack.c.bf16 %v980, %v980
    %v1063 = vpack.c.bf16 %v983, %v983
    %v1064 = vpack.c.bf16 %v988, %v988
    %v1065 = vpack.c.bf16 %v991, %v991
    %v1066 = vpack.c.bf16 %v996, %v996
    %v1067 = vpack.c.bf16 %v999, %v999
    %v1068 = vpack.c.bf16 %v1004, %v1004
    %v1069 = vpack.c.bf16 %v1007, %v1007
    %v1070 = vpack.c.bf16 %v1012, %v1012
    %v1071 = vpack.c.bf16 %v1015, %v1015
    %v1072 = vpack.c.bf16 %v1020, %v1020
    %v1073 = vpack.c.bf16 %v1023, %v1023
    %v1075 = vsel %vm107, %v1026, 0
    %v1078 = vsel %vm107, %v1042, 0
    %1080 = vmatprep.subr.bf16.mxu0 0
    %1081 = vmatpush1.bf16.xpose.msra.mxu0 0
    %1082 = vmatprep.subr.bf16.mxu0 0
    %1083 = vmatpush1.bf16.xpose.msra.mxu0 0
    %1084 = vmatprep.subr.bf16.mxu0 0
    %1085 = vmatpush1.bf16.xpose.msra.mxu0 0
    %1086 = vmatprep.subr.bf16.mxu0 0
    %1087 = vmatpush1.bf16.xpose.msra.mxu0 0
    %1088 = vmatprep.subr.bf16.mxu0 0
    %1089 = vmatpush1.bf16.xpose.msra.mxu0 0
    %1090 = vmatprep.subr.bf16.mxu0 0
    %1091 = vmatpush1.bf16.xpose.msra.mxu0 0
    %1092 = vmatprep.subr.bf16.mxu0 0
    %1093 = vmatpush1.bf16.xpose.msra.mxu0 0
    %1094 = vmatprep.subr.bf16.mxu0 0
    %1095 = vmatpush1.bf16.xpose.msra.mxu0 %v1078
    %1096 = vmatprep.subr.bf16.mxu0 0
    %1097 = vmatpush2.bf16.xpose.msra.mxu0 0
    %1098 = vmatprep.subr.bf16.mxu0 0
    %1099 = vmatpush2.bf16.xpose.msra.mxu0 0
    %1100 = vmatprep.subr.bf16.mxu0 0
    %1101 = vmatpush2.bf16.xpose.msra.mxu0 0
    %1102 = vmatprep.subr.bf16.mxu0 0
    %1103 = vmatpush2.bf16.xpose.msra.mxu0 0
    %1104 = vmatprep.subr.bf16.mxu0 0
    %1105 = vmatpush2.bf16.xpose.msra.mxu0 0
    %1106 = vmatprep.subr.bf16.mxu0 0
    %1107 = vmatpush2.bf16.xpose.msra.mxu0 0
    %1108 = vmatprep.subr.bf16.mxu0 0
    %1109 = vmatpush2.bf16.xpose.msra.mxu0 0
    %1110 = vmatprep.subr.bf16.mxu0 0
    %1111 = vmatpush2.bf16.xpose.msra.mxu0 0
    %1112 = vmatprep.mubr.bf16.mxu0 0
    %1113 = vmatmul.mubr.bf16.gmra.mxu0 %v1075
    %v1114 = vpop.f32.mrf.mxu0
    %v1115 = vadd.f32 0.0, %v1114
    %v1116 = vpop.f32.mrf.mxu0
    %v1117 = vpop.f32.mrf.mxu0
    %v1118 = vpop.f32.mrf.mxu0
    %1119 = vdwg.mxu0
    %v1121 = vsel %vm107, %v1027, 0
    %v1124 = vsel %vm107, %v1043, 0
    %1126 = vmatprep.subr.bf16.mxu0 0
    %1127 = vmatpush1.bf16.xpose.msra.mxu0 0
    %1128 = vmatprep.subr.bf16.mxu0 0
    %1129 = vmatpush1.bf16.xpose.msra.mxu0 0
    %1130 = vmatprep.subr.bf16.mxu0 0
    %1131 = vmatpush1.bf16.xpose.msra.mxu0 0
    %1132 = vmatprep.subr.bf16.mxu0 0
    %1133 = vmatpush1.bf16.xpose.msra.mxu0 0
    %1134 = vmatprep.subr.bf16.mxu0 0
    %1135 = vmatpush1.bf16.xpose.msra.mxu0 0
    %1136 = vmatprep.subr.bf16.mxu0 0
    %1137 = vmatpush1.bf16.xpose.msra.mxu0 0
    %1138 = vmatprep.subr.bf16.mxu0 0
    %1139 = vmatpush1.bf16.xpose.msra.mxu0 0
    %1140 = vmatprep.subr.bf16.mxu0 0
    %1141 = vmatpush1.bf16.xpose.msra.mxu0 %v1124
    %1142 = vmatprep.subr.bf16.mxu0 0
    %1143 = vmatpush2.bf16.xpose.msra.mxu0 0
    %1144 = vmatprep.subr.bf16.mxu0 0
    %1145 = vmatpush2.bf16.xpose.msra.mxu0 0
    %1146 = vmatprep.subr.bf16.mxu0 0
    %1147 = vmatpush2.bf16.xpose.msra.mxu0 0
    %1148 = vmatprep.subr.bf16.mxu0 0
    %1149 = vmatpush2.bf16.xpose.msra.mxu0 0
    %1150 = vmatprep.subr.bf16.mxu0 0
    %1151 = vmatpush2.bf16.xpose.msra.mxu0 0
    %1152 = vmatprep.subr.bf16.mxu0 0
    %1153 = vmatpush2.bf16.xpose.msra.mxu0 0
    %1154 = vmatprep.subr.bf16.mxu0 0
    %1155 = vmatpush2.bf16.xpose.msra.mxu0 0
    %1156 = vmatprep.subr.bf16.mxu0 0
    %1157 = vmatpush2.bf16.xpose.msra.mxu0 0
    %1158 = vmatprep.mubr.bf16.mxu0 0
    %1159 = vmatmul.mubr.bf16.gmra.mxu0 %v1121
    %v1160 = vpop.f32.mrf.mxu0
    %v1161 = vadd.f32 0.0, %v1160
    %v1162 = vpop.f32.mrf.mxu0
    %v1163 = vpop.f32.mrf.mxu0
    %v1164 = vpop.f32.mrf.mxu0
    %1165 = vdwg.mxu0
    %v1167 = vsel %vm107, %v1028, 0
    %v1170 = vsel %vm107, %v1044, 0
    %1172 = vmatprep.subr.bf16.mxu0 0
    %1173 = vmatpush1.bf16.xpose.msra.mxu0 0
    %1174 = vmatprep.subr.bf16.mxu0 0
    %1175 = vmatpush1.bf16.xpose.msra.mxu0 0
    %1176 = vmatprep.subr.bf16.mxu0 0
    %1177 = vmatpush1.bf16.xpose.msra.mxu0 0
    %1178 = vmatprep.subr.bf16.mxu0 0
    %1179 = vmatpush1.bf16.xpose.msra.mxu0 0
    %1180 = vmatprep.subr.bf16.mxu0 0
    %1181 = vmatpush1.bf16.xpose.msra.mxu0 0
    %1182 = vmatprep.subr.bf16.mxu0 0
    %1183 = vmatpush1.bf16.xpose.msra.mxu0 0
    %1184 = vmatprep.subr.bf16.mxu0 0
    %1185 = vmatpush1.bf16.xpose.msra.mxu0 0
    %1186 = vmatprep.subr.bf16.mxu0 0
    %1187 = vmatpush1.bf16.xpose.msra.mxu0 %v1170
    %1188 = vmatprep.subr.bf16.mxu0 0
    %1189 = vmatpush2.bf16.xpose.msra.mxu0 0
    %1190 = vmatprep.subr.bf16.mxu0 0
    %1191 = vmatpush2.bf16.xpose.msra.mxu0 0
    %1192 = vmatprep.subr.bf16.mxu0 0
    %1193 = vmatpush2.bf16.xpose.msra.mxu0 0
    %1194 = vmatprep.subr.bf16.mxu0 0
    %1195 = vmatpush2.bf16.xpose.msra.mxu0 0
    %1196 = vmatprep.subr.bf16.mxu0 0
    %1197 = vmatpush2.bf16.xpose.msra.mxu0 0
    %1198 = vmatprep.subr.bf16.mxu0 0
    %1199 = vmatpush2.bf16.xpose.msra.mxu0 0
    %1200 = vmatprep.subr.bf16.mxu0 0
    %1201 = vmatpush2.bf16.xpose.msra.mxu0 0
    %1202 = vmatprep.subr.bf16.mxu0 0
    %1203 = vmatpush2.bf16.xpose.msra.mxu0 0
    %1204 = vmatprep.mubr.bf16.mxu0 0
    %1205 = vmatmul.mubr.bf16.gmra.mxu0 %v1167
    %v1206 = vpop.f32.mrf.mxu0
    %v1207 = vadd.f32 0.0, %v1206
    %v1208 = vpop.f32.mrf.mxu0
    %v1209 = vpop.f32.mrf.mxu0
    %v1210 = vpop.f32.mrf.mxu0
    %1211 = vdwg.mxu0
    %v1213 = vsel %vm107, %v1029, 0
    %v1216 = vsel %vm107, %v1045, 0
    %1218 = vmatprep.subr.bf16.mxu0 0
    %1219 = vmatpush1.bf16.xpose.msra.mxu0 0
    %1220 = vmatprep.subr.bf16.mxu0 0
    %1221 = vmatpush1.bf16.xpose.msra.mxu0 0
    %1222 = vmatprep.subr.bf16.mxu0 0
    %1223 = vmatpush1.bf16.xpose.msra.mxu0 0
    %1224 = vmatprep.subr.bf16.mxu0 0
    %1225 = vmatpush1.bf16.xpose.msra.mxu0 0
    %1226 = vmatprep.subr.bf16.mxu0 0
    %1227 = vmatpush1.bf16.xpose.msra.mxu0 0
    %1228 = vmatprep.subr.bf16.mxu0 0
    %1229 = vmatpush1.bf16.xpose.msra.mxu0 0
    %1230 = vmatprep.subr.bf16.mxu0 0
    %1231 = vmatpush1.bf16.xpose.msra.mxu0 0
    %1232 = vmatprep.subr.bf16.mxu0 0
    %1233 = vmatpush1.bf16.xpose.msra.mxu0 %v1216
    %1234 = vmatprep.subr.bf16.mxu0 0
    %1235 = vmatpush2.bf16.xpose.msra.mxu0 0
    %1236 = vmatprep.subr.bf16.mxu0 0
    %1237 = vmatpush2.bf16.xpose.msra.mxu0 0
    %1238 = vmatprep.subr.bf16.mxu0 0
    %1239 = vmatpush2.bf16.xpose.msra.mxu0 0
    %1240 = vmatprep.subr.bf16.mxu0 0
    %1241 = vmatpush2.bf16.xpose.msra.mxu0 0
    %1242 = vmatprep.subr.bf16.mxu0 0
    %1243 = vmatpush2.bf16.xpose.msra.mxu0 0
    %1244 = vmatprep.subr.bf16.mxu0 0
    %1245 = vmatpush2.bf16.xpose.msra.mxu0 0
    %1246 = vmatprep.subr.bf16.mxu0 0
    %1247 = vmatpush2.bf16.xpose.msra.mxu0 0
    %1248 = vmatprep.subr.bf16.mxu0 0
    %1249 = vmatpush2.bf16.xpose.msra.mxu0 0
    %1250 = vmatprep.mubr.bf16.mxu0 0
    %1251 = vmatmul.mubr.bf16.gmra.mxu0 %v1213
    %v1252 = vpop.f32.mrf.mxu0
    %v1253 = vadd.f32 0.0, %v1252
    %v1254 = vpop.f32.mrf.mxu0
    %v1255 = vpop.f32.mrf.mxu0
    %v1256 = vpop.f32.mrf.mxu0
    %1257 = vdwg.mxu0
    %v1259 = vsel %vm107, %v1030, 0
    %v1262 = vsel %vm107, %v1046, 0
    %1264 = vmatprep.subr.bf16.mxu0 0
    %1265 = vmatpush1.bf16.xpose.msra.mxu0 0
    %1266 = vmatprep.subr.bf16.mxu0 0
    %1267 = vmatpush1.bf16.xpose.msra.mxu0 0
    %1268 = vmatprep.subr.bf16.mxu0 0
    %1269 = vmatpush1.bf16.xpose.msra.mxu0 0
    %1270 = vmatprep.subr.bf16.mxu0 0
    %1271 = vmatpush1.bf16.xpose.msra.mxu0 0
    %1272 = vmatprep.subr.bf16.mxu0 0
    %1273 = vmatpush1.bf16.xpose.msra.mxu0 0
    %1274 = vmatprep.subr.bf16.mxu0 0
    %1275 = vmatpush1.bf16.xpose.msra.mxu0 0
    %1276 = vmatprep.subr.bf16.mxu0 0
    %1277 = vmatpush1.bf16.xpose.msra.mxu0 0
    %1278 = vmatprep.subr.bf16.mxu0 0
    %1279 = vmatpush1.bf16.xpose.msra.mxu0 %v1262
    %1280 = vmatprep.subr.bf16.mxu0 0
    %1281 = vmatpush2.bf16.xpose.msra.mxu0 0
    %1282 = vmatprep.subr.bf16.mxu0 0
    %1283 = vmatpush2.bf16.xpose.msra.mxu0 0
    %1284 = vmatprep.subr.bf16.mxu0 0
    %1285 = vmatpush2.bf16.xpose.msra.mxu0 0
    %1286 = vmatprep.subr.bf16.mxu0 0
    %1287 = vmatpush2.bf16.xpose.msra.mxu0 0
    %1288 = vmatprep.subr.bf16.mxu0 0
    %1289 = vmatpush2.bf16.xpose.msra.mxu0 0
    %1290 = vmatprep.subr.bf16.mxu0 0
    %1291 = vmatpush2.bf16.xpose.msra.mxu0 0
    %1292 = vmatprep.subr.bf16.mxu0 0
    %1293 = vmatpush2.bf16.xpose.msra.mxu0 0
    %1294 = vmatprep.subr.bf16.mxu0 0
    %1295 = vmatpush2.bf16.xpose.msra.mxu0 0
    %1296 = vmatprep.mubr.bf16.mxu0 0
    %1297 = vmatmul.mubr.bf16.gmra.mxu0 %v1259
    %v1298 = vpop.f32.mrf.mxu0
    %v1299 = vadd.f32 0.0, %v1298
    %v1300 = vpop.f32.mrf.mxu0
    %v1301 = vpop.f32.mrf.mxu0
    %v1302 = vpop.f32.mrf.mxu0
    %1303 = vdwg.mxu0
    %v1305 = vsel %vm107, %v1031, 0
    %v1308 = vsel %vm107, %v1047, 0
    %1310 = vmatprep.subr.bf16.mxu0 0
    %1311 = vmatpush1.bf16.xpose.msra.mxu0 0
    %1312 = vmatprep.subr.bf16.mxu0 0
    %1313 = vmatpush1.bf16.xpose.msra.mxu0 0
    %1314 = vmatprep.subr.bf16.mxu0 0
    %1315 = vmatpush1.bf16.xpose.msra.mxu0 0
    %1316 = vmatprep.subr.bf16.mxu0 0
    %1317 = vmatpush1.bf16.xpose.msra.mxu0 0
    %1318 = vmatprep.subr.bf16.mxu0 0
    %1319 = vmatpush1.bf16.xpose.msra.mxu0 0
    %1320 = vmatprep.subr.bf16.mxu0 0
    %1321 = vmatpush1.bf16.xpose.msra.mxu0 0
    %1322 = vmatprep.subr.bf16.mxu0 0
    %1323 = vmatpush1.bf16.xpose.msra.mxu0 0
    %1324 = vmatprep.subr.bf16.mxu0 0
    %1325 = vmatpush1.bf16.xpose.msra.mxu0 %v1308
    %1326 = vmatprep.subr.bf16.mxu0 0
    %1327 = vmatpush2.bf16.xpose.msra.mxu0 0
    %1328 = vmatprep.subr.bf16.mxu0 0
    %1329 = vmatpush2.bf16.xpose.msra.mxu0 0
    %1330 = vmatprep.subr.bf16.mxu0 0
    %1331 = vmatpush2.bf16.xpose.msra.mxu0 0
    %1332 = vmatprep.subr.bf16.mxu0 0
    %1333 = vmatpush2.bf16.xpose.msra.mxu0 0
    %1334 = vmatprep.subr.bf16.mxu0 0
    %1335 = vmatpush2.bf16.xpose.msra.mxu0 0
    %1336 = vmatprep.subr.bf16.mxu0 0
    %1337 = vmatpush2.bf16.xpose.msra.mxu0 0
    %1338 = vmatprep.subr.bf16.mxu0 0
    %1339 = vmatpush2.bf16.xpose.msra.mxu0 0
    %1340 = vmatprep.subr.bf16.mxu0 0
    %1341 = vmatpush2.bf16.xpose.msra.mxu0 0
    %1342 = vmatprep.mubr.bf16.mxu0 0
    %1343 = vmatmul.mubr.bf16.gmra.mxu0 %v1305
    %v1344 = vpop.f32.mrf.mxu0
    %v1345 = vadd.f32 0.0, %v1344
    %v1346 = vpop.f32.mrf.mxu0
    %v1347 = vpop.f32.mrf.mxu0
    %v1348 = vpop.f32.mrf.mxu0
    %1349 = vdwg.mxu0
    %v1351 = vsel %vm107, %v1032, 0
    %v1354 = vsel %vm107, %v1048, 0
    %1356 = vmatprep.subr.bf16.mxu0 0
    %1357 = vmatpush1.bf16.xpose.msra.mxu0 0
    %1358 = vmatprep.subr.bf16.mxu0 0
    %1359 = vmatpush1.bf16.xpose.msra.mxu0 0
    %1360 = vmatprep.subr.bf16.mxu0 0
    %1361 = vmatpush1.bf16.xpose.msra.mxu0 0
    %1362 = vmatprep.subr.bf16.mxu0 0
    %1363 = vmatpush1.bf16.xpose.msra.mxu0 0
    %1364 = vmatprep.subr.bf16.mxu0 0
    %1365 = vmatpush1.bf16.xpose.msra.mxu0 0
    %1366 = vmatprep.subr.bf16.mxu0 0
    %1367 = vmatpush1.bf16.xpose.msra.mxu0 0
    %1368 = vmatprep.subr.bf16.mxu0 0
    %1369 = vmatpush1.bf16.xpose.msra.mxu0 0
    %1370 = vmatprep.subr.bf16.mxu0 0
    %1371 = vmatpush1.bf16.xpose.msra.mxu0 %v1354
    %1372 = vmatprep.subr.bf16.mxu0 0
    %1373 = vmatpush2.bf16.xpose.msra.mxu0 0
    %1374 = vmatprep.subr.bf16.mxu0 0
    %1375 = vmatpush2.bf16.xpose.msra.mxu0 0
    %1376 = vmatprep.subr.bf16.mxu0 0
    %1377 = vmatpush2.bf16.xpose.msra.mxu0 0
    %1378 = vmatprep.subr.bf16.mxu0 0
    %1379 = vmatpush2.bf16.xpose.msra.mxu0 0
    %1380 = vmatprep.subr.bf16.mxu0 0
    %1381 = vmatpush2.bf16.xpose.msra.mxu0 0
    %1382 = vmatprep.subr.bf16.mxu0 0
    %1383 = vmatpush2.bf16.xpose.msra.mxu0 0
    %1384 = vmatprep.subr.bf16.mxu0 0
    %1385 = vmatpush2.bf16.xpose.msra.mxu0 0
    %1386 = vmatprep.subr.bf16.mxu0 0
    %1387 = vmatpush2.bf16.xpose.msra.mxu0 0
    %1388 = vmatprep.mubr.bf16.mxu0 0
    %1389 = vmatmul.mubr.bf16.gmra.mxu0 %v1351
    %v1390 = vpop.f32.mrf.mxu0
    %v1391 = vadd.f32 0.0, %v1390
    %v1392 = vpop.f32.mrf.mxu0
    %v1393 = vpop.f32.mrf.mxu0
    %v1394 = vpop.f32.mrf.mxu0
    %1395 = vdwg.mxu0
    %v1397 = vsel %vm107, %v1033, 0
    %v1400 = vsel %vm107, %v1049, 0
    %1402 = vmatprep.subr.bf16.mxu0 0
    %1403 = vmatpush1.bf16.xpose.msra.mxu0 0
    %1404 = vmatprep.subr.bf16.mxu0 0
    %1405 = vmatpush1.bf16.xpose.msra.mxu0 0
    %1406 = vmatprep.subr.bf16.mxu0 0
    %1407 = vmatpush1.bf16.xpose.msra.mxu0 0
    %1408 = vmatprep.subr.bf16.mxu0 0
    %1409 = vmatpush1.bf16.xpose.msra.mxu0 0
    %1410 = vmatprep.subr.bf16.mxu0 0
    %1411 = vmatpush1.bf16.xpose.msra.mxu0 0
    %1412 = vmatprep.subr.bf16.mxu0 0
    %1413 = vmatpush1.bf16.xpose.msra.mxu0 0
    %1414 = vmatprep.subr.bf16.mxu0 0
    %1415 = vmatpush1.bf16.xpose.msra.mxu0 0
    %1416 = vmatprep.subr.bf16.mxu0 0
    %1417 = vmatpush1.bf16.xpose.msra.mxu0 %v1400
    %1418 = vmatprep.subr.bf16.mxu0 0
    %1419 = vmatpush2.bf16.xpose.msra.mxu0 0
    %1420 = vmatprep.subr.bf16.mxu0 0
    %1421 = vmatpush2.bf16.xpose.msra.mxu0 0
    %1422 = vmatprep.subr.bf16.mxu0 0
    %1423 = vmatpush2.bf16.xpose.msra.mxu0 0
    %1424 = vmatprep.subr.bf16.mxu0 0
    %1425 = vmatpush2.bf16.xpose.msra.mxu0 0
    %1426 = vmatprep.subr.bf16.mxu0 0
    %1427 = vmatpush2.bf16.xpose.msra.mxu0 0
    %1428 = vmatprep.subr.bf16.mxu0 0
    %1429 = vmatpush2.bf16.xpose.msra.mxu0 0
    %1430 = vmatprep.subr.bf16.mxu0 0
    %1431 = vmatpush2.bf16.xpose.msra.mxu0 0
    %1432 = vmatprep.subr.bf16.mxu0 0
    %1433 = vmatpush2.bf16.xpose.msra.mxu0 0
    %1434 = vmatprep.mubr.bf16.mxu0 0
    %1435 = vmatmul.mubr.bf16.gmra.mxu0 %v1397
    %v1436 = vpop.f32.mrf.mxu0
    %v1437 = vadd.f32 0.0, %v1436
    %v1438 = vpop.f32.mrf.mxu0
    %v1439 = vpop.f32.mrf.mxu0
    %v1440 = vpop.f32.mrf.mxu0
    %1441 = vdwg.mxu0
    %v1443 = vsel %vm107, %v1034, 0
    %v1446 = vsel %vm107, %v1050, 0
    %1448 = vmatprep.subr.bf16.mxu0 0
    %1449 = vmatpush1.bf16.xpose.msra.mxu0 0
    %1450 = vmatprep.subr.bf16.mxu0 0
    %1451 = vmatpush1.bf16.xpose.msra.mxu0 0
    %1452 = vmatprep.subr.bf16.mxu0 0
    %1453 = vmatpush1.bf16.xpose.msra.mxu0 0
    %1454 = vmatprep.subr.bf16.mxu0 0
    %1455 = vmatpush1.bf16.xpose.msra.mxu0 0
    %1456 = vmatprep.subr.bf16.mxu0 0
    %1457 = vmatpush1.bf16.xpose.msra.mxu0 0
    %1458 = vmatprep.subr.bf16.mxu0 0
    %1459 = vmatpush1.bf16.xpose.msra.mxu0 0
    %1460 = vmatprep.subr.bf16.mxu0 0
    %1461 = vmatpush1.bf16.xpose.msra.mxu0 0
    %1462 = vmatprep.subr.bf16.mxu0 0
    %1463 = vmatpush1.bf16.xpose.msra.mxu0 %v1446
    %1464 = vmatprep.subr.bf16.mxu0 0
    %1465 = vmatpush2.bf16.xpose.msra.mxu0 0
    %1466 = vmatprep.subr.bf16.mxu0 0
    %1467 = vmatpush2.bf16.xpose.msra.mxu0 0
    %1468 = vmatprep.subr.bf16.mxu0 0
    %1469 = vmatpush2.bf16.xpose.msra.mxu0 0
    %1470 = vmatprep.subr.bf16.mxu0 0
    %1471 = vmatpush2.bf16.xpose.msra.mxu0 0
    %1472 = vmatprep.subr.bf16.mxu0 0
    %1473 = vmatpush2.bf16.xpose.msra.mxu0 0
    %1474 = vmatprep.subr.bf16.mxu0 0
    %1475 = vmatpush2.bf16.xpose.msra.mxu0 0
    %1476 = vmatprep.subr.bf16.mxu0 0
    %1477 = vmatpush2.bf16.xpose.msra.mxu0 0
    %1478 = vmatprep.subr.bf16.mxu0 0
    %1479 = vmatpush2.bf16.xpose.msra.mxu0 0
    %1480 = vmatprep.mubr.bf16.mxu0 0
    %1481 = vmatmul.mubr.bf16.gmra.mxu0 %v1443
    %v1482 = vpop.f32.mrf.mxu0
    %v1483 = vadd.f32 0.0, %v1482
    %v1484 = vpop.f32.mrf.mxu0
    %v1485 = vpop.f32.mrf.mxu0
    %v1486 = vpop.f32.mrf.mxu0
    %1487 = vdwg.mxu0
    %v1489 = vsel %vm107, %v1035, 0
    %v1492 = vsel %vm107, %v1051, 0
    %1494 = vmatprep.subr.bf16.mxu0 0
    %1495 = vmatpush1.bf16.xpose.msra.mxu0 0
    %1496 = vmatprep.subr.bf16.mxu0 0
    %1497 = vmatpush1.bf16.xpose.msra.mxu0 0
    %1498 = vmatprep.subr.bf16.mxu0 0
    %1499 = vmatpush1.bf16.xpose.msra.mxu0 0
    %1500 = vmatprep.subr.bf16.mxu0 0
    %1501 = vmatpush1.bf16.xpose.msra.mxu0 0
    %1502 = vmatprep.subr.bf16.mxu0 0
    %1503 = vmatpush1.bf16.xpose.msra.mxu0 0
    %1504 = vmatprep.subr.bf16.mxu0 0
    %1505 = vmatpush1.bf16.xpose.msra.mxu0 0
    %1506 = vmatprep.subr.bf16.mxu0 0
    %1507 = vmatpush1.bf16.xpose.msra.mxu0 0
    %1508 = vmatprep.subr.bf16.mxu0 0
    %1509 = vmatpush1.bf16.xpose.msra.mxu0 %v1492
    %1510 = vmatprep.subr.bf16.mxu0 0
    %1511 = vmatpush2.bf16.xpose.msra.mxu0 0
    %1512 = vmatprep.subr.bf16.mxu0 0
    %1513 = vmatpush2.bf16.xpose.msra.mxu0 0
    %1514 = vmatprep.subr.bf16.mxu0 0
    %1515 = vmatpush2.bf16.xpose.msra.mxu0 0
    %1516 = vmatprep.subr.bf16.mxu0 0
    %1517 = vmatpush2.bf16.xpose.msra.mxu0 0
    %1518 = vmatprep.subr.bf16.mxu0 0
    %1519 = vmatpush2.bf16.xpose.msra.mxu0 0
    %1520 = vmatprep.subr.bf16.mxu0 0
    %1521 = vmatpush2.bf16.xpose.msra.mxu0 0
    %1522 = vmatprep.subr.bf16.mxu0 0
    %1523 = vmatpush2.bf16.xpose.msra.mxu0 0
    %1524 = vmatprep.subr.bf16.mxu0 0
    %1525 = vmatpush2.bf16.xpose.msra.mxu0 0
    %1526 = vmatprep.mubr.bf16.mxu0 0
    %1527 = vmatmul.mubr.bf16.gmra.mxu0 %v1489
    %v1528 = vpop.f32.mrf.mxu0
    %v1529 = vadd.f32 0.0, %v1528
    %v1530 = vpop.f32.mrf.mxu0
    %v1531 = vpop.f32.mrf.mxu0
    %v1532 = vpop.f32.mrf.mxu0
    %1533 = vdwg.mxu0
    %v1535 = vsel %vm107, %v1036, 0
    %v1538 = vsel %vm107, %v1052, 0
    %1540 = vmatprep.subr.bf16.mxu0 0
    %1541 = vmatpush1.bf16.xpose.msra.mxu0 0
    %1542 = vmatprep.subr.bf16.mxu0 0
    %1543 = vmatpush1.bf16.xpose.msra.mxu0 0
    %1544 = vmatprep.subr.bf16.mxu0 0
    %1545 = vmatpush1.bf16.xpose.msra.mxu0 0
    %1546 = vmatprep.subr.bf16.mxu0 0
    %1547 = vmatpush1.bf16.xpose.msra.mxu0 0
    %1548 = vmatprep.subr.bf16.mxu0 0
    %1549 = vmatpush1.bf16.xpose.msra.mxu0 0
    %1550 = vmatprep.subr.bf16.mxu0 0
    %1551 = vmatpush1.bf16.xpose.msra.mxu0 0
    %1552 = vmatprep.subr.bf16.mxu0 0
    %1553 = vmatpush1.bf16.xpose.msra.mxu0 0
    %1554 = vmatprep.subr.bf16.mxu0 0
    %1555 = vmatpush1.bf16.xpose.msra.mxu0 %v1538
    %1556 = vmatprep.subr.bf16.mxu0 0
    %1557 = vmatpush2.bf16.xpose.msra.mxu0 0
    %1558 = vmatprep.subr.bf16.mxu0 0
    %1559 = vmatpush2.bf16.xpose.msra.mxu0 0
    %1560 = vmatprep.subr.bf16.mxu0 0
    %1561 = vmatpush2.bf16.xpose.msra.mxu0 0
    %1562 = vmatprep.subr.bf16.mxu0 0
    %1563 = vmatpush2.bf16.xpose.msra.mxu0 0
    %1564 = vmatprep.subr.bf16.mxu0 0
    %1565 = vmatpush2.bf16.xpose.msra.mxu0 0
    %1566 = vmatprep.subr.bf16.mxu0 0
    %1567 = vmatpush2.bf16.xpose.msra.mxu0 0
    %1568 = vmatprep.subr.bf16.mxu0 0
    %1569 = vmatpush2.bf16.xpose.msra.mxu0 0
    %1570 = vmatprep.subr.bf16.mxu0 0
    %1571 = vmatpush2.bf16.xpose.msra.mxu0 0
    %1572 = vmatprep.mubr.bf16.mxu0 0
    %1573 = vmatmul.mubr.bf16.gmra.mxu0 %v1535
    %v1574 = vpop.f32.mrf.mxu0
    %v1575 = vadd.f32 0.0, %v1574
    %v1576 = vpop.f32.mrf.mxu0
    %v1577 = vpop.f32.mrf.mxu0
    %v1578 = vpop.f32.mrf.mxu0
    %1579 = vdwg.mxu0
    %v1581 = vsel %vm107, %v1037, 0
    %v1584 = vsel %vm107, %v1053, 0
    %1586 = vmatprep.subr.bf16.mxu0 0
    %1587 = vmatpush1.bf16.xpose.msra.mxu0 0
    %1588 = vmatprep.subr.bf16.mxu0 0
    %1589 = vmatpush1.bf16.xpose.msra.mxu0 0
    %1590 = vmatprep.subr.bf16.mxu0 0
    %1591 = vmatpush1.bf16.xpose.msra.mxu0 0
    %1592 = vmatprep.subr.bf16.mxu0 0
    %1593 = vmatpush1.bf16.xpose.msra.mxu0 0
    %1594 = vmatprep.subr.bf16.mxu0 0
    %1595 = vmatpush1.bf16.xpose.msra.mxu0 0
    %1596 = vmatprep.subr.bf16.mxu0 0
    %1597 = vmatpush1.bf16.xpose.msra.mxu0 0
    %1598 = vmatprep.subr.bf16.mxu0 0
    %1599 = vmatpush1.bf16.xpose.msra.mxu0 0
    %1600 = vmatprep.subr.bf16.mxu0 0
    %1601 = vmatpush1.bf16.xpose.msra.mxu0 %v1584
    %1602 = vmatprep.subr.bf16.mxu0 0
    %1603 = vmatpush2.bf16.xpose.msra.mxu0 0
    %1604 = vmatprep.subr.bf16.mxu0 0
    %1605 = vmatpush2.bf16.xpose.msra.mxu0 0
    %1606 = vmatprep.subr.bf16.mxu0 0
    %1607 = vmatpush2.bf16.xpose.msra.mxu0 0
    %1608 = vmatprep.subr.bf16.mxu0 0
    %1609 = vmatpush2.bf16.xpose.msra.mxu0 0
    %1610 = vmatprep.subr.bf16.mxu0 0
    %1611 = vmatpush2.bf16.xpose.msra.mxu0 0
    %1612 = vmatprep.subr.bf16.mxu0 0
    %1613 = vmatpush2.bf16.xpose.msra.mxu0 0
    %1614 = vmatprep.subr.bf16.mxu0 0
    %1615 = vmatpush2.bf16.xpose.msra.mxu0 0
    %1616 = vmatprep.subr.bf16.mxu0 0
    %1617 = vmatpush2.bf16.xpose.msra.mxu0 0
    %1618 = vmatprep.mubr.bf16.mxu0 0
    %1619 = vmatmul.mubr.bf16.gmra.mxu0 %v1581
    %v1620 = vpop.f32.mrf.mxu0
    %v1621 = vadd.f32 0.0, %v1620
    %v1622 = vpop.f32.mrf.mxu0
    %v1623 = vpop.f32.mrf.mxu0
    %v1624 = vpop.f32.mrf.mxu0
    %1625 = vdwg.mxu0
    %v1627 = vsel %vm107, %v1038, 0
    %v1630 = vsel %vm107, %v1054, 0
    %1632 = vmatprep.subr.bf16.mxu0 0
    %1633 = vmatpush1.bf16.xpose.msra.mxu0 0
    %1634 = vmatprep.subr.bf16.mxu0 0
    %1635 = vmatpush1.bf16.xpose.msra.mxu0 0
    %1636 = vmatprep.subr.bf16.mxu0 0
    %1637 = vmatpush1.bf16.xpose.msra.mxu0 0
    %1638 = vmatprep.subr.bf16.mxu0 0
    %1639 = vmatpush1.bf16.xpose.msra.mxu0 0
    %1640 = vmatprep.subr.bf16.mxu0 0
    %1641 = vmatpush1.bf16.xpose.msra.mxu0 0
    %1642 = vmatprep.subr.bf16.mxu0 0
    %1643 = vmatpush1.bf16.xpose.msra.mxu0 0
    %1644 = vmatprep.subr.bf16.mxu0 0
    %1645 = vmatpush1.bf16.xpose.msra.mxu0 0
    %1646 = vmatprep.subr.bf16.mxu0 0
    %1647 = vmatpush1.bf16.xpose.msra.mxu0 %v1630
    %1648 = vmatprep.subr.bf16.mxu0 0
    %1649 = vmatpush2.bf16.xpose.msra.mxu0 0
    %1650 = vmatprep.subr.bf16.mxu0 0
    %1651 = vmatpush2.bf16.xpose.msra.mxu0 0
    %1652 = vmatprep.subr.bf16.mxu0 0
    %1653 = vmatpush2.bf16.xpose.msra.mxu0 0
    %1654 = vmatprep.subr.bf16.mxu0 0
    %1655 = vmatpush2.bf16.xpose.msra.mxu0 0
    %1656 = vmatprep.subr.bf16.mxu0 0
    %1657 = vmatpush2.bf16.xpose.msra.mxu0 0
    %1658 = vmatprep.subr.bf16.mxu0 0
    %1659 = vmatpush2.bf16.xpose.msra.mxu0 0
    %1660 = vmatprep.subr.bf16.mxu0 0
    %1661 = vmatpush2.bf16.xpose.msra.mxu0 0
    %1662 = vmatprep.subr.bf16.mxu0 0
    %1663 = vmatpush2.bf16.xpose.msra.mxu0 0
    %1664 = vmatprep.mubr.bf16.mxu0 0
    %1665 = vmatmul.mubr.bf16.gmra.mxu0 %v1627
    %v1666 = vpop.f32.mrf.mxu0
    %v1667 = vadd.f32 0.0, %v1666
    %v1668 = vpop.f32.mrf.mxu0
    %v1669 = vpop.f32.mrf.mxu0
    %v1670 = vpop.f32.mrf.mxu0
    %1671 = vdwg.mxu0
    %v1673 = vsel %vm107, %v1039, 0
    %v1676 = vsel %vm107, %v1055, 0
    %1678 = vmatprep.subr.bf16.mxu0 0
    %1679 = vmatpush1.bf16.xpose.msra.mxu0 0
    %1680 = vmatprep.subr.bf16.mxu0 0
    %1681 = vmatpush1.bf16.xpose.msra.mxu0 0
    %1682 = vmatprep.subr.bf16.mxu0 0
    %1683 = vmatpush1.bf16.xpose.msra.mxu0 0
    %1684 = vmatprep.subr.bf16.mxu0 0
    %1685 = vmatpush1.bf16.xpose.msra.mxu0 0
    %1686 = vmatprep.subr.bf16.mxu0 0
    %1687 = vmatpush1.bf16.xpose.msra.mxu0 0
    %1688 = vmatprep.subr.bf16.mxu0 0
    %1689 = vmatpush1.bf16.xpose.msra.mxu0 0
    %1690 = vmatprep.subr.bf16.mxu0 0
    %1691 = vmatpush1.bf16.xpose.msra.mxu0 0
    %1692 = vmatprep.subr.bf16.mxu0 0
    %1693 = vmatpush1.bf16.xpose.msra.mxu0 %v1676
    %1694 = vmatprep.subr.bf16.mxu0 0
    %1695 = vmatpush2.bf16.xpose.msra.mxu0 0
    %1696 = vmatprep.subr.bf16.mxu0 0
    %1697 = vmatpush2.bf16.xpose.msra.mxu0 0
    %1698 = vmatprep.subr.bf16.mxu0 0
    %1699 = vmatpush2.bf16.xpose.msra.mxu0 0
    %1700 = vmatprep.subr.bf16.mxu0 0
    %1701 = vmatpush2.bf16.xpose.msra.mxu0 0
    %1702 = vmatprep.subr.bf16.mxu0 0
    %1703 = vmatpush2.bf16.xpose.msra.mxu0 0
    %1704 = vmatprep.subr.bf16.mxu0 0
    %1705 = vmatpush2.bf16.xpose.msra.mxu0 0
    %1706 = vmatprep.subr.bf16.mxu0 0
    %1707 = vmatpush2.bf16.xpose.msra.mxu0 0
    %1708 = vmatprep.subr.bf16.mxu0 0
    %1709 = vmatpush2.bf16.xpose.msra.mxu0 0
    %1710 = vmatprep.mubr.bf16.mxu0 0
    %1711 = vmatmul.mubr.bf16.gmra.mxu0 %v1673
    %v1712 = vpop.f32.mrf.mxu0
    %v1713 = vadd.f32 0.0, %v1712
    %v1714 = vpop.f32.mrf.mxu0
    %v1715 = vpop.f32.mrf.mxu0
    %v1716 = vpop.f32.mrf.mxu0
    %1717 = vdwg.mxu0
    %v1719 = vsel %vm107, %v1040, 0
    %v1722 = vsel %vm107, %v1056, 0
    %1724 = vmatprep.subr.bf16.mxu0 0
    %1725 = vmatpush1.bf16.xpose.msra.mxu0 0
    %1726 = vmatprep.subr.bf16.mxu0 0
    %1727 = vmatpush1.bf16.xpose.msra.mxu0 0
    %1728 = vmatprep.subr.bf16.mxu0 0
    %1729 = vmatpush1.bf16.xpose.msra.mxu0 0
    %1730 = vmatprep.subr.bf16.mxu0 0
    %1731 = vmatpush1.bf16.xpose.msra.mxu0 0
    %1732 = vmatprep.subr.bf16.mxu0 0
    %1733 = vmatpush1.bf16.xpose.msra.mxu0 0
    %1734 = vmatprep.subr.bf16.mxu0 0
    %1735 = vmatpush1.bf16.xpose.msra.mxu0 0
    %1736 = vmatprep.subr.bf16.mxu0 0
    %1737 = vmatpush1.bf16.xpose.msra.mxu0 0
    %1738 = vmatprep.subr.bf16.mxu0 0
    %1739 = vmatpush1.bf16.xpose.msra.mxu0 %v1722
    %1740 = vmatprep.subr.bf16.mxu0 0
    %1741 = vmatpush2.bf16.xpose.msra.mxu0 0
    %1742 = vmatprep.subr.bf16.mxu0 0
    %1743 = vmatpush2.bf16.xpose.msra.mxu0 0
    %1744 = vmatprep.subr.bf16.mxu0 0
    %1745 = vmatpush2.bf16.xpose.msra.mxu0 0
    %1746 = vmatprep.subr.bf16.mxu0 0
    %1747 = vmatpush2.bf16.xpose.msra.mxu0 0
    %1748 = vmatprep.subr.bf16.mxu0 0
    %1749 = vmatpush2.bf16.xpose.msra.mxu0 0
    %1750 = vmatprep.subr.bf16.mxu0 0
    %1751 = vmatpush2.bf16.xpose.msra.mxu0 0
    %1752 = vmatprep.subr.bf16.mxu0 0
    %1753 = vmatpush2.bf16.xpose.msra.mxu0 0
    %1754 = vmatprep.subr.bf16.mxu0 0
    %1755 = vmatpush2.bf16.xpose.msra.mxu0 0
    %1756 = vmatprep.mubr.bf16.mxu0 0
    %1757 = vmatmul.mubr.bf16.gmra.mxu0 %v1719
    %v1758 = vpop.f32.mrf.mxu0
    %v1759 = vadd.f32 0.0, %v1758
    %v1760 = vpop.f32.mrf.mxu0
    %v1761 = vpop.f32.mrf.mxu0
    %v1762 = vpop.f32.mrf.mxu0
    %1763 = vdwg.mxu0
    %v1765 = vsel %vm107, %v1041, 0
    %v1768 = vsel %vm107, %v1057, 0
    %1770 = vmatprep.subr.bf16.mxu0 0
    %1771 = vmatpush1.bf16.xpose.msra.mxu0 0
    %1772 = vmatprep.subr.bf16.mxu0 0
    %1773 = vmatpush1.bf16.xpose.msra.mxu0 0
    %1774 = vmatprep.subr.bf16.mxu0 0
    %1775 = vmatpush1.bf16.xpose.msra.mxu0 0
    %1776 = vmatprep.subr.bf16.mxu0 0
    %1777 = vmatpush1.bf16.xpose.msra.mxu0 0
    %1778 = vmatprep.subr.bf16.mxu0 0
    %1779 = vmatpush1.bf16.xpose.msra.mxu0 0
    %1780 = vmatprep.subr.bf16.mxu0 0
    %1781 = vmatpush1.bf16.xpose.msra.mxu0 0
    %1782 = vmatprep.subr.bf16.mxu0 0
    %1783 = vmatpush1.bf16.xpose.msra.mxu0 0
    %1784 = vmatprep.subr.bf16.mxu0 0
    %1785 = vmatpush1.bf16.xpose.msra.mxu0 %v1768
    %1786 = vmatprep.subr.bf16.mxu0 0
    %1787 = vmatpush2.bf16.xpose.msra.mxu0 0
    %1788 = vmatprep.subr.bf16.mxu0 0
    %1789 = vmatpush2.bf16.xpose.msra.mxu0 0
    %1790 = vmatprep.subr.bf16.mxu0 0
    %1791 = vmatpush2.bf16.xpose.msra.mxu0 0
    %1792 = vmatprep.subr.bf16.mxu0 0
    %1793 = vmatpush2.bf16.xpose.msra.mxu0 0
    %1794 = vmatprep.subr.bf16.mxu0 0
    %1795 = vmatpush2.bf16.xpose.msra.mxu0 0
    %1796 = vmatprep.subr.bf16.mxu0 0
    %1797 = vmatpush2.bf16.xpose.msra.mxu0 0
    %1798 = vmatprep.subr.bf16.mxu0 0
    %1799 = vmatpush2.bf16.xpose.msra.mxu0 0
    %1800 = vmatprep.subr.bf16.mxu0 0
    %1801 = vmatpush2.bf16.xpose.msra.mxu0 0
    %1802 = vmatprep.mubr.bf16.mxu0 0
    %1803 = vmatmul.mubr.bf16.gmra.mxu0 %v1765
    %v1804 = vpop.f32.mrf.mxu0
    %v1805 = vadd.f32 0.0, %v1804
    %v1806 = vpop.f32.mrf.mxu0
    %v1807 = vpop.f32.mrf.mxu0
    %v1808 = vpop.f32.mrf.mxu0
    %1809 = vdwg.mxu0
    %vm1810 = vcmask 64512
    %v1811 = vsel %vm1810, %v1115, -inf
    %1812 = vmax.xlane.f32.xlu0 %v1811
    %v1813 = vpop.xlane.xlu0 %1812
    %v1814 = vsel %vm1810, %v1161, -inf
    %1815 = vmax.xlane.f32.xlu0 %v1814
    %v1816 = vpop.xlane.xlu0 %1815
    %v1817 = vsel %vm1810, %v1207, -inf
    %1818 = vmax.xlane.f32.xlu0 %v1817
    %v1819 = vpop.xlane.xlu0 %1818
    %v1820 = vsel %vm1810, %v1253, -inf
    %1821 = vmax.xlane.f32.xlu0 %v1820
    %v1822 = vpop.xlane.xlu0 %1821
    %v1823 = vsel %vm1810, %v1299, -inf
    %1824 = vmax.xlane.f32.xlu0 %v1823
    %v1825 = vpop.xlane.xlu0 %1824
    %v1826 = vsel %vm1810, %v1345, -inf
    %1827 = vmax.xlane.f32.xlu0 %v1826
    %v1828 = vpop.xlane.xlu0 %1827
    %v1829 = vsel %vm1810, %v1391, -inf
    %1830 = vmax.xlane.f32.xlu0 %v1829
    %v1831 = vpop.xlane.xlu0 %1830
    %v1832 = vsel %vm1810, %v1437, -inf
    %1833 = vmax.xlane.f32.xlu0 %v1832
    %v1834 = vpop.xlane.xlu0 %1833
    %v1835 = vsel %vm1810, %v1483, -inf
    %1836 = vmax.xlane.f32.xlu0 %v1835
    %v1837 = vpop.xlane.xlu0 %1836
    %v1838 = vsel %vm1810, %v1529, -inf
    %1839 = vmax.xlane.f32.xlu0 %v1838
    %v1840 = vpop.xlane.xlu0 %1839
    %v1841 = vsel %vm1810, %v1575, -inf
    %1842 = vmax.xlane.f32.xlu0 %v1841
    %v1843 = vpop.xlane.xlu0 %1842
    %v1844 = vsel %vm1810, %v1621, -inf
    %1845 = vmax.xlane.f32.xlu0 %v1844
    %v1846 = vpop.xlane.xlu0 %1845
    %v1847 = vsel %vm1810, %v1667, -inf
    %1848 = vmax.xlane.f32.xlu0 %v1847
    %v1849 = vpop.xlane.xlu0 %1848
    %v1850 = vsel %vm1810, %v1713, -inf
    %1851 = vmax.xlane.f32.xlu0 %v1850
    %v1852 = vpop.xlane.xlu0 %1851
    %v1853 = vsel %vm1810, %v1759, -inf
    %1854 = vmax.xlane.f32.xlu0 %v1853
    %v1855 = vpop.xlane.xlu0 %1854
    %v1856 = vsel %vm1810, %v1805, -inf
    %1857 = vmax.xlane.f32.xlu0 %v1856
    %v1858 = vpop.xlane.xlu0 %1857
    %v1859 = vsub.f32 %v1115, %v1813
    %v1860 = vsub.f32 %v1161, %v1816
    %v1861 = vsub.f32 %v1207, %v1819
    %v1862 = vsub.f32 %v1253, %v1822
    %v1863 = vsub.f32 %v1299, %v1825
    %v1864 = vsub.f32 %v1345, %v1828
    %v1865 = vsub.f32 %v1391, %v1831
    %v1866 = vsub.f32 %v1437, %v1834
    %v1867 = vsub.f32 %v1483, %v1837
    %v1868 = vsub.f32 %v1529, %v1840
    %v1869 = vsub.f32 %v1575, %v1843
    %v1870 = vsub.f32 %v1621, %v1846
    %v1871 = vsub.f32 %v1667, %v1849
    %v1872 = vsub.f32 %v1713, %v1852
    %v1873 = vsub.f32 %v1759, %v1855
    %v1874 = vsub.f32 %v1805, %v1858
    %v1875 = vmul.f32 %v1859, 1.442695
    %v1876 = vpow.pop %v1875
    %v1877 = vmul.f32 %v1860, 1.442695
    %v1878 = vpow.pop %v1877
    %v1879 = vmul.f32 %v1861, 1.442695
    %v1880 = vpow.pop %v1879
    %v1881 = vmul.f32 %v1862, 1.442695
    %v1882 = vpow.pop %v1881
    %v1883 = vmul.f32 %v1863, 1.442695
    %v1884 = vpow.pop %v1883
    %v1885 = vmul.f32 %v1864, 1.442695
    %v1886 = vpow.pop %v1885
    %v1887 = vmul.f32 %v1865, 1.442695
    %v1888 = vpow.pop %v1887
    %v1889 = vmul.f32 %v1866, 1.442695
    %v1890 = vpow.pop %v1889
    %v1891 = vmul.f32 %v1867, 1.442695
    %v1892 = vpow.pop %v1891
    %v1893 = vmul.f32 %v1868, 1.442695
    %v1894 = vpow.pop %v1893
    %v1895 = vmul.f32 %v1869, 1.442695
    %v1896 = vpow.pop %v1895
    %v1897 = vmul.f32 %v1870, 1.442695
    %v1898 = vpow.pop %v1897
    %v1899 = vmul.f32 %v1871, 1.442695
    %v1900 = vpow.pop %v1899
    %v1901 = vmul.f32 %v1872, 1.442695
    %v1902 = vpow.pop %v1901
    %v1903 = vmul.f32 %v1873, 1.442695
    %v1904 = vpow.pop %v1903
    %v1905 = vmul.f32 %v1874, 1.442695
    %v1906 = vpow.pop %v1905
    %v1907 = vsel %vm1810, %v1876, 0.0
    %1908 = vadd.xlane.f32.xlu0 %v1907
    %v1909 = vpop.xlane.xlu0 %1908
    %v1910 = vsel %vm1810, %v1878, 0.0
    %1911 = vadd.xlane.f32.xlu0 %v1910
    %v1912 = vpop.xlane.xlu0 %1911
    %v1913 = vsel %vm1810, %v1880, 0.0
    %1914 = vadd.xlane.f32.xlu0 %v1913
    %v1915 = vpop.xlane.xlu0 %1914
    %v1916 = vsel %vm1810, %v1882, 0.0
    %1917 = vadd.xlane.f32.xlu0 %v1916
    %v1918 = vpop.xlane.xlu0 %1917
    %v1919 = vsel %vm1810, %v1884, 0.0
    %1920 = vadd.xlane.f32.xlu0 %v1919
    %v1921 = vpop.xlane.xlu0 %1920
    %v1922 = vsel %vm1810, %v1886, 0.0
    %1923 = vadd.xlane.f32.xlu0 %v1922
    %v1924 = vpop.xlane.xlu0 %1923
    %v1925 = vsel %vm1810, %v1888, 0.0
    %1926 = vadd.xlane.f32.xlu0 %v1925
    %v1927 = vpop.xlane.xlu0 %1926
    %v1928 = vsel %vm1810, %v1890, 0.0
    %1929 = vadd.xlane.f32.xlu0 %v1928
    %v1930 = vpop.xlane.xlu0 %1929
    %v1931 = vsel %vm1810, %v1892, 0.0
    %1932 = vadd.xlane.f32.xlu0 %v1931
    %v1933 = vpop.xlane.xlu0 %1932
    %v1934 = vsel %vm1810, %v1894, 0.0
    %1935 = vadd.xlane.f32.xlu0 %v1934
    %v1936 = vpop.xlane.xlu0 %1935
    %v1937 = vsel %vm1810, %v1896, 0.0
    %1938 = vadd.xlane.f32.xlu0 %v1937
    %v1939 = vpop.xlane.xlu0 %1938
    %v1940 = vsel %vm1810, %v1898, 0.0
    %1941 = vadd.xlane.f32.xlu0 %v1940
    %v1942 = vpop.xlane.xlu0 %1941
    %v1943 = vsel %vm1810, %v1900, 0.0
    %1944 = vadd.xlane.f32.xlu0 %v1943
    %v1945 = vpop.xlane.xlu0 %1944
    %v1946 = vsel %vm1810, %v1902, 0.0
    %1947 = vadd.xlane.f32.xlu0 %v1946
    %v1948 = vpop.xlane.xlu0 %1947
    %v1949 = vsel %vm1810, %v1904, 0.0
    %1950 = vadd.xlane.f32.xlu0 %v1949
    %v1951 = vpop.xlane.xlu0 %1950
    %v1952 = vsel %vm1810, %v1906, 0.0
    %1953 = vadd.xlane.f32.xlu0 %v1952
    %v1954 = vpop.xlane.xlu0 %1953
    %v1955 = vrcp.pop %v1909
    %v1956 = vrcp.pop %v1912
    %v1957 = vrcp.pop %v1915
    %v1958 = vrcp.pop %v1918
    %v1959 = vrcp.pop %v1921
    %v1960 = vrcp.pop %v1924
    %v1961 = vrcp.pop %v1927
    %v1962 = vrcp.pop %v1930
    %v1963 = vrcp.pop %v1933
    %v1964 = vrcp.pop %v1936
    %v1965 = vrcp.pop %v1939
    %v1966 = vrcp.pop %v1942
    %v1967 = vrcp.pop %v1945
    %v1968 = vrcp.pop %v1948
    %v1969 = vrcp.pop %v1951
    %v1970 = vrcp.pop %v1954
    %v1971 = vmul.f32 %v1876, %v1955
    %v1972 = vmul.f32 %v1878, %v1956
    %v1973 = vmul.f32 %v1880, %v1957
    %v1974 = vmul.f32 %v1882, %v1958
    %v1975 = vmul.f32 %v1884, %v1959
    %v1976 = vmul.f32 %v1886, %v1960
    %v1977 = vmul.f32 %v1888, %v1961
    %v1978 = vmul.f32 %v1890, %v1962
    %v1979 = vmul.f32 %v1892, %v1963
    %v1980 = vmul.f32 %v1894, %v1964
    %v1981 = vmul.f32 %v1896, %v1965
    %v1982 = vmul.f32 %v1898, %v1966
    %v1983 = vmul.f32 %v1900, %v1967
    %v1984 = vmul.f32 %v1902, %v1968
    %v1985 = vmul.f32 %v1904, %v1969
    %v1986 = vmul.f32 %v1906, %v1970
    %v1987 = vpack.c.bf16 %v1971, %v1971
    %v1988 = vpack.c.bf16 %v1972, %v1972
    %v1989 = vpack.c.bf16 %v1973, %v1973
    %v1990 = vpack.c.bf16 %v1974, %v1974
    %v1991 = vpack.c.bf16 %v1975, %v1975
    %v1992 = vpack.c.bf16 %v1976, %v1976
    %v1993 = vpack.c.bf16 %v1977, %v1977
    %v1994 = vpack.c.bf16 %v1978, %v1978
    %v1995 = vpack.c.bf16 %v1979, %v1979
    %v1996 = vpack.c.bf16 %v1980, %v1980
    %v1997 = vpack.c.bf16 %v1981, %v1981
    %v1998 = vpack.c.bf16 %v1982, %v1982
    %v1999 = vpack.c.bf16 %v1983, %v1983
    %v2000 = vpack.c.bf16 %v1984, %v1984
    %v2001 = vpack.c.bf16 %v1985, %v1985
    %v2002 = vpack.c.bf16 %v1986, %v1986
    %v2004 = vsel %vm1810, %v1987, 0
    %vm2006 = vcmask 1043456
    %v2008 = vsel %vm2006, %v1058, 0
    %2010 = vmatprep.subr.bf16.mxu0 0
    %2011 = vmatpush1.bf16.msra.mxu0 0
    %2012 = vmatprep.subr.bf16.mxu0 0
    %2013 = vmatpush1.bf16.msra.mxu0 0
    %2014 = vmatprep.subr.bf16.mxu0 0
    %2015 = vmatpush1.bf16.msra.mxu0 0
    %2016 = vmatprep.subr.bf16.mxu0 0
    %2017 = vmatpush1.bf16.msra.mxu0 0
    %2018 = vmatprep.subr.bf16.mxu0 0
    %2019 = vmatpush1.bf16.msra.mxu0 0
    %2020 = vmatprep.subr.bf16.mxu0 0
    %2021 = vmatpush1.bf16.msra.mxu0 0
    %2022 = vmatprep.subr.bf16.mxu0 0
    %2023 = vmatpush1.bf16.msra.mxu0 0
    %2024 = vmatprep.subr.bf16.mxu0 0
    %2025 = vmatpush1.bf16.msra.mxu0 %v2008
    %2026 = vmatprep.subr.bf16.mxu0 0
    %2027 = vmatpush2.bf16.msra.mxu0 0
    %2028 = vmatprep.subr.bf16.mxu0 0
    %2029 = vmatpush2.bf16.msra.mxu0 0
    %2030 = vmatprep.subr.bf16.mxu0 0
    %2031 = vmatpush2.bf16.msra.mxu0 0
    %2032 = vmatprep.subr.bf16.mxu0 0
    %2033 = vmatpush2.bf16.msra.mxu0 0
    %2034 = vmatprep.subr.bf16.mxu0 0
    %2035 = vmatpush2.bf16.msra.mxu0 0
    %2036 = vmatprep.subr.bf16.mxu0 0
    %2037 = vmatpush2.bf16.msra.mxu0 0
    %2038 = vmatprep.subr.bf16.mxu0 0
    %2039 = vmatpush2.bf16.msra.mxu0 0
    %2040 = vmatprep.subr.bf16.mxu0 0
    %2041 = vmatpush2.bf16.msra.mxu0 0
    %2042 = vmatprep.mubr.bf16.mxu0 0
    %2043 = vmatmul.mubr.bf16.gmra.mxu0 %v2004
    %v2044 = vpop.f32.mrf.mxu0
    %v2045 = vadd.f32 0.0, %v2044
    %v2046 = vpop.f32.mrf.mxu0
    %v2047 = vpop.f32.mrf.mxu0
    %v2048 = vpop.f32.mrf.mxu0
    %2049 = vdwg.mxu0
    %v2051 = vsel %vm1810, %v1988, 0
    %v2054 = vsel %vm2006, %v1059, 0
    %2056 = vmatprep.subr.bf16.mxu0 0
    %2057 = vmatpush1.bf16.msra.mxu0 0
    %2058 = vmatprep.subr.bf16.mxu0 0
    %2059 = vmatpush1.bf16.msra.mxu0 0
    %2060 = vmatprep.subr.bf16.mxu0 0
    %2061 = vmatpush1.bf16.msra.mxu0 0
    %2062 = vmatprep.subr.bf16.mxu0 0
    %2063 = vmatpush1.bf16.msra.mxu0 0
    %2064 = vmatprep.subr.bf16.mxu0 0
    %2065 = vmatpush1.bf16.msra.mxu0 0
    %2066 = vmatprep.subr.bf16.mxu0 0
    %2067 = vmatpush1.bf16.msra.mxu0 0
    %2068 = vmatprep.subr.bf16.mxu0 0
    %2069 = vmatpush1.bf16.msra.mxu0 0
    %2070 = vmatprep.subr.bf16.mxu0 0
    %2071 = vmatpush1.bf16.msra.mxu0 %v2054
    %2072 = vmatprep.subr.bf16.mxu0 0
    %2073 = vmatpush2.bf16.msra.mxu0 0
    %2074 = vmatprep.subr.bf16.mxu0 0
    %2075 = vmatpush2.bf16.msra.mxu0 0
    %2076 = vmatprep.subr.bf16.mxu0 0
    %2077 = vmatpush2.bf16.msra.mxu0 0
    %2078 = vmatprep.subr.bf16.mxu0 0
    %2079 = vmatpush2.bf16.msra.mxu0 0
    %2080 = vmatprep.subr.bf16.mxu0 0
    %2081 = vmatpush2.bf16.msra.mxu0 0
    %2082 = vmatprep.subr.bf16.mxu0 0
    %2083 = vmatpush2.bf16.msra.mxu0 0
    %2084 = vmatprep.subr.bf16.mxu0 0
    %2085 = vmatpush2.bf16.msra.mxu0 0
    %2086 = vmatprep.subr.bf16.mxu0 0
    %2087 = vmatpush2.bf16.msra.mxu0 0
    %2088 = vmatprep.mubr.bf16.mxu0 0
    %2089 = vmatmul.mubr.bf16.gmra.mxu0 %v2051
    %v2090 = vpop.f32.mrf.mxu0
    %v2091 = vadd.f32 0.0, %v2090
    %v2092 = vpop.f32.mrf.mxu0
    %v2093 = vpop.f32.mrf.mxu0
    %v2094 = vpop.f32.mrf.mxu0
    %2095 = vdwg.mxu0
    %v2097 = vsel %vm1810, %v1989, 0
    %v2100 = vsel %vm2006, %v1060, 0
    %2102 = vmatprep.subr.bf16.mxu0 0
    %2103 = vmatpush1.bf16.msra.mxu0 0
    %2104 = vmatprep.subr.bf16.mxu0 0
    %2105 = vmatpush1.bf16.msra.mxu0 0
    %2106 = vmatprep.subr.bf16.mxu0 0
    %2107 = vmatpush1.bf16.msra.mxu0 0
    %2108 = vmatprep.subr.bf16.mxu0 0
    %2109 = vmatpush1.bf16.msra.mxu0 0
    %2110 = vmatprep.subr.bf16.mxu0 0
    %2111 = vmatpush1.bf16.msra.mxu0 0
    %2112 = vmatprep.subr.bf16.mxu0 0
    %2113 = vmatpush1.bf16.msra.mxu0 0
    %2114 = vmatprep.subr.bf16.mxu0 0
    %2115 = vmatpush1.bf16.msra.mxu0 0
    %2116 = vmatprep.subr.bf16.mxu0 0
    %2117 = vmatpush1.bf16.msra.mxu0 %v2100
    %2118 = vmatprep.subr.bf16.mxu0 0
    %2119 = vmatpush2.bf16.msra.mxu0 0
    %2120 = vmatprep.subr.bf16.mxu0 0
    %2121 = vmatpush2.bf16.msra.mxu0 0
    %2122 = vmatprep.subr.bf16.mxu0 0
    %2123 = vmatpush2.bf16.msra.mxu0 0
    %2124 = vmatprep.subr.bf16.mxu0 0
    %2125 = vmatpush2.bf16.msra.mxu0 0
    %2126 = vmatprep.subr.bf16.mxu0 0
    %2127 = vmatpush2.bf16.msra.mxu0 0
    %2128 = vmatprep.subr.bf16.mxu0 0
    %2129 = vmatpush2.bf16.msra.mxu0 0
    %2130 = vmatprep.subr.bf16.mxu0 0
    %2131 = vmatpush2.bf16.msra.mxu0 0
    %2132 = vmatprep.subr.bf16.mxu0 0
    %2133 = vmatpush2.bf16.msra.mxu0 0
    %2134 = vmatprep.mubr.bf16.mxu0 0
    %2135 = vmatmul.mubr.bf16.gmra.mxu0 %v2097
    %v2136 = vpop.f32.mrf.mxu0
    %v2137 = vadd.f32 0.0, %v2136
    %v2138 = vpop.f32.mrf.mxu0
    %v2139 = vpop.f32.mrf.mxu0
    %v2140 = vpop.f32.mrf.mxu0
    %2141 = vdwg.mxu0
    %v2143 = vsel %vm1810, %v1990, 0
    %v2146 = vsel %vm2006, %v1061, 0
    %2148 = vmatprep.subr.bf16.mxu0 0
    %2149 = vmatpush1.bf16.msra.mxu0 0
    %2150 = vmatprep.subr.bf16.mxu0 0
    %2151 = vmatpush1.bf16.msra.mxu0 0
    %2152 = vmatprep.subr.bf16.mxu0 0
    %2153 = vmatpush1.bf16.msra.mxu0 0
    %2154 = vmatprep.subr.bf16.mxu0 0
    %2155 = vmatpush1.bf16.msra.mxu0 0
    %2156 = vmatprep.subr.bf16.mxu0 0
    %2157 = vmatpush1.bf16.msra.mxu0 0
    %2158 = vmatprep.subr.bf16.mxu0 0
    %2159 = vmatpush1.bf16.msra.mxu0 0
    %2160 = vmatprep.subr.bf16.mxu0 0
    %2161 = vmatpush1.bf16.msra.mxu0 0
    %2162 = vmatprep.subr.bf16.mxu0 0
    %2163 = vmatpush1.bf16.msra.mxu0 %v2146
    %2164 = vmatprep.subr.bf16.mxu0 0
    %2165 = vmatpush2.bf16.msra.mxu0 0
    %2166 = vmatprep.subr.bf16.mxu0 0
    %2167 = vmatpush2.bf16.msra.mxu0 0
    %2168 = vmatprep.subr.bf16.mxu0 0
    %2169 = vmatpush2.bf16.msra.mxu0 0
    %2170 = vmatprep.subr.bf16.mxu0 0
    %2171 = vmatpush2.bf16.msra.mxu0 0
    %2172 = vmatprep.subr.bf16.mxu0 0
    %2173 = vmatpush2.bf16.msra.mxu0 0
    %2174 = vmatprep.subr.bf16.mxu0 0
    %2175 = vmatpush2.bf16.msra.mxu0 0
    %2176 = vmatprep.subr.bf16.mxu0 0
    %2177 = vmatpush2.bf16.msra.mxu0 0
    %2178 = vmatprep.subr.bf16.mxu0 0
    %2179 = vmatpush2.bf16.msra.mxu0 0
    %2180 = vmatprep.mubr.bf16.mxu0 0
    %2181 = vmatmul.mubr.bf16.gmra.mxu0 %v2143
    %v2182 = vpop.f32.mrf.mxu0
    %v2183 = vadd.f32 0.0, %v2182
    %v2184 = vpop.f32.mrf.mxu0
    %v2185 = vpop.f32.mrf.mxu0
    %v2186 = vpop.f32.mrf.mxu0
    %2187 = vdwg.mxu0
    %v2189 = vsel %vm1810, %v1991, 0
    %v2192 = vsel %vm2006, %v1062, 0
    %2194 = vmatprep.subr.bf16.mxu0 0
    %2195 = vmatpush1.bf16.msra.mxu0 0
    %2196 = vmatprep.subr.bf16.mxu0 0
    %2197 = vmatpush1.bf16.msra.mxu0 0
    %2198 = vmatprep.subr.bf16.mxu0 0
    %2199 = vmatpush1.bf16.msra.mxu0 0
    %2200 = vmatprep.subr.bf16.mxu0 0
    %2201 = vmatpush1.bf16.msra.mxu0 0
    %2202 = vmatprep.subr.bf16.mxu0 0
    %2203 = vmatpush1.bf16.msra.mxu0 0
    %2204 = vmatprep.subr.bf16.mxu0 0
    %2205 = vmatpush1.bf16.msra.mxu0 0
    %2206 = vmatprep.subr.bf16.mxu0 0
    %2207 = vmatpush1.bf16.msra.mxu0 0
    %2208 = vmatprep.subr.bf16.mxu0 0
    %2209 = vmatpush1.bf16.msra.mxu0 %v2192
    %2210 = vmatprep.subr.bf16.mxu0 0
    %2211 = vmatpush2.bf16.msra.mxu0 0
    %2212 = vmatprep.subr.bf16.mxu0 0
    %2213 = vmatpush2.bf16.msra.mxu0 0
    %2214 = vmatprep.subr.bf16.mxu0 0
    %2215 = vmatpush2.bf16.msra.mxu0 0
    %2216 = vmatprep.subr.bf16.mxu0 0
    %2217 = vmatpush2.bf16.msra.mxu0 0
    %2218 = vmatprep.subr.bf16.mxu0 0
    %2219 = vmatpush2.bf16.msra.mxu0 0
    %2220 = vmatprep.subr.bf16.mxu0 0
    %2221 = vmatpush2.bf16.msra.mxu0 0
    %2222 = vmatprep.subr.bf16.mxu0 0
    %2223 = vmatpush2.bf16.msra.mxu0 0
    %2224 = vmatprep.subr.bf16.mxu0 0
    %2225 = vmatpush2.bf16.msra.mxu0 0
    %2226 = vmatprep.mubr.bf16.mxu0 0
    %2227 = vmatmul.mubr.bf16.gmra.mxu0 %v2189
    %v2228 = vpop.f32.mrf.mxu0
    %v2229 = vadd.f32 0.0, %v2228
    %v2230 = vpop.f32.mrf.mxu0
    %v2231 = vpop.f32.mrf.mxu0
    %v2232 = vpop.f32.mrf.mxu0
    %2233 = vdwg.mxu0
    %v2235 = vsel %vm1810, %v1992, 0
    %v2238 = vsel %vm2006, %v1063, 0
    %2240 = vmatprep.subr.bf16.mxu0 0
    %2241 = vmatpush1.bf16.msra.mxu0 0
    %2242 = vmatprep.subr.bf16.mxu0 0
    %2243 = vmatpush1.bf16.msra.mxu0 0
    %2244 = vmatprep.subr.bf16.mxu0 0
    %2245 = vmatpush1.bf16.msra.mxu0 0
    %2246 = vmatprep.subr.bf16.mxu0 0
    %2247 = vmatpush1.bf16.msra.mxu0 0
    %2248 = vmatprep.subr.bf16.mxu0 0
    %2249 = vmatpush1.bf16.msra.mxu0 0
    %2250 = vmatprep.subr.bf16.mxu0 0
    %2251 = vmatpush1.bf16.msra.mxu0 0
    %2252 = vmatprep.subr.bf16.mxu0 0
    %2253 = vmatpush1.bf16.msra.mxu0 0
    %2254 = vmatprep.subr.bf16.mxu0 0
    %2255 = vmatpush1.bf16.msra.mxu0 %v2238
    %2256 = vmatprep.subr.bf16.mxu0 0
    %2257 = vmatpush2.bf16.msra.mxu0 0
    %2258 = vmatprep.subr.bf16.mxu0 0
    %2259 = vmatpush2.bf16.msra.mxu0 0
    %2260 = vmatprep.subr.bf16.mxu0 0
    %2261 = vmatpush2.bf16.msra.mxu0 0
    %2262 = vmatprep.subr.bf16.mxu0 0
    %2263 = vmatpush2.bf16.msra.mxu0 0
    %2264 = vmatprep.subr.bf16.mxu0 0
    %2265 = vmatpush2.bf16.msra.mxu0 0
    %2266 = vmatprep.subr.bf16.mxu0 0
    %2267 = vmatpush2.bf16.msra.mxu0 0
    %2268 = vmatprep.subr.bf16.mxu0 0
    %2269 = vmatpush2.bf16.msra.mxu0 0
    %2270 = vmatprep.subr.bf16.mxu0 0
    %2271 = vmatpush2.bf16.msra.mxu0 0
    %2272 = vmatprep.mubr.bf16.mxu0 0
    %2273 = vmatmul.mubr.bf16.gmra.mxu0 %v2235
    %v2274 = vpop.f32.mrf.mxu0
    %v2275 = vadd.f32 0.0, %v2274
    %v2276 = vpop.f32.mrf.mxu0
    %v2277 = vpop.f32.mrf.mxu0
    %v2278 = vpop.f32.mrf.mxu0
    %2279 = vdwg.mxu0
    %v2281 = vsel %vm1810, %v1993, 0
    %v2284 = vsel %vm2006, %v1064, 0
    %2286 = vmatprep.subr.bf16.mxu0 0
    %2287 = vmatpush1.bf16.msra.mxu0 0
    %2288 = vmatprep.subr.bf16.mxu0 0
    %2289 = vmatpush1.bf16.msra.mxu0 0
    %2290 = vmatprep.subr.bf16.mxu0 0
    %2291 = vmatpush1.bf16.msra.mxu0 0
    %2292 = vmatprep.subr.bf16.mxu0 0
    %2293 = vmatpush1.bf16.msra.mxu0 0
    %2294 = vmatprep.subr.bf16.mxu0 0
    %2295 = vmatpush1.bf16.msra.mxu0 0
    %2296 = vmatprep.subr.bf16.mxu0 0
    %2297 = vmatpush1.bf16.msra.mxu0 0
    %2298 = vmatprep.subr.bf16.mxu0 0
    %2299 = vmatpush1.bf16.msra.mxu0 0
    %2300 = vmatprep.subr.bf16.mxu0 0
    %2301 = vmatpush1.bf16.msra.mxu0 %v2284
    %2302 = vmatprep.subr.bf16.mxu0 0
    %2303 = vmatpush2.bf16.msra.mxu0 0
    %2304 = vmatprep.subr.bf16.mxu0 0
    %2305 = vmatpush2.bf16.msra.mxu0 0
    %2306 = vmatprep.subr.bf16.mxu0 0
    %2307 = vmatpush2.bf16.msra.mxu0 0
    %2308 = vmatprep.subr.bf16.mxu0 0
    %2309 = vmatpush2.bf16.msra.mxu0 0
    %2310 = vmatprep.subr.bf16.mxu0 0
    %2311 = vmatpush2.bf16.msra.mxu0 0
    %2312 = vmatprep.subr.bf16.mxu0 0
    %2313 = vmatpush2.bf16.msra.mxu0 0
    %2314 = vmatprep.subr.bf16.mxu0 0
    %2315 = vmatpush2.bf16.msra.mxu0 0
    %2316 = vmatprep.subr.bf16.mxu0 0
    %2317 = vmatpush2.bf16.msra.mxu0 0
    %2318 = vmatprep.mubr.bf16.mxu0 0
    %2319 = vmatmul.mubr.bf16.gmra.mxu0 %v2281
    %v2320 = vpop.f32.mrf.mxu0
    %v2321 = vadd.f32 0.0, %v2320
    %v2322 = vpop.f32.mrf.mxu0
    %v2323 = vpop.f32.mrf.mxu0
    %v2324 = vpop.f32.mrf.mxu0
    %2325 = vdwg.mxu0
    %v2327 = vsel %vm1810, %v1994, 0
    %v2330 = vsel %vm2006, %v1065, 0
    %2332 = vmatprep.subr.bf16.mxu0 0
    %2333 = vmatpush1.bf16.msra.mxu0 0
    %2334 = vmatprep.subr.bf16.mxu0 0
    %2335 = vmatpush1.bf16.msra.mxu0 0
    %2336 = vmatprep.subr.bf16.mxu0 0
    %2337 = vmatpush1.bf16.msra.mxu0 0
    %2338 = vmatprep.subr.bf16.mxu0 0
    %2339 = vmatpush1.bf16.msra.mxu0 0
    %2340 = vmatprep.subr.bf16.mxu0 0
    %2341 = vmatpush1.bf16.msra.mxu0 0
    %2342 = vmatprep.subr.bf16.mxu0 0
    %2343 = vmatpush1.bf16.msra.mxu0 0
    %2344 = vmatprep.subr.bf16.mxu0 0
    %2345 = vmatpush1.bf16.msra.mxu0 0
    %2346 = vmatprep.subr.bf16.mxu0 0
    %2347 = vmatpush1.bf16.msra.mxu0 %v2330
    %2348 = vmatprep.subr.bf16.mxu0 0
    %2349 = vmatpush2.bf16.msra.mxu0 0
    %2350 = vmatprep.subr.bf16.mxu0 0
    %2351 = vmatpush2.bf16.msra.mxu0 0
    %2352 = vmatprep.subr.bf16.mxu0 0
    %2353 = vmatpush2.bf16.msra.mxu0 0
    %2354 = vmatprep.subr.bf16.mxu0 0
    %2355 = vmatpush2.bf16.msra.mxu0 0
    %2356 = vmatprep.subr.bf16.mxu0 0
    %2357 = vmatpush2.bf16.msra.mxu0 0
    %2358 = vmatprep.subr.bf16.mxu0 0
    %2359 = vmatpush2.bf16.msra.mxu0 0
    %2360 = vmatprep.subr.bf16.mxu0 0
    %2361 = vmatpush2.bf16.msra.mxu0 0
    %2362 = vmatprep.subr.bf16.mxu0 0
    %2363 = vmatpush2.bf16.msra.mxu0 0
    %2364 = vmatprep.mubr.bf16.mxu0 0
    %2365 = vmatmul.mubr.bf16.gmra.mxu0 %v2327
    %v2366 = vpop.f32.mrf.mxu0
    %v2367 = vadd.f32 0.0, %v2366
    %v2368 = vpop.f32.mrf.mxu0
    %v2369 = vpop.f32.mrf.mxu0
    %v2370 = vpop.f32.mrf.mxu0
    %2371 = vdwg.mxu0
    %v2373 = vsel %vm1810, %v1995, 0
    %v2376 = vsel %vm2006, %v1066, 0
    %2378 = vmatprep.subr.bf16.mxu0 0
    %2379 = vmatpush1.bf16.msra.mxu0 0
    %2380 = vmatprep.subr.bf16.mxu0 0
    %2381 = vmatpush1.bf16.msra.mxu0 0
    %2382 = vmatprep.subr.bf16.mxu0 0
    %2383 = vmatpush1.bf16.msra.mxu0 0
    %2384 = vmatprep.subr.bf16.mxu0 0
    %2385 = vmatpush1.bf16.msra.mxu0 0
    %2386 = vmatprep.subr.bf16.mxu0 0
    %2387 = vmatpush1.bf16.msra.mxu0 0
    %2388 = vmatprep.subr.bf16.mxu0 0
    %2389 = vmatpush1.bf16.msra.mxu0 0
    %2390 = vmatprep.subr.bf16.mxu0 0
    %2391 = vmatpush1.bf16.msra.mxu0 0
    %2392 = vmatprep.subr.bf16.mxu0 0
    %2393 = vmatpush1.bf16.msra.mxu0 %v2376
    %2394 = vmatprep.subr.bf16.mxu0 0
    %2395 = vmatpush2.bf16.msra.mxu0 0
    %2396 = vmatprep.subr.bf16.mxu0 0
    %2397 = vmatpush2.bf16.msra.mxu0 0
    %2398 = vmatprep.subr.bf16.mxu0 0
    %2399 = vmatpush2.bf16.msra.mxu0 0
    %2400 = vmatprep.subr.bf16.mxu0 0
    %2401 = vmatpush2.bf16.msra.mxu0 0
    %2402 = vmatprep.subr.bf16.mxu0 0
    %2403 = vmatpush2.bf16.msra.mxu0 0
    %2404 = vmatprep.subr.bf16.mxu0 0
    %2405 = vmatpush2.bf16.msra.mxu0 0
    %2406 = vmatprep.subr.bf16.mxu0 0
    %2407 = vmatpush2.bf16.msra.mxu0 0
    %2408 = vmatprep.subr.bf16.mxu0 0
    %2409 = vmatpush2.bf16.msra.mxu0 0
    %2410 = vmatprep.mubr.bf16.mxu0 0
    %2411 = vmatmul.mubr.bf16.gmra.mxu0 %v2373
    %v2412 = vpop.f32.mrf.mxu0
    %v2413 = vadd.f32 0.0, %v2412
    %v2414 = vpop.f32.mrf.mxu0
    %v2415 = vpop.f32.mrf.mxu0
    %v2416 = vpop.f32.mrf.mxu0
    %2417 = vdwg.mxu0
    %v2419 = vsel %vm1810, %v1996, 0
    %v2422 = vsel %vm2006, %v1067, 0
    %2424 = vmatprep.subr.bf16.mxu0 0
    %2425 = vmatpush1.bf16.msra.mxu0 0
    %2426 = vmatprep.subr.bf16.mxu0 0
    %2427 = vmatpush1.bf16.msra.mxu0 0
    %2428 = vmatprep.subr.bf16.mxu0 0
    %2429 = vmatpush1.bf16.msra.mxu0 0
    %2430 = vmatprep.subr.bf16.mxu0 0
    %2431 = vmatpush1.bf16.msra.mxu0 0
    %2432 = vmatprep.subr.bf16.mxu0 0
    %2433 = vmatpush1.bf16.msra.mxu0 0
    %2434 = vmatprep.subr.bf16.mxu0 0
    %2435 = vmatpush1.bf16.msra.mxu0 0
    %2436 = vmatprep.subr.bf16.mxu0 0
    %2437 = vmatpush1.bf16.msra.mxu0 0
    %2438 = vmatprep.subr.bf16.mxu0 0
    %2439 = vmatpush1.bf16.msra.mxu0 %v2422
    %2440 = vmatprep.subr.bf16.mxu0 0
    %2441 = vmatpush2.bf16.msra.mxu0 0
    %2442 = vmatprep.subr.bf16.mxu0 0
    %2443 = vmatpush2.bf16.msra.mxu0 0
    %2444 = vmatprep.subr.bf16.mxu0 0
    %2445 = vmatpush2.bf16.msra.mxu0 0
    %2446 = vmatprep.subr.bf16.mxu0 0
    %2447 = vmatpush2.bf16.msra.mxu0 0
    %2448 = vmatprep.subr.bf16.mxu0 0
    %2449 = vmatpush2.bf16.msra.mxu0 0
    %2450 = vmatprep.subr.bf16.mxu0 0
    %2451 = vmatpush2.bf16.msra.mxu0 0
    %2452 = vmatprep.subr.bf16.mxu0 0
    %2453 = vmatpush2.bf16.msra.mxu0 0
    %2454 = vmatprep.subr.bf16.mxu0 0
    %2455 = vmatpush2.bf16.msra.mxu0 0
    %2456 = vmatprep.mubr.bf16.mxu0 0
    %2457 = vmatmul.mubr.bf16.gmra.mxu0 %v2419
    %v2458 = vpop.f32.mrf.mxu0
    %v2459 = vadd.f32 0.0, %v2458
    %v2460 = vpop.f32.mrf.mxu0
    %v2461 = vpop.f32.mrf.mxu0
    %v2462 = vpop.f32.mrf.mxu0
    %2463 = vdwg.mxu0
    %v2465 = vsel %vm1810, %v1997, 0
    %v2468 = vsel %vm2006, %v1068, 0
    %2470 = vmatprep.subr.bf16.mxu0 0
    %2471 = vmatpush1.bf16.msra.mxu0 0
    %2472 = vmatprep.subr.bf16.mxu0 0
    %2473 = vmatpush1.bf16.msra.mxu0 0
    %2474 = vmatprep.subr.bf16.mxu0 0
    %2475 = vmatpush1.bf16.msra.mxu0 0
    %2476 = vmatprep.subr.bf16.mxu0 0
    %2477 = vmatpush1.bf16.msra.mxu0 0
    %2478 = vmatprep.subr.bf16.mxu0 0
    %2479 = vmatpush1.bf16.msra.mxu0 0
    %2480 = vmatprep.subr.bf16.mxu0 0
    %2481 = vmatpush1.bf16.msra.mxu0 0
    %2482 = vmatprep.subr.bf16.mxu0 0
    %2483 = vmatpush1.bf16.msra.mxu0 0
    %2484 = vmatprep.subr.bf16.mxu0 0
    %2485 = vmatpush1.bf16.msra.mxu0 %v2468
    %2486 = vmatprep.subr.bf16.mxu0 0
    %2487 = vmatpush2.bf16.msra.mxu0 0
    %2488 = vmatprep.subr.bf16.mxu0 0
    %2489 = vmatpush2.bf16.msra.mxu0 0
    %2490 = vmatprep.subr.bf16.mxu0 0
    %2491 = vmatpush2.bf16.msra.mxu0 0
    %2492 = vmatprep.subr.bf16.mxu0 0
    %2493 = vmatpush2.bf16.msra.mxu0 0
    %2494 = vmatprep.subr.bf16.mxu0 0
    %2495 = vmatpush2.bf16.msra.mxu0 0
    %2496 = vmatprep.subr.bf16.mxu0 0
    %2497 = vmatpush2.bf16.msra.mxu0 0
    %2498 = vmatprep.subr.bf16.mxu0 0
    %2499 = vmatpush2.bf16.msra.mxu0 0
    %2500 = vmatprep.subr.bf16.mxu0 0
    %2501 = vmatpush2.bf16.msra.mxu0 0
    %2502 = vmatprep.mubr.bf16.mxu0 0
    %2503 = vmatmul.mubr.bf16.gmra.mxu0 %v2465
    %v2504 = vpop.f32.mrf.mxu0
    %v2505 = vadd.f32 0.0, %v2504
    %v2506 = vpop.f32.mrf.mxu0
    %v2507 = vpop.f32.mrf.mxu0
    %v2508 = vpop.f32.mrf.mxu0
    %2509 = vdwg.mxu0
    %v2511 = vsel %vm1810, %v1998, 0
    %v2514 = vsel %vm2006, %v1069, 0
    %2516 = vmatprep.subr.bf16.mxu0 0
    %2517 = vmatpush1.bf16.msra.mxu0 0
    %2518 = vmatprep.subr.bf16.mxu0 0
    %2519 = vmatpush1.bf16.msra.mxu0 0
    %2520 = vmatprep.subr.bf16.mxu0 0
    %2521 = vmatpush1.bf16.msra.mxu0 0
    %2522 = vmatprep.subr.bf16.mxu0 0
    %2523 = vmatpush1.bf16.msra.mxu0 0
    %2524 = vmatprep.subr.bf16.mxu0 0
    %2525 = vmatpush1.bf16.msra.mxu0 0
    %2526 = vmatprep.subr.bf16.mxu0 0
    %2527 = vmatpush1.bf16.msra.mxu0 0
    %2528 = vmatprep.subr.bf16.mxu0 0
    %2529 = vmatpush1.bf16.msra.mxu0 0
    %2530 = vmatprep.subr.bf16.mxu0 0
    %2531 = vmatpush1.bf16.msra.mxu0 %v2514
    %2532 = vmatprep.subr.bf16.mxu0 0
    %2533 = vmatpush2.bf16.msra.mxu0 0
    %2534 = vmatprep.subr.bf16.mxu0 0
    %2535 = vmatpush2.bf16.msra.mxu0 0
    %2536 = vmatprep.subr.bf16.mxu0 0
    %2537 = vmatpush2.bf16.msra.mxu0 0
    %2538 = vmatprep.subr.bf16.mxu0 0
    %2539 = vmatpush2.bf16.msra.mxu0 0
    %2540 = vmatprep.subr.bf16.mxu0 0
    %2541 = vmatpush2.bf16.msra.mxu0 0
    %2542 = vmatprep.subr.bf16.mxu0 0
    %2543 = vmatpush2.bf16.msra.mxu0 0
    %2544 = vmatprep.subr.bf16.mxu0 0
    %2545 = vmatpush2.bf16.msra.mxu0 0
    %2546 = vmatprep.subr.bf16.mxu0 0
    %2547 = vmatpush2.bf16.msra.mxu0 0
    %2548 = vmatprep.mubr.bf16.mxu0 0
    %2549 = vmatmul.mubr.bf16.gmra.mxu0 %v2511
    %v2550 = vpop.f32.mrf.mxu0
    %v2551 = vadd.f32 0.0, %v2550
    %v2552 = vpop.f32.mrf.mxu0
    %v2553 = vpop.f32.mrf.mxu0
    %v2554 = vpop.f32.mrf.mxu0
    %2555 = vdwg.mxu0
    %v2557 = vsel %vm1810, %v1999, 0
    %v2560 = vsel %vm2006, %v1070, 0
    %2562 = vmatprep.subr.bf16.mxu0 0
    %2563 = vmatpush1.bf16.msra.mxu0 0
    %2564 = vmatprep.subr.bf16.mxu0 0
    %2565 = vmatpush1.bf16.msra.mxu0 0
    %2566 = vmatprep.subr.bf16.mxu0 0
    %2567 = vmatpush1.bf16.msra.mxu0 0
    %2568 = vmatprep.subr.bf16.mxu0 0
    %2569 = vmatpush1.bf16.msra.mxu0 0
    %2570 = vmatprep.subr.bf16.mxu0 0
    %2571 = vmatpush1.bf16.msra.mxu0 0
    %2572 = vmatprep.subr.bf16.mxu0 0
    %2573 = vmatpush1.bf16.msra.mxu0 0
    %2574 = vmatprep.subr.bf16.mxu0 0
    %2575 = vmatpush1.bf16.msra.mxu0 0
    %2576 = vmatprep.subr.bf16.mxu0 0
    %2577 = vmatpush1.bf16.msra.mxu0 %v2560
    %2578 = vmatprep.subr.bf16.mxu0 0
    %2579 = vmatpush2.bf16.msra.mxu0 0
    %2580 = vmatprep.subr.bf16.mxu0 0
    %2581 = vmatpush2.bf16.msra.mxu0 0
    %2582 = vmatprep.subr.bf16.mxu0 0
    %2583 = vmatpush2.bf16.msra.mxu0 0
    %2584 = vmatprep.subr.bf16.mxu0 0
    %2585 = vmatpush2.bf16.msra.mxu0 0
    %2586 = vmatprep.subr.bf16.mxu0 0
    %2587 = vmatpush2.bf16.msra.mxu0 0
    %2588 = vmatprep.subr.bf16.mxu0 0
    %2589 = vmatpush2.bf16.msra.mxu0 0
    %2590 = vmatprep.subr.bf16.mxu0 0
    %2591 = vmatpush2.bf16.msra.mxu0 0
    %2592 = vmatprep.subr.bf16.mxu0 0
    %2593 = vmatpush2.bf16.msra.mxu0 0
    %2594 = vmatprep.mubr.bf16.mxu0 0
    %2595 = vmatmul.mubr.bf16.gmra.mxu0 %v2557
    %v2596 = vpop.f32.mrf.mxu0
    %v2597 = vadd.f32 0.0, %v2596
    %v2598 = vpop.f32.mrf.mxu0
    %v2599 = vpop.f32.mrf.mxu0
    %v2600 = vpop.f32.mrf.mxu0
    %2601 = vdwg.mxu0
    %v2603 = vsel %vm1810, %v2000, 0
    %v2606 = vsel %vm2006, %v1071, 0
    %2608 = vmatprep.subr.bf16.mxu0 0
    %2609 = vmatpush1.bf16.msra.mxu0 0
    %2610 = vmatprep.subr.bf16.mxu0 0
    %2611 = vmatpush1.bf16.msra.mxu0 0
    %2612 = vmatprep.subr.bf16.mxu0 0
    %2613 = vmatpush1.bf16.msra.mxu0 0
    %2614 = vmatprep.subr.bf16.mxu0 0
    %2615 = vmatpush1.bf16.msra.mxu0 0
    %2616 = vmatprep.subr.bf16.mxu0 0
    %2617 = vmatpush1.bf16.msra.mxu0 0
    %2618 = vmatprep.subr.bf16.mxu0 0
    %2619 = vmatpush1.bf16.msra.mxu0 0
    %2620 = vmatprep.subr.bf16.mxu0 0
    %2621 = vmatpush1.bf16.msra.mxu0 0
    %2622 = vmatprep.subr.bf16.mxu0 0
    %2623 = vmatpush1.bf16.msra.mxu0 %v2606
    %2624 = vmatprep.subr.bf16.mxu0 0
    %2625 = vmatpush2.bf16.msra.mxu0 0
    %2626 = vmatprep.subr.bf16.mxu0 0
    %2627 = vmatpush2.bf16.msra.mxu0 0
    %2628 = vmatprep.subr.bf16.mxu0 0
    %2629 = vmatpush2.bf16.msra.mxu0 0
    %2630 = vmatprep.subr.bf16.mxu0 0
    %2631 = vmatpush2.bf16.msra.mxu0 0
    %2632 = vmatprep.subr.bf16.mxu0 0
    %2633 = vmatpush2.bf16.msra.mxu0 0
    %2634 = vmatprep.subr.bf16.mxu0 0
    %2635 = vmatpush2.bf16.msra.mxu0 0
    %2636 = vmatprep.subr.bf16.mxu0 0
    %2637 = vmatpush2.bf16.msra.mxu0 0
    %2638 = vmatprep.subr.bf16.mxu0 0
    %2639 = vmatpush2.bf16.msra.mxu0 0
    %2640 = vmatprep.mubr.bf16.mxu0 0
    %2641 = vmatmul.mubr.bf16.gmra.mxu0 %v2603
    %v2642 = vpop.f32.mrf.mxu0
    %v2643 = vadd.f32 0.0, %v2642
    %v2644 = vpop.f32.mrf.mxu0
    %v2645 = vpop.f32.mrf.mxu0
    %v2646 = vpop.f32.mrf.mxu0
    %2647 = vdwg.mxu0
    %v2649 = vsel %vm1810, %v2001, 0
    %v2652 = vsel %vm2006, %v1072, 0
    %2654 = vmatprep.subr.bf16.mxu0 0
    %2655 = vmatpush1.bf16.msra.mxu0 0
    %2656 = vmatprep.subr.bf16.mxu0 0
    %2657 = vmatpush1.bf16.msra.mxu0 0
    %2658 = vmatprep.subr.bf16.mxu0 0
    %2659 = vmatpush1.bf16.msra.mxu0 0
    %2660 = vmatprep.subr.bf16.mxu0 0
    %2661 = vmatpush1.bf16.msra.mxu0 0
    %2662 = vmatprep.subr.bf16.mxu0 0
    %2663 = vmatpush1.bf16.msra.mxu0 0
    %2664 = vmatprep.subr.bf16.mxu0 0
    %2665 = vmatpush1.bf16.msra.mxu0 0
    %2666 = vmatprep.subr.bf16.mxu0 0
    %2667 = vmatpush1.bf16.msra.mxu0 0
    %2668 = vmatprep.subr.bf16.mxu0 0
    %2669 = vmatpush1.bf16.msra.mxu0 %v2652
    %2670 = vmatprep.subr.bf16.mxu0 0
    %2671 = vmatpush2.bf16.msra.mxu0 0
    %2672 = vmatprep.subr.bf16.mxu0 0
    %2673 = vmatpush2.bf16.msra.mxu0 0
    %2674 = vmatprep.subr.bf16.mxu0 0
    %2675 = vmatpush2.bf16.msra.mxu0 0
    %2676 = vmatprep.subr.bf16.mxu0 0
    %2677 = vmatpush2.bf16.msra.mxu0 0
    %2678 = vmatprep.subr.bf16.mxu0 0
    %2679 = vmatpush2.bf16.msra.mxu0 0
    %2680 = vmatprep.subr.bf16.mxu0 0
    %2681 = vmatpush2.bf16.msra.mxu0 0
    %2682 = vmatprep.subr.bf16.mxu0 0
    %2683 = vmatpush2.bf16.msra.mxu0 0
    %2684 = vmatprep.subr.bf16.mxu0 0
    %2685 = vmatpush2.bf16.msra.mxu0 0
    %2686 = vmatprep.mubr.bf16.mxu0 0
    %2687 = vmatmul.mubr.bf16.gmra.mxu0 %v2649
    %v2688 = vpop.f32.mrf.mxu0
    %v2689 = vadd.f32 0.0, %v2688
    %v2690 = vpop.f32.mrf.mxu0
    %v2691 = vpop.f32.mrf.mxu0
    %v2692 = vpop.f32.mrf.mxu0
    %2693 = vdwg.mxu0
    %v2695 = vsel %vm1810, %v2002, 0
    %v2698 = vsel %vm2006, %v1073, 0
    %2700 = vmatprep.subr.bf16.mxu0 0
    %2701 = vmatpush1.bf16.msra.mxu0 0
    %2702 = vmatprep.subr.bf16.mxu0 0
    %2703 = vmatpush1.bf16.msra.mxu0 0
    %2704 = vmatprep.subr.bf16.mxu0 0
    %2705 = vmatpush1.bf16.msra.mxu0 0
    %2706 = vmatprep.subr.bf16.mxu0 0
    %2707 = vmatpush1.bf16.msra.mxu0 0
    %2708 = vmatprep.subr.bf16.mxu0 0
    %2709 = vmatpush1.bf16.msra.mxu0 0
    %2710 = vmatprep.subr.bf16.mxu0 0
    %2711 = vmatpush1.bf16.msra.mxu0 0
    %2712 = vmatprep.subr.bf16.mxu0 0
    %2713 = vmatpush1.bf16.msra.mxu0 0
    %2714 = vmatprep.subr.bf16.mxu0 0
    %2715 = vmatpush1.bf16.msra.mxu0 %v2698
    %2716 = vmatprep.subr.bf16.mxu0 0
    %2717 = vmatpush2.bf16.msra.mxu0 0
    %2718 = vmatprep.subr.bf16.mxu0 0
    %2719 = vmatpush2.bf16.msra.mxu0 0
    %2720 = vmatprep.subr.bf16.mxu0 0
    %2721 = vmatpush2.bf16.msra.mxu0 0
    %2722 = vmatprep.subr.bf16.mxu0 0
    %2723 = vmatpush2.bf16.msra.mxu0 0
    %2724 = vmatprep.subr.bf16.mxu0 0
    %2725 = vmatpush2.bf16.msra.mxu0 0
    %2726 = vmatprep.subr.bf16.mxu0 0
    %2727 = vmatpush2.bf16.msra.mxu0 0
    %2728 = vmatprep.subr.bf16.mxu0 0
    %2729 = vmatpush2.bf16.msra.mxu0 0
    %2730 = vmatprep.subr.bf16.mxu0 0
    %2731 = vmatpush2.bf16.msra.mxu0 0
    %2732 = vmatprep.mubr.bf16.mxu0 0
    %2733 = vmatmul.mubr.bf16.gmra.mxu0 %v2695
    %v2734 = vpop.f32.mrf.mxu0
    %v2735 = vadd.f32 0.0, %v2734
    %v2736 = vpop.f32.mrf.mxu0
    %v2737 = vpop.f32.mrf.mxu0
    %v2738 = vpop.f32.mrf.mxu0
    %2739 = vdwg.mxu0
    %2740 = vst.msk [vmem:[#allocation2] sm:$0xff] %vm107, %v2045
    %2741 = vst.msk [vmem:[#allocation2 + $0x20] sm:$0xff] %vm107, %v2091
    %2744 = vrot.lane.b32.xlu0 %v2137, 64
    %v2745 = vpop.permute.xlu0 %2744
    %2746 = vrot.lane.b32.xlu0 %v2183, 64
    %v2747 = vpop.permute.xlu0 %2746
    %vm2750 = vcmask 1048064
    %2751 = vst.msk [vmem:[#allocation2] sm:$0xff] %vm2750, %v2745
    %2752 = vst.msk [vmem:[#allocation2 + $0x20] sm:$0xff] %vm2750, %v2747
    %2753 = vst.msk [vmem:[#allocation2 + $0x8] sm:$0xff] %vm107, %v2229
    %2754 = vst.msk [vmem:[#allocation2 + $0x28] sm:$0xff] %vm107, %v2275
    %2757 = vrot.lane.b32.xlu0 %v2321, 64
    %v2758 = vpop.permute.xlu0 %2757
    %2759 = vrot.lane.b32.xlu0 %v2367, 64
    %v2760 = vpop.permute.xlu0 %2759
    %2763 = vst.msk [vmem:[#allocation2 + $0x8] sm:$0xff] %vm2750, %v2758
    %2764 = vst.msk [vmem:[#allocation2 + $0x28] sm:$0xff] %vm2750, %v2760
    %2765 = vst.msk [vmem:[#allocation2 + $0x10] sm:$0xff] %vm107, %v2413
    %2766 = vst.msk [vmem:[#allocation2 + $0x30] sm:$0xff] %vm107, %v2459
    %2769 = vrot.lane.b32.xlu0 %v2505, 64
    %v2770 = vpop.permute.xlu0 %2769
    %2771 = vrot.lane.b32.xlu0 %v2551, 64
    %v2772 = vpop.permute.xlu0 %2771
    %2775 = vst.msk [vmem:[#allocation2 + $0x10] sm:$0xff] %vm2750, %v2770
    %2776 = vst.msk [vmem:[#allocation2 + $0x30] sm:$0xff] %vm2750, %v2772
    %2777 = vst.msk [vmem:[#allocation2 + $0x18] sm:$0xff] %vm107, %v2597
    %2778 = vst.msk [vmem:[#allocation2 + $0x38] sm:$0xff] %vm107, %v2643
    %2781 = vrot.lane.b32.xlu0 %v2689, 64
    %v2782 = vpop.permute.xlu0 %2781
    %2783 = vrot.lane.b32.xlu0 %v2735, 64
    %v2784 = vpop.permute.xlu0 %2783
    %2787 = vst.msk [vmem:[#allocation2 + $0x18] sm:$0xff] %vm2750, %v2782
    %2788 = vst.msk [vmem:[#allocation2 + $0x38] sm:$0xff] %vm2750, %v2784
    %v2789 = vld [vmem:[#allocation2] sm:$0xff]
    %v2790 = vld [vmem:[#allocation2 + $0x8] sm:$0xff]
    %v2791 = vld [vmem:[#allocation2 + $0x10] sm:$0xff]
    %v2792 = vld [vmem:[#allocation2 + $0x18] sm:$0xff]
    %v2793 = vld [vmem:[#allocation2 + $0x20] sm:$0xff]
    %v2794 = vld [vmem:[#allocation2 + $0x28] sm:$0xff]
    %v2795 = vld [vmem:[#allocation2 + $0x30] sm:$0xff]
    %v2796 = vld [vmem:[#allocation2 + $0x38] sm:$0xff]
    %v2797 = vpack.c.bf16 %v2793, %v2789
    %v2798 = vpack.c.bf16 %v2794, %v2790
    %v2799 = vpack.c.bf16 %v2795, %v2791
    %v2800 = vpack.c.bf16 %v2796, %v2792
    %v2801 = vld [vmem:[#allocation3] sm:$0xff]
    %v2802 = vld [vmem:[#allocation3 + $0x8] sm:$0xff]
    %v2803 = vld [vmem:[#allocation3 + $0x10] sm:$0xff]
    %v2804 = vld [vmem:[#allocation3 + $0x18] sm:$0xff]
    %v2805 = vld [vmem:[#allocation3 + $0x20] sm:$0xff]
    %v2806 = vld [vmem:[#allocation3 + $0x28] sm:$0xff]
    %v2807 = vld [vmem:[#allocation3 + $0x30] sm:$0xff]
    %v2808 = vld [vmem:[#allocation3 + $0x38] sm:$0xff]
    %v2809 = vld [vmem:[#allocation3 + $0x40] sm:$0xff]
    %v2810 = vld [vmem:[#allocation3 + $0x48] sm:$0xff]
    %v2811 = vld [vmem:[#allocation3 + $0x50] sm:$0xff]
    %v2812 = vld [vmem:[#allocation3 + $0x58] sm:$0xff]
    %v2813 = vld [vmem:[#allocation3 + $0x60] sm:$0xff]
    %v2814 = vld [vmem:[#allocation3 + $0x68] sm:$0xff]
    %v2815 = vld [vmem:[#allocation3 + $0x70] sm:$0xff]
    %v2816 = vld [vmem:[#allocation3 + $0x78] sm:$0xff]
    %v2817 = vld [vmem:[#allocation3 + $0x80] sm:$0xff]
    %v2818 = vld [vmem:[#allocation3 + $0x88] sm:$0xff]
    %v2819 = vld [vmem:[#allocation3 + $0x90] sm:$0xff]
    %v2820 = vld [vmem:[#allocation3 + $0x98] sm:$0xff]
    %v2821 = vld [vmem:[#allocation3 + $0xa0] sm:$0xff]
    %v2822 = vld [vmem:[#allocation3 + $0xa8] sm:$0xff]
    %v2823 = vld [vmem:[#allocation3 + $0xb0] sm:$0xff]
    %v2824 = vld [vmem:[#allocation3 + $0xb8] sm:$0xff]
    %v2825 = vld [vmem:[#allocation3 + $0xc0] sm:$0xff]
    %v2826 = vld [vmem:[#allocation3 + $0xc8] sm:$0xff]
    %v2827 = vld [vmem:[#allocation3 + $0xd0] sm:$0xff]
    %v2828 = vld [vmem:[#allocation3 + $0xd8] sm:$0xff]
    %v2829 = vld [vmem:[#allocation3 + $0xe0] sm:$0xff]
    %v2830 = vld [vmem:[#allocation3 + $0xe8] sm:$0xff]
    %v2831 = vld [vmem:[#allocation3 + $0xf0] sm:$0xff]
    %v2832 = vld [vmem:[#allocation3 + $0xf8] sm:$0xff]
    %v2833 = vld [vmem:[#allocation3 + $0x100] sm:$0xff]
    %v2834 = vld [vmem:[#allocation3 + $0x108] sm:$0xff]
    %v2835 = vld [vmem:[#allocation3 + $0x110] sm:$0xff]
    %v2836 = vld [vmem:[#allocation3 + $0x118] sm:$0xff]
    %v2837 = vld [vmem:[#allocation3 + $0x120] sm:$0xff]
    %v2838 = vld [vmem:[#allocation3 + $0x128] sm:$0xff]
    %v2839 = vld [vmem:[#allocation3 + $0x130] sm:$0xff]
    %v2840 = vld [vmem:[#allocation3 + $0x138] sm:$0xff]
    %v2841 = vld [vmem:[#allocation3 + $0x140] sm:$0xff]
    %v2842 = vld [vmem:[#allocation3 + $0x148] sm:$0xff]
    %v2843 = vld [vmem:[#allocation3 + $0x150] sm:$0xff]
    %v2844 = vld [vmem:[#allocation3 + $0x158] sm:$0xff]
    %v2845 = vld [vmem:[#allocation3 + $0x160] sm:$0xff]
    %v2846 = vld [vmem:[#allocation3 + $0x168] sm:$0xff]
    %v2847 = vld [vmem:[#allocation3 + $0x170] sm:$0xff]
    %v2848 = vld [vmem:[#allocation3 + $0x178] sm:$0xff]
    %v2849 = vld [vmem:[#allocation3 + $0x180] sm:$0xff]
    %v2850 = vld [vmem:[#allocation3 + $0x188] sm:$0xff]
    %v2851 = vld [vmem:[#allocation3 + $0x190] sm:$0xff]
    %v2852 = vld [vmem:[#allocation3 + $0x198] sm:$0xff]
    %v2853 = vld [vmem:[#allocation3 + $0x1a0] sm:$0xff]
    %v2854 = vld [vmem:[#allocation3 + $0x1a8] sm:$0xff]
    %v2855 = vld [vmem:[#allocation3 + $0x1b0] sm:$0xff]
    %v2856 = vld [vmem:[#allocation3 + $0x1b8] sm:$0xff]
    %v2857 = vld [vmem:[#allocation3 + $0x1c0] sm:$0xff]
    %v2858 = vld [vmem:[#allocation3 + $0x1c8] sm:$0xff]
    %v2859 = vld [vmem:[#allocation3 + $0x1d0] sm:$0xff]
    %v2860 = vld [vmem:[#allocation3 + $0x1d8] sm:$0xff]
    %v2861 = vld [vmem:[#allocation3 + $0x1e0] sm:$0xff]
    %v2862 = vld [vmem:[#allocation3 + $0x1e8] sm:$0xff]
    %v2863 = vld [vmem:[#allocation3 + $0x1f0] sm:$0xff]
    %v2864 = vld [vmem:[#allocation3 + $0x1f8] sm:$0xff]
    %v2865 = vld [vmem:[#allocation3 + $0x200] sm:$0xff]
    %v2866 = vld [vmem:[#allocation3 + $0x208] sm:$0xff]
    %v2867 = vld [vmem:[#allocation3 + $0x210] sm:$0xff]
    %v2868 = vld [vmem:[#allocation3 + $0x218] sm:$0xff]
    %v2869 = vld [vmem:[#allocation3 + $0x220] sm:$0xff]
    %v2870 = vld [vmem:[#allocation3 + $0x228] sm:$0xff]
    %v2871 = vld [vmem:[#allocation3 + $0x230] sm:$0xff]
    %v2872 = vld [vmem:[#allocation3 + $0x238] sm:$0xff]
    %v2873 = vld [vmem:[#allocation3 + $0x240] sm:$0xff]
    %v2874 = vld [vmem:[#allocation3 + $0x248] sm:$0xff]
    %v2875 = vld [vmem:[#allocation3 + $0x250] sm:$0xff]
    %v2876 = vld [vmem:[#allocation3 + $0x258] sm:$0xff]
    %v2877 = vld [vmem:[#allocation3 + $0x260] sm:$0xff]
    %v2878 = vld [vmem:[#allocation3 + $0x268] sm:$0xff]
    %v2879 = vld [vmem:[#allocation3 + $0x270] sm:$0xff]
    %v2880 = vld [vmem:[#allocation3 + $0x278] sm:$0xff]
    %v2881 = vld [vmem:[#allocation3 + $0x280] sm:$0xff]
    %v2882 = vld [vmem:[#allocation3 + $0x288] sm:$0xff]
    %v2883 = vld [vmem:[#allocation3 + $0x290] sm:$0xff]
    %v2884 = vld [vmem:[#allocation3 + $0x298] sm:$0xff]
    %v2885 = vld [vmem:[#allocation3 + $0x2a0] sm:$0xff]
    %v2886 = vld [vmem:[#allocation3 + $0x2a8] sm:$0xff]
    %v2887 = vld [vmem:[#allocation3 + $0x2b0] sm:$0xff]
    %v2888 = vld [vmem:[#allocation3 + $0x2b8] sm:$0xff]
    %v2889 = vld [vmem:[#allocation3 + $0x2c0] sm:$0xff]
    %v2890 = vld [vmem:[#allocation3 + $0x2c8] sm:$0xff]
    %v2891 = vld [vmem:[#allocation3 + $0x2d0] sm:$0xff]
    %v2892 = vld [vmem:[#allocation3 + $0x2d8] sm:$0xff]
    %v2893 = vld [vmem:[#allocation3 + $0x2e0] sm:$0xff]
    %v2894 = vld [vmem:[#allocation3 + $0x2e8] sm:$0xff]
    %v2895 = vld [vmem:[#allocation3 + $0x2f0] sm:$0xff]
    %v2896 = vld [vmem:[#allocation3 + $0x2f8] sm:$0xff]
    %v2897 = vld [vmem:[#allocation3 + $0x300] sm:$0xff]
    %v2898 = vld [vmem:[#allocation3 + $0x308] sm:$0xff]
    %v2899 = vld [vmem:[#allocation3 + $0x310] sm:$0xff]
    %v2900 = vld [vmem:[#allocation3 + $0x318] sm:$0xff]
    %v2901 = vld [vmem:[#allocation3 + $0x320] sm:$0xff]
    %v2902 = vld [vmem:[#allocation3 + $0x328] sm:$0xff]
    %v2903 = vld [vmem:[#allocation3 + $0x330] sm:$0xff]
    %v2904 = vld [vmem:[#allocation3 + $0x338] sm:$0xff]
    %v2905 = vld [vmem:[#allocation3 + $0x340] sm:$0xff]
    %v2906 = vld [vmem:[#allocation3 + $0x348] sm:$0xff]
    %v2907 = vld [vmem:[#allocation3 + $0x350] sm:$0xff]
    %v2908 = vld [vmem:[#allocation3 + $0x358] sm:$0xff]
    %v2909 = vld [vmem:[#allocation3 + $0x360] sm:$0xff]
    %v2910 = vld [vmem:[#allocation3 + $0x368] sm:$0xff]
    %v2911 = vld [vmem:[#allocation3 + $0x370] sm:$0xff]
    %v2912 = vld [vmem:[#allocation3 + $0x378] sm:$0xff]
    %v2913 = vld [vmem:[#allocation3 + $0x380] sm:$0xff]
    %v2914 = vld [vmem:[#allocation3 + $0x388] sm:$0xff]
    %v2915 = vld [vmem:[#allocation3 + $0x390] sm:$0xff]
    %v2916 = vld [vmem:[#allocation3 + $0x398] sm:$0xff]
    %v2917 = vld [vmem:[#allocation3 + $0x3a0] sm:$0xff]
    %v2918 = vld [vmem:[#allocation3 + $0x3a8] sm:$0xff]
    %v2919 = vld [vmem:[#allocation3 + $0x3b0] sm:$0xff]
    %v2920 = vld [vmem:[#allocation3 + $0x3b8] sm:$0xff]
    %v2921 = vld [vmem:[#allocation3 + $0x3c0] sm:$0xff]
    %v2922 = vld [vmem:[#allocation3 + $0x3c8] sm:$0xff]
    %v2923 = vld [vmem:[#allocation3 + $0x3d0] sm:$0xff]
    %v2924 = vld [vmem:[#allocation3 + $0x3d8] sm:$0xff]
    %v2925 = vld [vmem:[#allocation3 + $0x3e0] sm:$0xff]
    %v2926 = vld [vmem:[#allocation3 + $0x3e8] sm:$0xff]
    %v2927 = vld [vmem:[#allocation3 + $0x3f0] sm:$0xff]
    %v2928 = vld [vmem:[#allocation3 + $0x3f8] sm:$0xff]
    %v2929 = vld [vmem:[%s9] sm:$0xf]
    %v2931 = vlaneseq
    %v2932 = vshrl.u32 %v2931, 7
    %v2933 = vsub.s32 0, %v2932
    %v2934 = vrot.slane %v2929, %v2933
    %v2935 = vlaneseq
    %v2936 = vshrl.u32 %v2935, 7
    %v2937 = vsub.s32 1, %v2936
    %v2938 = vrot.slane %v2929, %v2937
    %v2939 = vlaneseq
    %v2940 = vshrl.u32 %v2939, 7
    %v2941 = vsub.s32 2, %v2940
    %v2942 = vrot.slane %v2929, %v2941
    %v2943 = vlaneseq
    %v2944 = vshrl.u32 %v2943, 7
    %v2945 = vsub.s32 3, %v2944
    %v2946 = vrot.slane %v2929, %v2945
    %v3079 = vunpack.c.l.b16 %v2801
    %v3080 = vunpack.c.h.b16 %v2801
    %v3081 = vunpack.c.l.b16 %v2802
    %v3082 = vunpack.c.h.b16 %v2802
    %v3083 = vunpack.c.l.b16 %v2803
    %v3084 = vunpack.c.h.b16 %v2803
    %v3085 = vunpack.c.l.b16 %v2804
    %v3086 = vunpack.c.h.b16 %v2804
    %v3087 = vunpack.c.l.b16 %v2805
    %v3088 = vunpack.c.h.b16 %v2805
    %v3089 = vunpack.c.l.b16 %v2806
    %v3090 = vunpack.c.h.b16 %v2806
    %v3091 = vunpack.c.l.b16 %v2807
    %v3092 = vunpack.c.h.b16 %v2807
    %v3093 = vunpack.c.l.b16 %v2808
    %v3094 = vunpack.c.h.b16 %v2808
    %v3095 = vunpack.c.l.b16 %v2809
    %v3096 = vunpack.c.h.b16 %v2809
    %v3097 = vunpack.c.l.b16 %v2810
    %v3098 = vunpack.c.h.b16 %v2810
    %v3099 = vunpack.c.l.b16 %v2811
    %v3100 = vunpack.c.h.b16 %v2811
    %v3101 = vunpack.c.l.b16 %v2812
    %v3102 = vunpack.c.h.b16 %v2812
    %v3103 = vunpack.c.l.b16 %v2813
    %v3104 = vunpack.c.h.b16 %v2813
    %v3105 = vunpack.c.l.b16 %v2814
    %v3106 = vunpack.c.h.b16 %v2814
    %v3107 = vunpack.c.l.b16 %v2815
    %v3108 = vunpack.c.h.b16 %v2815
    %v3109 = vunpack.c.l.b16 %v2816
    %v3110 = vunpack.c.h.b16 %v2816
    %v3111 = vunpack.c.l.b16 %v2817
    %v3112 = vunpack.c.h.b16 %v2817
    %v3113 = vunpack.c.l.b16 %v2818
    %v3114 = vunpack.c.h.b16 %v2818
    %v3115 = vunpack.c.l.b16 %v2819
    %v3116 = vunpack.c.h.b16 %v2819
    %v3117 = vunpack.c.l.b16 %v2820
    %v3118 = vunpack.c.h.b16 %v2820
    %v3119 = vunpack.c.l.b16 %v2821
    %v3120 = vunpack.c.h.b16 %v2821
    %v3121 = vunpack.c.l.b16 %v2822
    %v3122 = vunpack.c.h.b16 %v2822
    %v3123 = vunpack.c.l.b16 %v2823
    %v3124 = vunpack.c.h.b16 %v2823
    %v3125 = vunpack.c.l.b16 %v2824
    %v3126 = vunpack.c.h.b16 %v2824
    %v3127 = vunpack.c.l.b16 %v2825
    %v3128 = vunpack.c.h.b16 %v2825
    %v3129 = vunpack.c.l.b16 %v2826
    %v3130 = vunpack.c.h.b16 %v2826
    %v3131 = vunpack.c.l.b16 %v2827
    %v3132 = vunpack.c.h.b16 %v2827
    %v3133 = vunpack.c.l.b16 %v2828
    %v3134 = vunpack.c.h.b16 %v2828
    %v3135 = vunpack.c.l.b16 %v2829
    %v3136 = vunpack.c.h.b16 %v2829
    %v3137 = vunpack.c.l.b16 %v2830
    %v3138 = vunpack.c.h.b16 %v2830
    %v3139 = vunpack.c.l.b16 %v2831
    %v3140 = vunpack.c.h.b16 %v2831
    %v3141 = vunpack.c.l.b16 %v2832
    %v3142 = vunpack.c.h.b16 %v2832
    %v3143 = vunpack.c.l.b16 %v2833
    %v3144 = vunpack.c.h.b16 %v2833
    %v3145 = vunpack.c.l.b16 %v2834
    %v3146 = vunpack.c.h.b16 %v2834
    %v3147 = vunpack.c.l.b16 %v2835
    %v3148 = vunpack.c.h.b16 %v2835
    %v3149 = vunpack.c.l.b16 %v2836
    %v3150 = vunpack.c.h.b16 %v2836
    %v3151 = vunpack.c.l.b16 %v2837
    %v3152 = vunpack.c.h.b16 %v2837
    %v3153 = vunpack.c.l.b16 %v2838
    %v3154 = vunpack.c.h.b16 %v2838
    %v3155 = vunpack.c.l.b16 %v2839
    %v3156 = vunpack.c.h.b16 %v2839
    %v3157 = vunpack.c.l.b16 %v2840
    %v3158 = vunpack.c.h.b16 %v2840
    %v3159 = vunpack.c.l.b16 %v2841
    %v3160 = vunpack.c.h.b16 %v2841
    %v3161 = vunpack.c.l.b16 %v2842
    %v3162 = vunpack.c.h.b16 %v2842
    %v3163 = vunpack.c.l.b16 %v2843
    %v3164 = vunpack.c.h.b16 %v2843
    %v3165 = vunpack.c.l.b16 %v2844
    %v3166 = vunpack.c.h.b16 %v2844
    %v3167 = vunpack.c.l.b16 %v2845
    %v3168 = vunpack.c.h.b16 %v2845
    %v3169 = vunpack.c.l.b16 %v2846
    %v3170 = vunpack.c.h.b16 %v2846
    %v3171 = vunpack.c.l.b16 %v2847
    %v3172 = vunpack.c.h.b16 %v2847
    %v3173 = vunpack.c.l.b16 %v2848
    %v3174 = vunpack.c.h.b16 %v2848
    %v3175 = vunpack.c.l.b16 %v2849
    %v3176 = vunpack.c.h.b16 %v2849
    %v3177 = vunpack.c.l.b16 %v2850
    %v3178 = vunpack.c.h.b16 %v2850
    %v3179 = vunpack.c.l.b16 %v2851
    %v3180 = vunpack.c.h.b16 %v2851
    %v3181 = vunpack.c.l.b16 %v2852
    %v3182 = vunpack.c.h.b16 %v2852
    %v3183 = vunpack.c.l.b16 %v2853
    %v3184 = vunpack.c.h.b16 %v2853
    %v3185 = vunpack.c.l.b16 %v2854
    %v3186 = vunpack.c.h.b16 %v2854
    %v3187 = vunpack.c.l.b16 %v2855
    %v3188 = vunpack.c.h.b16 %v2855
    %v3189 = vunpack.c.l.b16 %v2856
    %v3190 = vunpack.c.h.b16 %v2856
    %v3191 = vunpack.c.l.b16 %v2857
    %v3192 = vunpack.c.h.b16 %v2857
    %v3193 = vunpack.c.l.b16 %v2858
    %v3194 = vunpack.c.h.b16 %v2858
    %v3195 = vunpack.c.l.b16 %v2859
    %v3196 = vunpack.c.h.b16 %v2859
    %v3197 = vunpack.c.l.b16 %v2860
    %v3198 = vunpack.c.h.b16 %v2860
    %v3199 = vunpack.c.l.b16 %v2861
    %v3200 = vunpack.c.h.b16 %v2861
    %v3201 = vunpack.c.l.b16 %v2862
    %v3202 = vunpack.c.h.b16 %v2862
    %v3203 = vunpack.c.l.b16 %v2863
    %v3204 = vunpack.c.h.b16 %v2863
    %v3205 = vunpack.c.l.b16 %v2864
    %v3206 = vunpack.c.h.b16 %v2864
    %v3207 = vunpack.c.l.b16 %v2865
    %v3208 = vunpack.c.h.b16 %v2865
    %v3209 = vunpack.c.l.b16 %v2866
    %v3210 = vunpack.c.h.b16 %v2866
    %v3211 = vunpack.c.l.b16 %v2867
    %v3212 = vunpack.c.h.b16 %v2867
    %v3213 = vunpack.c.l.b16 %v2868
    %v3214 = vunpack.c.h.b16 %v2868
    %v3215 = vunpack.c.l.b16 %v2869
    %v3216 = vunpack.c.h.b16 %v2869
    %v3217 = vunpack.c.l.b16 %v2870
    %v3218 = vunpack.c.h.b16 %v2870
    %v3219 = vunpack.c.l.b16 %v2871
    %v3220 = vunpack.c.h.b16 %v2871
    %v3221 = vunpack.c.l.b16 %v2872
    %v3222 = vunpack.c.h.b16 %v2872
    %v3223 = vunpack.c.l.b16 %v2873
    %v3224 = vunpack.c.h.b16 %v2873
    %v3225 = vunpack.c.l.b16 %v2874
    %v3226 = vunpack.c.h.b16 %v2874
    %v3227 = vunpack.c.l.b16 %v2875
    %v3228 = vunpack.c.h.b16 %v2875
    %v3229 = vunpack.c.l.b16 %v2876
    %v3230 = vunpack.c.h.b16 %v2876
    %v3231 = vunpack.c.l.b16 %v2877
    %v3232 = vunpack.c.h.b16 %v2877
    %v3233 = vunpack.c.l.b16 %v2878
    %v3234 = vunpack.c.h.b16 %v2878
    %v3235 = vunpack.c.l.b16 %v2879
    %v3236 = vunpack.c.h.b16 %v2879
    %v3237 = vunpack.c.l.b16 %v2880
    %v3238 = vunpack.c.h.b16 %v2880
    %v3239 = vunpack.c.l.b16 %v2881
    %v3240 = vunpack.c.h.b16 %v2881
    %v3241 = vunpack.c.l.b16 %v2882
    %v3242 = vunpack.c.h.b16 %v2882
    %v3243 = vunpack.c.l.b16 %v2883
    %v3244 = vunpack.c.h.b16 %v2883
    %v3245 = vunpack.c.l.b16 %v2884
    %v3246 = vunpack.c.h.b16 %v2884
    %v3247 = vunpack.c.l.b16 %v2885
    %v3248 = vunpack.c.h.b16 %v2885
    %v3249 = vunpack.c.l.b16 %v2886
    %v3250 = vunpack.c.h.b16 %v2886
    %v3251 = vunpack.c.l.b16 %v2887
    %v3252 = vunpack.c.h.b16 %v2887
    %v3253 = vunpack.c.l.b16 %v2888
    %v3254 = vunpack.c.h.b16 %v2888
    %v3255 = vunpack.c.l.b16 %v2889
    %v3256 = vunpack.c.h.b16 %v2889
    %v3257 = vunpack.c.l.b16 %v2890
    %v3258 = vunpack.c.h.b16 %v2890
    %v3259 = vunpack.c.l.b16 %v2891
    %v3260 = vunpack.c.h.b16 %v2891
    %v3261 = vunpack.c.l.b16 %v2892
    %v3262 = vunpack.c.h.b16 %v2892
    %v3263 = vunpack.c.l.b16 %v2893
    %v3264 = vunpack.c.h.b16 %v2893
    %v3265 = vunpack.c.l.b16 %v2894
    %v3266 = vunpack.c.h.b16 %v2894
    %v3267 = vunpack.c.l.b16 %v2895
    %v3268 = vunpack.c.h.b16 %v2895
    %v3269 = vunpack.c.l.b16 %v2896
    %v3270 = vunpack.c.h.b16 %v2896
    %v3271 = vunpack.c.l.b16 %v2897
    %v3272 = vunpack.c.h.b16 %v2897
    %v3273 = vunpack.c.l.b16 %v2898
    %v3274 = vunpack.c.h.b16 %v2898
    %v3275 = vunpack.c.l.b16 %v2899
    %v3276 = vunpack.c.h.b16 %v2899
    %v3277 = vunpack.c.l.b16 %v2900
    %v3278 = vunpack.c.h.b16 %v2900
    %v3279 = vunpack.c.l.b16 %v2901
    %v3280 = vunpack.c.h.b16 %v2901
    %v3281 = vunpack.c.l.b16 %v2902
    %v3282 = vunpack.c.h.b16 %v2902
    %v3283 = vunpack.c.l.b16 %v2903
    %v3284 = vunpack.c.h.b16 %v2903
    %v3285 = vunpack.c.l.b16 %v2904
    %v3286 = vunpack.c.h.b16 %v2904
    %v3287 = vunpack.c.l.b16 %v2905
    %v3288 = vunpack.c.h.b16 %v2905
    %v3289 = vunpack.c.l.b16 %v2906
    %v3290 = vunpack.c.h.b16 %v2906
    %v3291 = vunpack.c.l.b16 %v2907
    %v3292 = vunpack.c.h.b16 %v2907
    %v3293 = vunpack.c.l.b16 %v2908
    %v3294 = vunpack.c.h.b16 %v2908
    %v3295 = vunpack.c.l.b16 %v2909
    %v3296 = vunpack.c.h.b16 %v2909
    %v3297 = vunpack.c.l.b16 %v2910
    %v3298 = vunpack.c.h.b16 %v2910
    %v3299 = vunpack.c.l.b16 %v2911
    %v3300 = vunpack.c.h.b16 %v2911
    %v3301 = vunpack.c.l.b16 %v2912
    %v3302 = vunpack.c.h.b16 %v2912
    %v3303 = vunpack.c.l.b16 %v2913
    %v3304 = vunpack.c.h.b16 %v2913
    %v3305 = vunpack.c.l.b16 %v2914
    %v3306 = vunpack.c.h.b16 %v2914
    %v3307 = vunpack.c.l.b16 %v2915
    %v3308 = vunpack.c.h.b16 %v2915
    %v3309 = vunpack.c.l.b16 %v2916
    %v3310 = vunpack.c.h.b16 %v2916
    %v3311 = vunpack.c.l.b16 %v2917
    %v3312 = vunpack.c.h.b16 %v2917
    %v3313 = vunpack.c.l.b16 %v2918
    %v3314 = vunpack.c.h.b16 %v2918
    %v3315 = vunpack.c.l.b16 %v2919
    %v3316 = vunpack.c.h.b16 %v2919
    %v3317 = vunpack.c.l.b16 %v2920
    %v3318 = vunpack.c.h.b16 %v2920
    %v3319 = vunpack.c.l.b16 %v2921
    %v3320 = vunpack.c.h.b16 %v2921
    %v3321 = vunpack.c.l.b16 %v2922
    %v3322 = vunpack.c.h.b16 %v2922
    %v3323 = vunpack.c.l.b16 %v2923
    %v3324 = vunpack.c.h.b16 %v2923
    %v3325 = vunpack.c.l.b16 %v2924
    %v3326 = vunpack.c.h.b16 %v2924
    %v3327 = vunpack.c.l.b16 %v2925
    %v3328 = vunpack.c.h.b16 %v2925
    %v3329 = vunpack.c.l.b16 %v2926
    %v3330 = vunpack.c.h.b16 %v2926
    %v3331 = vunpack.c.l.b16 %v2927
    %v3332 = vunpack.c.h.b16 %v2927
    %v3333 = vunpack.c.l.b16 %v2928
    %v3334 = vunpack.c.h.b16 %v2928
    %v3335 = vpack.c.b16 %v3083, %v3079
    %v3336 = vpack.c.b16 %v3084, %v3080
    %v3337 = vpack.c.b16 %v3085, %v3081
    %v3338 = vpack.c.b16 %v3086, %v3082
    %v3339 = vpack.c.b16 %v3091, %v3087
    %v3340 = vpack.c.b16 %v3092, %v3088
    %v3341 = vpack.c.b16 %v3093, %v3089
    %v3342 = vpack.c.b16 %v3094, %v3090
    %v3343 = vpack.c.b16 %v3099, %v3095
    %v3344 = vpack.c.b16 %v3100, %v3096
    %v3345 = vpack.c.b16 %v3101, %v3097
    %v3346 = vpack.c.b16 %v3102, %v3098
    %v3347 = vpack.c.b16 %v3107, %v3103
    %v3348 = vpack.c.b16 %v3108, %v3104
    %v3349 = vpack.c.b16 %v3109, %v3105
    %v3350 = vpack.c.b16 %v3110, %v3106
    %v3351 = vpack.c.b16 %v3115, %v3111
    %v3352 = vpack.c.b16 %v3116, %v3112
    %v3353 = vpack.c.b16 %v3117, %v3113
    %v3354 = vpack.c.b16 %v3118, %v3114
    %v3355 = vpack.c.b16 %v3123, %v3119
    %v3356 = vpack.c.b16 %v3124, %v3120
    %v3357 = vpack.c.b16 %v3125, %v3121
    %v3358 = vpack.c.b16 %v3126, %v3122
    %v3359 = vpack.c.b16 %v3131, %v3127
    %v3360 = vpack.c.b16 %v3132, %v3128
    %v3361 = vpack.c.b16 %v3133, %v3129
    %v3362 = vpack.c.b16 %v3134, %v3130
    %v3363 = vpack.c.b16 %v3139, %v3135
    %v3364 = vpack.c.b16 %v3140, %v3136
    %v3365 = vpack.c.b16 %v3141, %v3137
    %v3366 = vpack.c.b16 %v3142, %v3138
    %v3367 = vpack.c.b16 %v3147, %v3143
    %v3368 = vpack.c.b16 %v3148, %v3144
    %v3369 = vpack.c.b16 %v3149, %v3145
    %v3370 = vpack.c.b16 %v3150, %v3146
    %v3371 = vpack.c.b16 %v3155, %v3151
    %v3372 = vpack.c.b16 %v3156, %v3152
    %v3373 = vpack.c.b16 %v3157, %v3153
    %v3374 = vpack.c.b16 %v3158, %v3154
    %v3375 = vpack.c.b16 %v3163, %v3159
    %v3376 = vpack.c.b16 %v3164, %v3160
    %v3377 = vpack.c.b16 %v3165, %v3161
    %v3378 = vpack.c.b16 %v3166, %v3162
    %v3379 = vpack.c.b16 %v3171, %v3167
    %v3380 = vpack.c.b16 %v3172, %v3168
    %v3381 = vpack.c.b16 %v3173, %v3169
    %v3382 = vpack.c.b16 %v3174, %v3170
    %v3383 = vpack.c.b16 %v3179, %v3175
    %v3384 = vpack.c.b16 %v3180, %v3176
    %v3385 = vpack.c.b16 %v3181, %v3177
    %v3386 = vpack.c.b16 %v3182, %v3178
    %v3387 = vpack.c.b16 %v3187, %v3183
    %v3388 = vpack.c.b16 %v3188, %v3184
    %v3389 = vpack.c.b16 %v3189, %v3185
    %v3390 = vpack.c.b16 %v3190, %v3186
    %v3391 = vpack.c.b16 %v3195, %v3191
    %v3392 = vpack.c.b16 %v3196, %v3192
    %v3393 = vpack.c.b16 %v3197, %v3193
    %v3394 = vpack.c.b16 %v3198, %v3194
    %v3395 = vpack.c.b16 %v3203, %v3199
    %v3396 = vpack.c.b16 %v3204, %v3200
    %v3397 = vpack.c.b16 %v3205, %v3201
    %v3398 = vpack.c.b16 %v3206, %v3202
    %v3399 = vpack.c.b16 %v3211, %v3207
    %v3400 = vpack.c.b16 %v3212, %v3208
    %v3401 = vpack.c.b16 %v3213, %v3209
    %v3402 = vpack.c.b16 %v3214, %v3210
    %v3403 = vpack.c.b16 %v3219, %v3215
    %v3404 = vpack.c.b16 %v3220, %v3216
    %v3405 = vpack.c.b16 %v3221, %v3217
    %v3406 = vpack.c.b16 %v3222, %v3218
    %v3407 = vpack.c.b16 %v3227, %v3223
    %v3408 = vpack.c.b16 %v3228, %v3224
    %v3409 = vpack.c.b16 %v3229, %v3225
    %v3410 = vpack.c.b16 %v3230, %v3226
    %v3411 = vpack.c.b16 %v3235, %v3231
    %v3412 = vpack.c.b16 %v3236, %v3232
    %v3413 = vpack.c.b16 %v3237, %v3233
    %v3414 = vpack.c.b16 %v3238, %v3234
    %v3415 = vpack.c.b16 %v3243, %v3239
    %v3416 = vpack.c.b16 %v3244, %v3240
    %v3417 = vpack.c.b16 %v3245, %v3241
    %v3418 = vpack.c.b16 %v3246, %v3242
    %v3419 = vpack.c.b16 %v3251, %v3247
    %v3420 = vpack.c.b16 %v3252, %v3248
    %v3421 = vpack.c.b16 %v3253, %v3249
    %v3422 = vpack.c.b16 %v3254, %v3250
    %v3423 = vpack.c.b16 %v3259, %v3255
    %v3424 = vpack.c.b16 %v3260, %v3256
    %v3425 = vpack.c.b16 %v3261, %v3257
    %v3426 = vpack.c.b16 %v3262, %v3258
    %v3427 = vpack.c.b16 %v3267, %v3263
    %v3428 = vpack.c.b16 %v3268, %v3264
    %v3429 = vpack.c.b16 %v3269, %v3265
    %v3430 = vpack.c.b16 %v3270, %v3266
    %v3431 = vpack.c.b16 %v3275, %v3271
    %v3432 = vpack.c.b16 %v3276, %v3272
    %v3433 = vpack.c.b16 %v3277, %v3273
    %v3434 = vpack.c.b16 %v3278, %v3274
    %v3435 = vpack.c.b16 %v3283, %v3279
    %v3436 = vpack.c.b16 %v3284, %v3280
    %v3437 = vpack.c.b16 %v3285, %v3281
    %v3438 = vpack.c.b16 %v3286, %v3282
    %v3439 = vpack.c.b16 %v3291, %v3287
    %v3440 = vpack.c.b16 %v3292, %v3288
    %v3441 = vpack.c.b16 %v3293, %v3289
    %v3442 = vpack.c.b16 %v3294, %v3290
    %v3443 = vpack.c.b16 %v3299, %v3295
    %v3444 = vpack.c.b16 %v3300, %v3296
    %v3445 = vpack.c.b16 %v3301, %v3297
    %v3446 = vpack.c.b16 %v3302, %v3298
    %v3447 = vpack.c.b16 %v3307, %v3303
    %v3448 = vpack.c.b16 %v3308, %v3304
    %v3449 = vpack.c.b16 %v3309, %v3305
    %v3450 = vpack.c.b16 %v3310, %v3306
    %v3451 = vpack.c.b16 %v3315, %v3311
    %v3452 = vpack.c.b16 %v3316, %v3312
    %v3453 = vpack.c.b16 %v3317, %v3313
    %v3454 = vpack.c.b16 %v3318, %v3314
    %v3455 = vpack.c.b16 %v3323, %v3319
    %v3456 = vpack.c.b16 %v3324, %v3320
    %v3457 = vpack.c.b16 %v3325, %v3321
    %v3458 = vpack.c.b16 %v3326, %v3322
    %v3459 = vpack.c.b16 %v3331, %v3327
    %v3460 = vpack.c.b16 %v3332, %v3328
    %v3461 = vpack.c.b16 %v3333, %v3329
    %v3462 = vpack.c.b16 %v3334, %v3330
    %3591 = vmatprep.subr.bf16.mxu0 %v3364
    %3592 = vmatpush1.bf16.msra.mxu0 %v3363
    %3593 = vmatprep.subr.bf16.mxu0 %v3360
    %3594 = vmatpush1.bf16.msra.mxu0 %v3359
    %3595 = vmatprep.subr.bf16.mxu0 %v3356
    %3596 = vmatpush1.bf16.msra.mxu0 %v3355
    %3597 = vmatprep.subr.bf16.mxu0 %v3352
    %3598 = vmatpush1.bf16.msra.mxu0 %v3351
    %3599 = vmatprep.subr.bf16.mxu0 %v3348
    %3600 = vmatpush1.bf16.msra.mxu0 %v3347
    %3601 = vmatprep.subr.bf16.mxu0 %v3344
    %3602 = vmatpush1.bf16.msra.mxu0 %v3343
    %3603 = vmatprep.subr.bf16.mxu0 %v3340
    %3604 = vmatpush1.bf16.msra.mxu0 %v3339
    %3605 = vmatprep.subr.bf16.mxu0 %v3336
    %3606 = vmatpush1.bf16.msra.mxu0 %v3335
    %3607 = vmatprep.subr.bf16.mxu0 %v3396
    %3608 = vmatpush2.bf16.msra.mxu0 %v3395
    %3609 = vmatprep.subr.bf16.mxu0 %v3392
    %3610 = vmatpush2.bf16.msra.mxu0 %v3391
    %3611 = vmatprep.subr.bf16.mxu0 %v3388
    %3612 = vmatpush2.bf16.msra.mxu0 %v3387
    %3613 = vmatprep.subr.bf16.mxu0 %v3384
    %3614 = vmatpush2.bf16.msra.mxu0 %v3383
    %3615 = vmatprep.subr.bf16.mxu0 %v3380
    %3616 = vmatpush2.bf16.msra.mxu0 %v3379
    %3617 = vmatprep.subr.bf16.mxu0 %v3376
    %3618 = vmatpush2.bf16.msra.mxu0 %v3375
    %3619 = vmatprep.subr.bf16.mxu0 %v3372
    %3620 = vmatpush2.bf16.msra.mxu0 %v3371
    %3621 = vmatprep.subr.bf16.mxu0 %v3368
    %3622 = vmatpush2.bf16.msra.mxu0 %v3367
    %3623 = vmatprep.mubr.bf16.mxu0 %v2798
    %3624 = vmatmul.mubr.bf16.gmra.mxu0 %v2797
    %v3625 = vpop.f32.mrf.mxu0
    %v3626 = vadd.f32 %v2934, %v3625
    %v3627 = vpop.f32.mrf.mxu0
    %v3628 = vadd.f32 %v2938, %v3627
    %v3629 = vpop.f32.mrf.mxu0
    %v3630 = vadd.f32 %v2934, %v3629
    %v3631 = vpop.f32.mrf.mxu0
    %v3632 = vadd.f32 %v2938, %v3631
    %3633 = vdwg.mxu0
    %3634 = vmatprep.subr.bf16.mxu0 %v3428
    %3635 = vmatpush1.bf16.msra.mxu0 %v3427
    %3636 = vmatprep.subr.bf16.mxu0 %v3424
    %3637 = vmatpush1.bf16.msra.mxu0 %v3423
    %3638 = vmatprep.subr.bf16.mxu0 %v3420
    %3639 = vmatpush1.bf16.msra.mxu0 %v3419
    %3640 = vmatprep.subr.bf16.mxu0 %v3416
    %3641 = vmatpush1.bf16.msra.mxu0 %v3415
    %3642 = vmatprep.subr.bf16.mxu0 %v3412
    %3643 = vmatpush1.bf16.msra.mxu0 %v3411
    %3644 = vmatprep.subr.bf16.mxu0 %v3408
    %3645 = vmatpush1.bf16.msra.mxu0 %v3407
    %3646 = vmatprep.subr.bf16.mxu0 %v3404
    %3647 = vmatpush1.bf16.msra.mxu0 %v3403
    %3648 = vmatprep.subr.bf16.mxu0 %v3400
    %3649 = vmatpush1.bf16.msra.mxu0 %v3399
    %3650 = vmatprep.subr.bf16.mxu0 %v3460
    %3651 = vmatpush2.bf16.msra.mxu0 %v3459
    %3652 = vmatprep.subr.bf16.mxu0 %v3456
    %3653 = vmatpush2.bf16.msra.mxu0 %v3455
    %3654 = vmatprep.subr.bf16.mxu0 %v3452
    %3655 = vmatpush2.bf16.msra.mxu0 %v3451
    %3656 = vmatprep.subr.bf16.mxu0 %v3448
    %3657 = vmatpush2.bf16.msra.mxu0 %v3447
    %3658 = vmatprep.subr.bf16.mxu0 %v3444
    %3659 = vmatpush2.bf16.msra.mxu0 %v3443
    %3660 = vmatprep.subr.bf16.mxu0 %v3440
    %3661 = vmatpush2.bf16.msra.mxu0 %v3439
    %3662 = vmatprep.subr.bf16.mxu0 %v3436
    %3663 = vmatpush2.bf16.msra.mxu0 %v3435
    %3664 = vmatprep.subr.bf16.mxu0 %v3432
    %3665 = vmatpush2.bf16.msra.mxu0 %v3431
    %3666 = vmatprep.mubr.bf16.mxu0 %v2800
    %3667 = vmatmul.mubr.bf16.gmra.mxu0 %v2799
    %v3668 = vpop.f32.mrf.mxu0
    %v3669 = vadd.f32 %v3626, %v3668
    %v3670 = vpop.f32.mrf.mxu0
    %v3671 = vadd.f32 %v3628, %v3670
    %v3672 = vpop.f32.mrf.mxu0
    %v3673 = vadd.f32 %v3630, %v3672
    %v3674 = vpop.f32.mrf.mxu0
    %v3675 = vadd.f32 %v3632, %v3674
    %3676 = vdwg.mxu0
    %3677 = vmatprep.subr.bf16.mxu0 %v3366
    %3678 = vmatpush1.bf16.msra.mxu0 %v3365
    %3679 = vmatprep.subr.bf16.mxu0 %v3362
    %3680 = vmatpush1.bf16.msra.mxu0 %v3361
    %3681 = vmatprep.subr.bf16.mxu0 %v3358
    %3682 = vmatpush1.bf16.msra.mxu0 %v3357
    %3683 = vmatprep.subr.bf16.mxu0 %v3354
    %3684 = vmatpush1.bf16.msra.mxu0 %v3353
    %3685 = vmatprep.subr.bf16.mxu0 %v3350
    %3686 = vmatpush1.bf16.msra.mxu0 %v3349
    %3687 = vmatprep.subr.bf16.mxu0 %v3346
    %3688 = vmatpush1.bf16.msra.mxu0 %v3345
    %3689 = vmatprep.subr.bf16.mxu0 %v3342
    %3690 = vmatpush1.bf16.msra.mxu0 %v3341
    %3691 = vmatprep.subr.bf16.mxu0 %v3338
    %3692 = vmatpush1.bf16.msra.mxu0 %v3337
    %3693 = vmatprep.subr.bf16.mxu0 %v3398
    %3694 = vmatpush2.bf16.msra.mxu0 %v3397
    %3695 = vmatprep.subr.bf16.mxu0 %v3394
    %3696 = vmatpush2.bf16.msra.mxu0 %v3393
    %3697 = vmatprep.subr.bf16.mxu0 %v3390
    %3698 = vmatpush2.bf16.msra.mxu0 %v3389
    %3699 = vmatprep.subr.bf16.mxu0 %v3386
    %3700 = vmatpush2.bf16.msra.mxu0 %v3385
    %3701 = vmatprep.subr.bf16.mxu0 %v3382
    %3702 = vmatpush2.bf16.msra.mxu0 %v3381
    %3703 = vmatprep.subr.bf16.mxu0 %v3378
    %3704 = vmatpush2.bf16.msra.mxu0 %v3377
    %3705 = vmatprep.subr.bf16.mxu0 %v3374
    %3706 = vmatpush2.bf16.msra.mxu0 %v3373
    %3707 = vmatprep.subr.bf16.mxu0 %v3370
    %3708 = vmatpush2.bf16.msra.mxu0 %v3369
    %3709 = vmatprep.mubr.bf16.mxu0 %v2798
    %3710 = vmatmul.mubr.bf16.gmra.mxu0 %v2797
    %v3711 = vpop.f32.mrf.mxu0
    %v3712 = vadd.f32 %v2942, %v3711
    %v3713 = vpop.f32.mrf.mxu0
    %v3714 = vadd.f32 %v2946, %v3713
    %v3715 = vpop.f32.mrf.mxu0
    %v3716 = vadd.f32 %v2942, %v3715
    %v3717 = vpop.f32.mrf.mxu0
    %v3718 = vadd.f32 %v2946, %v3717
    %3719 = vdwg.mxu0
    %3720 = vmatprep.subr.bf16.mxu0 %v3430
    %3721 = vmatpush1.bf16.msra.mxu0 %v3429
    %3722 = vmatprep.subr.bf16.mxu0 %v3426
    %3723 = vmatpush1.bf16.msra.mxu0 %v3425
    %3724 = vmatprep.subr.bf16.mxu0 %v3422
    %3725 = vmatpush1.bf16.msra.mxu0 %v3421
    %3726 = vmatprep.subr.bf16.mxu0 %v3418
    %3727 = vmatpush1.bf16.msra.mxu0 %v3417
    %3728 = vmatprep.subr.bf16.mxu0 %v3414
    %3729 = vmatpush1.bf16.msra.mxu0 %v3413
    %3730 = vmatprep.subr.bf16.mxu0 %v3410
    %3731 = vmatpush1.bf16.msra.mxu0 %v3409
    %3732 = vmatprep.subr.bf16.mxu0 %v3406
    %3733 = vmatpush1.bf16.msra.mxu0 %v3405
    %3734 = vmatprep.subr.bf16.mxu0 %v3402
    %3735 = vmatpush1.bf16.msra.mxu0 %v3401
    %3736 = vmatprep.subr.bf16.mxu0 %v3462
    %3737 = vmatpush2.bf16.msra.mxu0 %v3461
    %3738 = vmatprep.subr.bf16.mxu0 %v3458
    %3739 = vmatpush2.bf16.msra.mxu0 %v3457
    %3740 = vmatprep.subr.bf16.mxu0 %v3454
    %3741 = vmatpush2.bf16.msra.mxu0 %v3453
    %3742 = vmatprep.subr.bf16.mxu0 %v3450
    %3743 = vmatpush2.bf16.msra.mxu0 %v3449
    %3744 = vmatprep.subr.bf16.mxu0 %v3446
    %3745 = vmatpush2.bf16.msra.mxu0 %v3445
    %3746 = vmatprep.subr.bf16.mxu0 %v3442
    %3747 = vmatpush2.bf16.msra.mxu0 %v3441
    %3748 = vmatprep.subr.bf16.mxu0 %v3438
    %3749 = vmatpush2.bf16.msra.mxu0 %v3437
    %3750 = vmatprep.subr.bf16.mxu0 %v3434
    %3751 = vmatpush2.bf16.msra.mxu0 %v3433
    %3752 = vmatprep.mubr.bf16.mxu0 %v2800
    %3753 = vmatmul.mubr.bf16.gmra.mxu0 %v2799
    %v3754 = vpop.f32.mrf.mxu0
    %v3755 = vadd.f32 %v3712, %v3754
    %v3756 = vpop.f32.mrf.mxu0
    %v3757 = vadd.f32 %v3714, %v3756
    %v3758 = vpop.f32.mrf.mxu0
    %v3759 = vadd.f32 %v3716, %v3758
    %v3760 = vpop.f32.mrf.mxu0
    %v3761 = vadd.f32 %v3718, %v3760
    %3762 = vdwg.mxu0
    %3763 = vst [vmem:[#allocation6] sm:$0xff] %v3669
    %3764 = vst [vmem:[#allocation6 + $0x8] sm:$0xff] %v3671
    %3765 = vst [vmem:[#allocation6 + $0x10] sm:$0xff] %v3755
    %3766 = vst [vmem:[#allocation6 + $0x18] sm:$0xff] %v3757
    %3767 = vst [vmem:[#allocation6 + $0x20] sm:$0xff] %v3673
    %3768 = vst [vmem:[#allocation6 + $0x28] sm:$0xff] %v3675
    %3769 = vst [vmem:[#allocation6 + $0x30] sm:$0xff] %v3759
    %3770 = vst [vmem:[#allocation6 + $0x38] sm:$0xff] %v3761
    // Predicated region
    $region46: #{_mha_forward.1} parent=1 // pred_check
      _
    $region47: #{_mha_forward.1} parent=1 // pred_check_branch
      %3772 = sbr.rel (0) target = $region49
    $region48: #{_mha_forward.1} parent=1 // pred_region
      %s3774 = ssub.s32 1024, 1024
      %3775 = vsyncadd [#allocation5], %s3774
      %s3776 = sshll.u32 [#allocation6], 4
      %s3777 = int_to_ptr.vmem [resolvable:$true] %s3776
      %3782 = dma.vmem_to_hbm [thread:$0]  %s3777, 1024, %s10, [#allocation5], 512, 512, 32
    $region49: #{_mha_forward.1} parent=1 // pred_fallthru
      _
    // Predicated region
    $region50: #{_mha_forward.1} parent=1 // pred_check
      _
    $region51: #{_mha_forward.1} parent=1 // pred_check_branch
      %3784 = sbr.rel (0) target = $region53
    $region52: #{_mha_forward.1} parent=1 // pred_region
      %3785 = dma.done [#allocation5], 1024
    $region53: #{_mha_forward.1} parent=1 // pred_fallthru
      _
    %3786 = vsyncpa [#allocation4], 1
    %3787 = vsyncpa [#allocation5], 1

</llo_original>
